<compile_context>
chip_gen: v5e
topology: v5e:2x2
jax: 0.10.0
libtpu: 0.0.40
codegen_flags: <defaults>
</compile_context>

<pallas_src>
import numpy as np
import jax
import jax.numpy as jnp
from jax.experimental import pallas as pl
from jax.experimental.pallas import tpu as pltpu


def _make_kernel(dilations, dmax, H, W):
    """Build the per-batch-element kernel with static dilations baked in."""

    def silu(v):
        return v * (1.0 / (1.0 + jnp.exp(-v)))

    def kernel(x_ref, w1_ref, b1_ref, ws_ref, w2_ref, b2_ref, out_ref, pad_ref):
        f32 = jnp.float32

        # ---- cv1: 1x1 conv (BN folded) + SiLU --------------------------
        y1 = jnp.einsum('oc,chw->ohw', w1_ref[...], x_ref[...],
                        preferred_element_type=f32) + b1_ref[...]
        y1 = silu(y1)

        # Zero the padded scratch once; only the interior is rewritten per
        # conv, the zero border is shared by all dilations.
        pad_ref[...] = jnp.zeros_like(pad_ref)

        ws = ws_ref[...]                      # (c_, 9*c_) tap-major weight

        def dilated_conv3x3(y, d):
            # write current feature map into the padded slab's interior
            pad_ref[:, dmax:dmax + H, dmax:dmax + W] = y
            taps = []
            for ky in range(3):
                for kx in range(3):
                    oy = dmax + (ky - 1) * d
                    ox = dmax + (kx - 1) * d
                    taps.append(pad_ref[:, oy:oy + H, ox:ox + W])
            xs = jnp.concatenate(taps, axis=0)          # (9*c_, H, W)
            # single wide-K matmul (K = 9*c_) instead of 9 small-K matmuls
            return jnp.einsum('ok,khw->ohw', ws, xs,
                              preferred_element_type=f32)

        ys = [y1]
        for d in dilations:
            ys.append(dilated_conv3x3(ys[-1], d))

        cat = jnp.concatenate(ys, axis=0)               # (4*c_, H, W)

        # ---- cv2: 1x1 conv over concatenated channels + SiLU -----------
        out = jnp.einsum('oc,chw->ohw', w2_ref[...], cat,
                         preferred_element_type=f32) + b2_ref[...]
        out_ref[...] = silu(out)

    return kernel


def feature_pyramid_shared_conv(x, w1, b1, w_share, w2, b2,
                                dilations=(1, 3, 5)):
    """x: (B, c1, H, W); w1: (c_, c1); b1: (c_,); w_share: (c_, c_, 3, 3);
    w2: (c2, (1+len(dilations))*c_); b2: (c2,). Returns (B, c2, H, W)."""
    B, c1, H, W = x.shape
    c_ = w1.shape[0]
    c2 = w2.shape[0]
    n_cat = (1 + len(dilations)) * c_
    dmax = int(max(dilations))

    # shared 3x3 weight (o, c, ky, kx) -> tap-major (o, 9*c_) so the 9 taps are
    # contracted by a single MXU matmul per dilation.
    ws = jnp.transpose(w_share.astype(jnp.float32), (0, 2, 3, 1)).reshape(
        c_, 9 * c_)

    b1r = b1.reshape(c_, 1, 1).astype(jnp.float32)
    b2r = b2.reshape(c2, 1, 1).astype(jnp.float32)

    kernel = _make_kernel(tuple(int(d) for d in dilations), dmax, H, W)

    return pl.pallas_call(
        kernel,
        out_shape=jax.ShapeDtypeStruct((B, c2, H, W), jnp.float32),
        grid=(B,),
        in_specs=[
            pl.BlockSpec((None, c1, H, W), lambda b: (b, 0, 0, 0)),   # x
            pl.BlockSpec((c_, c1), lambda b: (0, 0)),                 # w1
            pl.BlockSpec((c_, 1, 1), lambda b: (0, 0, 0)),            # b1
            pl.BlockSpec((c_, 9 * c_), lambda b: (0, 0)),             # w_share
            pl.BlockSpec((c2, n_cat), lambda b: (0, 0)),              # w2
            pl.BlockSpec((c2, 1, 1), lambda b: (0, 0, 0)),            # b2
        ],
        out_specs=pl.BlockSpec((None, c2, H, W), lambda b: (b, 0, 0, 0)),
        scratch_shapes=[
            pltpu.VMEM((c_, H + 2 * dmax, W + 2 * dmax), jnp.float32)],
        compiler_params=pltpu.CompilerParams(
            dimension_semantics=("parallel",),
            vmem_limit_bytes=64 * 1024 * 1024),
    )(x.astype(jnp.float32), w1.astype(jnp.float32), b1r, ws,
      w2.astype(jnp.float32), b2r)


# ----------------------------- host-side helpers -----------------------------

def fold_bn(w, gamma, beta, mean, var, eps=1e-5):
    """Fold BatchNorm into a bias-less 1x1 conv weight (c_out, c_in)."""
    scale = gamma / np.sqrt(var + eps)
    return w * scale[:, None], beta - mean * scale


def ref_np(x, w1, bn1, w_share, w2, bn2, dilations):
    """Pure NumPy reference mirroring the PyTorch forward() (unfused BN)."""

    def silu(v):
        return v / (1.0 + np.exp(-v))

    def bn(v, p):
        g, b, m, var, eps = p
        g, b, m, var = (a.reshape(1, -1, 1, 1) for a in (g, b, m, var))
        return (v - m) / np.sqrt(var + eps) * g + b

    def conv1x1(v, w):
        return np.einsum('oc,bchw->bohw', w, v)

    def dconv3x3(v, w, d):
        B, C, H, W = v.shape
        O = w.shape[0]
        xp = np.zeros((B, C, H + 2 * d, W + 2 * d), v.dtype)
        xp[:, :, d:d + H, d:d + W] = v
        out = np.zeros((B, O, H, W), v.dtype)
        for ky in range(3):
            for kx in range(3):
                out += np.einsum('oc,bchw->bohw', w[:, :, ky, kx],
                                 xp[:, :, ky * d:ky * d + H,
                                           kx * d:kx * d + W])
        return out

    x = np.asarray(x, np.float64)
    y1 = silu(bn(conv1x1(x, w1), bn1))
    ys = [y1]
    for d in dilations:
        ys.append(dconv3x3(ys[-1], w_share, d))
    cat = np.concatenate(ys, axis=1)
    return silu(bn(conv1x1(cat, w2), bn2))


if __name__ == "__main__":
    B, c1, c2, H, W = 2, 4, 8, 16, 16
    dilations = (1, 3, 5)
    c_ = c1 // 2
    n_cat = (1 + len(dilations)) * c_
    eps = 1e-5

    key = jax.random.PRNGKey(0)
    ks = jax.random.split(key, 12)

    x = jax.random.normal(ks[0], (B, c1, H, W), jnp.float32)

    # cv1 = Conv2d(c1, c_, 1, bias=False) + BN + SiLU
    w1 = jax.random.normal(ks[1], (c_, c1), jnp.float32) * 0.4
    g1 = jax.random.uniform(ks[2], (c_,), jnp.float32, 0.5, 1.5)
    be1 = jax.random.normal(ks[3], (c_,), jnp.float32) * 0.1
    m1 = jax.random.normal(ks[4], (c_,), jnp.float32) * 0.1
    v1 = jax.random.uniform(ks[5], (c_,), jnp.float32, 0.5, 1.5)

    # shared 3x3 conv, no bias / no BN / no activation
    w_share = jax.random.normal(ks[6], (c_, c_, 3, 3), jnp.float32) * 0.3

    # cv2 = Conv2d(4*c_, c2, 1, bias=False) + BN + SiLU
    w2 = jax.random.normal(ks[7], (c2, n_cat), jnp.float32) * 0.3
    g2 = jax.random.uniform(ks[8], (c2,), jnp.float32, 0.5, 1.5)
    be2 = jax.random.normal(ks[9], (c2,), jnp.float32) * 0.1
    m2 = jax.random.normal(ks[10], (c2,), jnp.float32) * 0.1
    v2 = jax.random.uniform(ks[11], (c2,), jnp.float32, 0.5, 1.5)

    # Fold BN into the 1x1 convs for the kernel (inference form).
    w1_eff, b1_eff = fold_bn(np.asarray(w1), np.asarray(g1), np.asarray(be1),
                             np.asarray(m1), np.asarray(v1), eps)
    w2_eff, b2_eff = fold_bn(np.asarray(w2), np.asarray(g2), np.asarray(be2),
                             np.asarray(m2), np.asarray(v2), eps)

    out = feature_pyramid_shared_conv(
        x,
        jnp.asarray(w1_eff, jnp.float32), jnp.asarray(b1_eff, jnp.float32),
        w_share,
        jnp.asarray(w2_eff, jnp.float32), jnp.asarray(b2_eff, jnp.float32),
        dilations)
    out = jax.block_until_ready(out)

    ref = ref_np(np.asarray(x),
                 np.asarray(w1, np.float64),
                 (np.asarray(g1, np.float64), np.asarray(be1, np.float64),
                  np.asarray(m1, np.float64), np.asarray(v1, np.float64), eps),
                 np.asarray(w_share, np.float64),
                 np.asarray(w2, np.float64),
                 (np.asarray(g2, np.float64), np.asarray(be2, np.float64),
                  np.asarray(m2, np.float64), np.asarray(v2, np.float64), eps),
                 dilations)

    np.testing.assert_allclose(np.asarray(out), ref, rtol=2e-3, atol=2e-3)
    print("KERNEL_OK")
</pallas_src>

<mosaic_0001>
module attributes {stable_mosaic.version = 11 : i64} {
  func.func @kernel(%arg0: i32, %arg1: memref<1x4x16x16xf32, #tpu.memory_space<vmem>>, %arg2: memref<2x4xf32, #tpu.memory_space<vmem>>, %arg3: memref<2x1x1xf32, #tpu.memory_space<vmem>>, %arg4: memref<2x18xf32, #tpu.memory_space<vmem>>, %arg5: memref<8x8xf32, #tpu.memory_space<vmem>>, %arg6: memref<8x1x1xf32, #tpu.memory_space<vmem>>, %arg7: memref<1x8x16x16xf32, #tpu.memory_space<vmem>>, %arg8: memref<2x26x26xf32, #tpu.memory_space<vmem>>) attributes {dimension_semantics = [#tpu.dimension_semantics<parallel>], iteration_bounds = array<i64: 2>, scalar_prefetch = 0 : i64, scratch_operands = 1 : i64, tpu.core_type = #tpu.core_type<tc>, window_params = [{transform_indices = @transform_0, window_bounds = array<i64: 1, 4, 16, 16>}, {pipeline_mode = #tpu.pipeline_mode<synchronous>, transform_indices = @transform_1, window_bounds = array<i64: 2, 4>}, {pipeline_mode = #tpu.pipeline_mode<synchronous>, transform_indices = @transform_2, window_bounds = array<i64: 2, 1, 1>}, {pipeline_mode = #tpu.pipeline_mode<synchronous>, transform_indices = @transform_3, window_bounds = array<i64: 2, 18>}, {pipeline_mode = #tpu.pipeline_mode<synchronous>, transform_indices = @transform_4, window_bounds = array<i64: 8, 8>}, {pipeline_mode = #tpu.pipeline_mode<synchronous>, transform_indices = @transform_5, window_bounds = array<i64: 8, 1, 1>}, {transform_indices = @transform_6, window_bounds = array<i64: 1, 8, 16, 16>}]} {
    %c0 = arith.constant 0 : index
    %c0_0 = arith.constant 0 : index
    %0 = vector.load %arg2[%c0, %c0_0] : memref<2x4xf32, #tpu.memory_space<vmem>>, vector<2x4xf32>
    %c0_1 = arith.constant 0 : index
    %c0_2 = arith.constant 0 : index
    %c0_3 = arith.constant 0 : index
    %c0_4 = arith.constant 0 : index
    %1 = vector.load %arg1[%c0_1, %c0_2, %c0_3, %c0_4] : memref<1x4x16x16xf32, #tpu.memory_space<vmem>>, vector<1x4x16x16xf32>
    %2 = vector.shape_cast %1 : vector<1x4x16x16xf32> to vector<4x16x16xf32>
    "tpu.trace_start"() <{level = 10 : i32, message = "oc,chw->ohw"}> : () -> ()
    %cst = arith.constant dense<0.000000e+00> : vector<2x16x16xf32>
    %3 = tpu.matmul %0, %2, %cst {dimension_numbers = #tpu.dot_dimension_numbers<[1], [0], [0], [1, 2], [0, 0, 1, 1, 1, 2], [], []>} : vector<2x4xf32>, vector<4x16x16xf32>, vector<2x16x16xf32> -> vector<2x16x16xf32>
    "tpu.trace_stop"() : () -> ()
    %c0_5 = arith.constant 0 : index
    %c0_6 = arith.constant 0 : index
    %c0_7 = arith.constant 0 : index
    %4 = vector.load %arg3[%c0_5, %c0_6, %c0_7] : memref<2x1x1xf32, #tpu.memory_space<vmem>>, vector<2x1x1xf32>
    %5 = vector.broadcast %4 : vector<2x1x1xf32> to vector<2x16x16xf32>
    %6 = arith.addf %3, %5 : vector<2x16x16xf32>
    %cst_8 = arith.constant 0.000000e+00 : f32
    %7 = vector.broadcast %cst_8 : f32 to vector<2x16x16xf32>
    %8 = arith.subf %7, %6 : vector<2x16x16xf32>
    %9 = math.exp %8 : vector<2x16x16xf32>
    %cst_9 = arith.constant 1.000000e+00 : f32
    %10 = vector.broadcast %cst_9 : f32 to vector<2x16x16xf32>
    %11 = arith.addf %10, %9 : vector<2x16x16xf32>
    %cst_10 = arith.constant 1.000000e+00 : f32
    %12 = vector.broadcast %cst_10 : f32 to vector<2x16x16xf32>
    %13 = arith.divf %12, %11 : vector<2x16x16xf32>
    %14 = arith.mulf %6, %13 : vector<2x16x16xf32>
    %cst_11 = arith.constant 0.000000e+00 : f32
    %15 = vector.broadcast %cst_11 : f32 to vector<2x26x26xf32>
    %c0_12 = arith.constant 0 : index
    %c0_13 = arith.constant 0 : index
    %c0_14 = arith.constant 0 : index
    %16 = vector.load %arg8[%c0_12, %c0_13, %c0_14] : memref<2x26x26xf32, #tpu.memory_space<vmem>>, vector<2x26x26xf32>
    tpu.vector_store %arg8[%c0_12, %c0_13, %c0_14], %15 {strides = array<i32>} : memref<2x26x26xf32, #tpu.memory_space<vmem>>, vector<2x26x26xf32>,
    %c0_15 = arith.constant 0 : index
    %c0_16 = arith.constant 0 : index
    %17 = vector.load %arg4[%c0_15, %c0_16] : memref<2x18xf32, #tpu.memory_space<vmem>>, vector<2x18xf32>
    %c0_17 = arith.constant 0 : index
    %c5 = arith.constant 5 : index
    %c5_18 = arith.constant 5 : index
    %18 = vector.load %arg8[%c0_17, %c5, %c5_18] : memref<2x26x26xf32, #tpu.memory_space<vmem>>, vector<2x16x16xf32>
    tpu.vector_store %arg8[%c0_17, %c5, %c5_18], %14 {strides = array<i32>} : memref<2x26x26xf32, #tpu.memory_space<vmem>>, vector<2x16x16xf32>,
    %c0_19 = arith.constant 0 : index
    %c4 = arith.constant 4 : index
    %c4_20 = arith.constant 4 : index
    %19 = vector.load %arg8[%c0_19, %c4, %c4_20] : memref<2x26x26xf32, #tpu.memory_space<vmem>>, vector<2x16x16xf32>
    %c0_21 = arith.constant 0 : index
    %c4_22 = arith.constant 4 : index
    %c5_23 = arith.constant 5 : index
    %20 = vector.load %arg8[%c0_21, %c4_22, %c5_23] : memref<2x26x26xf32, #tpu.memory_space<vmem>>, vector<2x16x16xf32>
    %c0_24 = arith.constant 0 : index
    %c4_25 = arith.constant 4 : index
    %c6 = arith.constant 6 : index
    %21 = vector.load %arg8[%c0_24, %c4_25, %c6] : memref<2x26x26xf32, #tpu.memory_space<vmem>>, vector<2x16x16xf32>
    %c0_26 = arith.constant 0 : index
    %c5_27 = arith.constant 5 : index
    %c4_28 = arith.constant 4 : index
    %22 = vector.load %arg8[%c0_26, %c5_27, %c4_28] : memref<2x26x26xf32, #tpu.memory_space<vmem>>, vector<2x16x16xf32>
    %c0_29 = arith.constant 0 : index
    %c5_30 = arith.constant 5 : index
    %c5_31 = arith.constant 5 : index
    %23 = vector.load %arg8[%c0_29, %c5_30, %c5_31] : memref<2x26x26xf32, #tpu.memory_space<vmem>>, vector<2x16x16xf32>
    %c0_32 = arith.constant 0 : index
    %c5_33 = arith.constant 5 : index
    %c6_34 = arith.constant 6 : index
    %24 = vector.load %arg8[%c0_32, %c5_33, %c6_34] : memref<2x26x26xf32, #tpu.memory_space<vmem>>, vector<2x16x16xf32>
    %c0_35 = arith.constant 0 : index
    %c6_36 = arith.constant 6 : index
    %c4_37 = arith.constant 4 : index
    %25 = vector.load %arg8[%c0_35, %c6_36, %c4_37] : memref<2x26x26xf32, #tpu.memory_space<vmem>>, vector<2x16x16xf32>
    %c0_38 = arith.constant 0 : index
    %c6_39 = arith.constant 6 : index
    %c5_40 = arith.constant 5 : index
    %26 = vector.load %arg8[%c0_38, %c6_39, %c5_40] : memref<2x26x26xf32, #tpu.memory_space<vmem>>, vector<2x16x16xf32>
    %c0_41 = arith.constant 0 : index
    %c6_42 = arith.constant 6 : index
    %c6_43 = arith.constant 6 : index
    %27 = vector.load %arg8[%c0_41, %c6_42, %c6_43] : memref<2x26x26xf32, #tpu.memory_space<vmem>>, vector<2x16x16xf32>
    %28 = tpu.concatenate %19, %20, %21, %22, %23, %24, %25, %26, %27 in 0 : vector<2x16x16xf32>, vector<2x16x16xf32>, vector<2x16x16xf32>, vector<2x16x16xf32>, vector<2x16x16xf32>, vector<2x16x16xf32>, vector<2x16x16xf32>, vector<2x16x16xf32>, vector<2x16x16xf32> -> vector<18x16x16xf32>
    "tpu.trace_start"() <{level = 10 : i32, message = "ok,khw->ohw"}> : () -> ()
    %cst_44 = arith.constant dense<0.000000e+00> : vector<2x16x16xf32>
    %29 = tpu.matmul %17, %28, %cst_44 {dimension_numbers = #tpu.dot_dimension_numbers<[1], [0], [0], [1, 2], [0, 0, 1, 1, 1, 2], [], []>} : vector<2x18xf32>, vector<18x16x16xf32>, vector<2x16x16xf32> -> vector<2x16x16xf32>
    "tpu.trace_stop"() : () -> ()
    %c0_45 = arith.constant 0 : index
    %c5_46 = arith.constant 5 : index
    %c5_47 = arith.constant 5 : index
    %30 = vector.load %arg8[%c0_45, %c5_46, %c5_47] : memref<2x26x26xf32, #tpu.memory_space<vmem>>, vector<2x16x16xf32>
    tpu.vector_store %arg8[%c0_45, %c5_46, %c5_47], %29 {strides = array<i32>} : memref<2x26x26xf32, #tpu.memory_space<vmem>>, vector<2x16x16xf32>,
    %c0_48 = arith.constant 0 : index
    %c2 = arith.constant 2 : index
    %c2_49 = arith.constant 2 : index
    %31 = vector.load %arg8[%c0_48, %c2, %c2_49] : memref<2x26x26xf32, #tpu.memory_space<vmem>>, vector<2x16x16xf32>
    %c0_50 = arith.constant 0 : index
    %c2_51 = arith.constant 2 : index
    %c5_52 = arith.constant 5 : index
    %32 = vector.load %arg8[%c0_50, %c2_51, %c5_52] : memref<2x26x26xf32, #tpu.memory_space<vmem>>, vector<2x16x16xf32>
    %c0_53 = arith.constant 0 : index
    %c2_54 = arith.constant 2 : index
    %c8 = arith.constant 8 : index
    %33 = vector.load %arg8[%c0_53, %c2_54, %c8] : memref<2x26x26xf32, #tpu.memory_space<vmem>>, vector<2x16x16xf32>
    %c0_55 = arith.constant 0 : index
    %c5_56 = arith.constant 5 : index
    %c2_57 = arith.constant 2 : index
    %34 = vector.load %arg8[%c0_55, %c5_56, %c2_57] : memref<2x26x26xf32, #tpu.memory_space<vmem>>, vector<2x16x16xf32>
    %c0_58 = arith.constant 0 : index
    %c5_59 = arith.constant 5 : index
    %c5_60 = arith.constant 5 : index
    %35 = vector.load %arg8[%c0_58, %c5_59, %c5_60] : memref<2x26x26xf32, #tpu.memory_space<vmem>>, vector<2x16x16xf32>
    %c0_61 = arith.constant 0 : index
    %c5_62 = arith.constant 5 : index
    %c8_63 = arith.constant 8 : index
    %36 = vector.load %arg8[%c0_61, %c5_62, %c8_63] : memref<2x26x26xf32, #tpu.memory_space<vmem>>, vector<2x16x16xf32>
    %c0_64 = arith.constant 0 : index
    %c8_65 = arith.constant 8 : index
    %c2_66 = arith.constant 2 : index
    %37 = vector.load %arg8[%c0_64, %c8_65, %c2_66] : memref<2x26x26xf32, #tpu.memory_space<vmem>>, vector<2x16x16xf32>
    %c0_67 = arith.constant 0 : index
    %c8_68 = arith.constant 8 : index
    %c5_69 = arith.constant 5 : index
    %38 = vector.load %arg8[%c0_67, %c8_68, %c5_69] : memref<2x26x26xf32, #tpu.memory_space<vmem>>, vector<2x16x16xf32>
    %c0_70 = arith.constant 0 : index
    %c8_71 = arith.constant 8 : index
    %c8_72 = arith.constant 8 : index
    %39 = vector.load %arg8[%c0_70, %c8_71, %c8_72] : memref<2x26x26xf32, #tpu.memory_space<vmem>>, vector<2x16x16xf32>
    %40 = tpu.concatenate %31, %32, %33, %34, %35, %36, %37, %38, %39 in 0 : vector<2x16x16xf32>, vector<2x16x16xf32>, vector<2x16x16xf32>, vector<2x16x16xf32>, vector<2x16x16xf32>, vector<2x16x16xf32>, vector<2x16x16xf32>, vector<2x16x16xf32>, vector<2x16x16xf32> -> vector<18x16x16xf32>
    "tpu.trace_start"() <{level = 10 : i32, message = "ok,khw->ohw"}> : () -> ()
    %cst_73 = arith.constant dense<0.000000e+00> : vector<2x16x16xf32>
    %41 = tpu.matmul %17, %40, %cst_73 {dimension_numbers = #tpu.dot_dimension_numbers<[1], [0], [0], [1, 2], [0, 0, 1, 1, 1, 2], [], []>} : vector<2x18xf32>, vector<18x16x16xf32>, vector<2x16x16xf32> -> vector<2x16x16xf32>
    "tpu.trace_stop"() : () -> ()
    %c0_74 = arith.constant 0 : index
    %c5_75 = arith.constant 5 : index
    %c5_76 = arith.constant 5 : index
    %42 = vector.load %arg8[%c0_74, %c5_75, %c5_76] : memref<2x26x26xf32, #tpu.memory_space<vmem>>, vector<2x16x16xf32>
    tpu.vector_store %arg8[%c0_74, %c5_75, %c5_76], %41 {strides = array<i32>} : memref<2x26x26xf32, #tpu.memory_space<vmem>>, vector<2x16x16xf32>,
    %c0_77 = arith.constant 0 : index
    %c0_78 = arith.constant 0 : index
    %c0_79 = arith.constant 0 : index
    %43 = vector.load %arg8[%c0_77, %c0_78, %c0_79] : memref<2x26x26xf32, #tpu.memory_space<vmem>>, vector<2x16x16xf32>
    %c0_80 = arith.constant 0 : index
    %c0_81 = arith.constant 0 : index
    %c5_82 = arith.constant 5 : index
    %44 = vector.load %arg8[%c0_80, %c0_81, %c5_82] : memref<2x26x26xf32, #tpu.memory_space<vmem>>, vector<2x16x16xf32>
    %c0_83 = arith.constant 0 : index
    %c0_84 = arith.constant 0 : index
    %c10 = arith.constant 10 : index
    %45 = vector.load %arg8[%c0_83, %c0_84, %c10] : memref<2x26x26xf32, #tpu.memory_space<vmem>>, vector<2x16x16xf32>
    %c0_85 = arith.constant 0 : index
    %c5_86 = arith.constant 5 : index
    %c0_87 = arith.constant 0 : index
    %46 = vector.load %arg8[%c0_85, %c5_86, %c0_87] : memref<2x26x26xf32, #tpu.memory_space<vmem>>, vector<2x16x16xf32>
    %c0_88 = arith.constant 0 : index
    %c5_89 = arith.constant 5 : index
    %c5_90 = arith.constant 5 : index
    %47 = vector.load %arg8[%c0_88, %c5_89, %c5_90] : memref<2x26x26xf32, #tpu.memory_space<vmem>>, vector<2x16x16xf32>
    %c0_91 = arith.constant 0 : index
    %c5_92 = arith.constant 5 : index
    %c10_93 = arith.constant 10 : index
    %48 = vector.load %arg8[%c0_91, %c5_92, %c10_93] : memref<2x26x26xf32, #tpu.memory_space<vmem>>, vector<2x16x16xf32>
    %c0_94 = arith.constant 0 : index
    %c10_95 = arith.constant 10 : index
    %c0_96 = arith.constant 0 : index
    %49 = vector.load %arg8[%c0_94, %c10_95, %c0_96] : memref<2x26x26xf32, #tpu.memory_space<vmem>>, vector<2x16x16xf32>
    %c0_97 = arith.constant 0 : index
    %c10_98 = arith.constant 10 : index
    %c5_99 = arith.constant 5 : index
    %50 = vector.load %arg8[%c0_97, %c10_98, %c5_99] : memref<2x26x26xf32, #tpu.memory_space<vmem>>, vector<2x16x16xf32>
    %c0_100 = arith.constant 0 : index
    %c10_101 = arith.constant 10 : index
    %c10_102 = arith.constant 10 : index
    %51 = vector.load %arg8[%c0_100, %c10_101, %c10_102] : memref<2x26x26xf32, #tpu.memory_space<vmem>>, vector<2x16x16xf32>
    %52 = tpu.concatenate %43, %44, %45, %46, %47, %48, %49, %50, %51 in 0 : vector<2x16x16xf32>, vector<2x16x16xf32>, vector<2x16x16xf32>, vector<2x16x16xf32>, vector<2x16x16xf32>, vector<2x16x16xf32>, vector<2x16x16xf32>, vector<2x16x16xf32>, vector<2x16x16xf32> -> vector<18x16x16xf32>
    "tpu.trace_start"() <{level = 10 : i32, message = "ok,khw->ohw"}> : () -> ()
    %cst_103 = arith.constant dense<0.000000e+00> : vector<2x16x16xf32>
    %53 = tpu.matmul %17, %52, %cst_103 {dimension_numbers = #tpu.dot_dimension_numbers<[1], [0], [0], [1, 2], [0, 0, 1, 1, 1, 2], [], []>} : vector<2x18xf32>, vector<18x16x16xf32>, vector<2x16x16xf32> -> vector<2x16x16xf32>
    "tpu.trace_stop"() : () -> ()
    %54 = tpu.concatenate %14, %29, %41, %53 in 0 : vector<2x16x16xf32>, vector<2x16x16xf32>, vector<2x16x16xf32>, vector<2x16x16xf32> -> vector<8x16x16xf32>
    %c0_104 = arith.constant 0 : index
    %c0_105 = arith.constant 0 : index
    %55 = vector.load %arg5[%c0_104, %c0_105] : memref<8x8xf32, #tpu.memory_space<vmem>>, vector<8x8xf32>
    "tpu.trace_start"() <{level = 10 : i32, message = "oc,chw->ohw"}> : () -> ()
    %cst_106 = arith.constant dense<0.000000e+00> : vector<8x16x16xf32>
    %56 = tpu.matmul %55, %54, %cst_106 {dimension_numbers = #tpu.dot_dimension_numbers<[1], [0], [0], [1, 2], [0, 0, 1, 1, 1, 2], [], []>} : vector<8x8xf32>, vector<8x16x16xf32>, vector<8x16x16xf32> -> vector<8x16x16xf32>
    "tpu.trace_stop"() : () -> ()
    %c0_107 = arith.constant 0 : index
    %c0_108 = arith.constant 0 : index
    %c0_109 = arith.constant 0 : index
    %57 = vector.load %arg6[%c0_107, %c0_108, %c0_109] : memref<8x1x1xf32, #tpu.memory_space<vmem>>, vector<8x1x1xf32>
    %58 = vector.broadcast %57 : vector<8x1x1xf32> to vector<8x16x16xf32>
    %59 = arith.addf %56, %58 : vector<8x16x16xf32>
    %cst_110 = arith.constant 0.000000e+00 : f32
    %60 = vector.broadcast %cst_110 : f32 to vector<8x16x16xf32>
    %61 = arith.subf %60, %59 : vector<8x16x16xf32>
    %62 = math.exp %61 : vector<8x16x16xf32>
    %cst_111 = arith.constant 1.000000e+00 : f32
    %63 = vector.broadcast %cst_111 : f32 to vector<8x16x16xf32>
    %64 = arith.addf %63, %62 : vector<8x16x16xf32>
    %cst_112 = arith.constant 1.000000e+00 : f32
    %65 = vector.broadcast %cst_112 : f32 to vector<8x16x16xf32>
    %66 = arith.divf %65, %64 : vector<8x16x16xf32>
    %67 = arith.mulf %59, %66 : vector<8x16x16xf32>
    %c0_113 = arith.constant 0 : index
    %c0_114 = arith.constant 0 : index
    %c0_115 = arith.constant 0 : index
    %c0_116 = arith.constant 0 : index
    %68 = vector.load %arg7[%c0_113, %c0_114, %c0_115, %c0_116] : memref<1x8x16x16xf32, #tpu.memory_space<vmem>>, vector<1x8x16x16xf32>
    %69 = vector.shape_cast %68 : vector<1x8x16x16xf32> to vector<8x16x16xf32>
    %70 = vector.shape_cast %67 : vector<8x16x16xf32> to vector<1x8x16x16xf32>
    tpu.vector_store %arg7[%c0_113, %c0_114, %c0_115, %c0_116], %70 {strides = array<i32>} : memref<1x8x16x16xf32, #tpu.memory_space<vmem>>, vector<1x8x16x16xf32>,
    return
  }
  func.func @transform_0(%arg0: i32) -> (i32, i32, i32, i32) {
    %c0_i32 = arith.constant 0 : i32
    %c0_i32_0 = arith.constant 0 : i32
    %c0_i32_1 = arith.constant 0 : i32
    %c0_i32_2 = arith.constant 0 : i32
    return %arg0, %c0_i32, %c0_i32_0, %c0_i32_1 : i32, i32, i32, i32
  }
  func.func @transform_1(%arg0: i32) -> (i32, i32) {
    %c0_i32 = arith.constant 0 : i32
    %c0_i32_0 = arith.constant 0 : i32
    %c0_i32_1 = arith.constant 0 : i32
    return %c0_i32, %c0_i32_0 : i32, i32
  }
  func.func @transform_2(%arg0: i32) -> (i32, i32, i32) {
    %c0_i32 = arith.constant 0 : i32
    %c0_i32_0 = arith.constant 0 : i32
    %c0_i32_1 = arith.constant 0 : i32
    %c0_i32_2 = arith.constant 0 : i32
    return %c0_i32, %c0_i32_0, %c0_i32_1 : i32, i32, i32
  }
  func.func @transform_3(%arg0: i32) -> (i32, i32) {
    %c0_i32 = arith.constant 0 : i32
    %c0_i32_0 = arith.constant 0 : i32
    %c0_i32_1 = arith.constant 0 : i32
    return %c0_i32, %c0_i32_0 : i32, i32
  }
  func.func @transform_4(%arg0: i32) -> (i32, i32) {
    %c0_i32 = arith.constant 0 : i32
    %c0_i32_0 = arith.constant 0 : i32
    %c0_i32_1 = arith.constant 0 : i32
    return %c0_i32, %c0_i32_0 : i32, i32
  }
  func.func @transform_5(%arg0: i32) -> (i32, i32, i32) {
    %c0_i32 = arith.constant 0 : i32
    %c0_i32_0 = arith.constant 0 : i32
    %c0_i32_1 = arith.constant 0 : i32
    %c0_i32_2 = arith.constant 0 : i32
    return %c0_i32, %c0_i32_0, %c0_i32_1 : i32, i32, i32
  }
  func.func @transform_6(%arg0: i32) -> (i32, i32, i32, i32) {
    %c0_i32 = arith.constant 0 : i32
    %c0_i32_0 = arith.constant 0 : i32
    %c0_i32_1 = arith.constant 0 : i32
    %c0_i32_2 = arith.constant 0 : i32
    return %arg0, %c0_i32, %c0_i32_0, %c0_i32_1 : i32, i32, i32, i32
  }
}

</mosaic_0001>

<llo_original>
// kernel: tpu_custom_call.1
$region0: #{tpu_custom_call.1}
  #allocation0 [shape = 'u32[]', space=smem, size = 0x4, offset = 0x4, fixed_abs, tag = 'smem constant byte address 0x4 - core index']
  #allocation1 [shape = 'u32[72,128]{1,0:T(1,128)}', space=vmem, size = 0x9000, scoped, tag = 'internal scratch']
  #allocation2 [shape = 'f32[2,26,26]{2,1,0:T(8,128)}', space=vmem, size = 0x8000, scoped, tag = 'scratch operand']
  %s0 = inlined_call_operand.hbm [shape: f32[2,4,16,16], index: 0, kind: input, shape index: {}]
  %s1 = inlined_call_operand.vmem [shape: f32[2,4], index: 1, kind: input, shape index: {}]
  %s2 = inlined_call_operand.vmem [shape: f32[2,1,1], index: 2, kind: input, shape index: {}]
  %s3 = inlined_call_operand.hbm [shape: f32[2,18], index: 3, kind: input, shape index: {}]
  %s4 = inlined_call_operand.vmem [shape: f32[8,8], index: 4, kind: input, shape index: {}]
  %s5 = inlined_call_operand.vmem [shape: f32[8,1,1], index: 5, kind: input, shape index: {}]
  %s6 = inlined_call_operand.hbm [shape: f32[2,8,16,16], index: 6, kind: output, shape index: {}]
  %s7 = sld [smem:[#allocation0]]
  $region65: #{tpu_custom_call.1} parent=0
    _
  %s9 = ssub.s32 1, %s7
  %s10 = scalar_select 0, %s9, %s7
  $region1: #{tpu_custom_call.1} parent=0
    #allocation3 [shape = 'u8[65536]{0}', space=vmem, size = 0x10000, scoped, tag = 'input window, operand 0']
    #allocation4 [shape = 's32[2]{0}', space=sflag, size = 0x8, scoped, tag = 'scoped memory for tpu_custom_call.1']
    #allocation5 [shape = 's32[2]{0}', space=sflag, size = 0x8, scoped, tag = 'scoped memory for tpu_custom_call.1']
    #allocation6 [shape = 'u8[1024]{0}', space=vmem, size = 0x400, scoped, tag = 'input window, operand 3, single buffered']
    #allocation7 [shape = 's32[1]{0}', space=sflag, size = 0x4, scoped, tag = 'scoped memory for tpu_custom_call.1']
    #allocation8 [shape = 'u8[131072]{0}', space=vmem, size = 0x20000, scoped, tag = 'output window, operand 0']
    %11 = vsyncpa [#allocation4], 0
    %s12 = scalar_lea.sflag [#allocation4], 1
    %13 = vsyncpa %s12, 0
    %14 = vsyncpa [#allocation7], 0
    %15 = vsyncpa [#allocation5], 0
    %s16 = scalar_lea.sflag [#allocation5], 1
    %17 = vsyncpa %s16, 0
    loop: start=0, step=1, limit=4
    $region2: #{tpu_custom_call.1} parent=1 // loop_pre_header
      _
    $region3: #{tpu_custom_call.1} parent=1 // loop_header
      %s19 = sphi 0, %s23
      %p20 = scmp.ge.s32.totalorder %s19, 4
      %s29 = sphi 0, %s31
      %s32 = sphi 0, %s29
      %s33 = sphi 0, %s32
      %s49 = sphi 0, %s33
      %s53 = sphi 0, %s53
      %s55 = sphi 0, %s53
      %s56 = sphi 0, %s55
      %s70 = sphi 0, %s56
      %s74 = sphi 0, %s74
      %s76 = sphi 0, %s74
      %s77 = sphi 0, %s76
      %s91 = sphi 0, %s77
      %s95 = sphi 0, %s95
      %s97 = sphi 0, %s95
      %s98 = sphi 0, %s97
      %s112 = sphi 0, %s98
      %s116 = sphi 0, %s116
      %s118 = sphi 0, %s116
      %s119 = sphi 0, %s118
      %s133 = sphi 0, %s119
      %s137 = sphi 0, %s137
      %s139 = sphi 0, %s137
      %s140 = sphi 0, %s139
      %s154 = sphi 0, %s140
      %s160 = sphi 0, %s162
      %s163 = sphi 0, %s160
      %s164 = sphi 0, %s163
      %s180 = sphi 0, %s164
    $region4: #{tpu_custom_call.1} parent=1 // loop_header_branch
      %22 = sbr.rel (%p20) target = $region8
    $region5: #{tpu_custom_call.1} parent=1 // loop_body
      %s24 = ssub.s32 %s19, 1
      %s25 = ssub.s32 %s19, 2
      %s26 = sadd.s32 %s19, 1
      %s27 = ssub.s32 %s19, %s26
      %p28 = scmp.eq.s32.totalorder %s27, 0
      %s30 = sadd.s32 %s29, 1
      %s31 = scalar_select %p28, %s29, %s30
      %p34 = pneg %p28
      %p35 = scmp.eq.s32.totalorder %s19, 1
      %p36 = por %p34, %p35
      %p37 = scmp.ne.s32.totalorder %s29, %s32
      %p38 = scmp.eq.s32.totalorder %s19, 0
      %p39 = por %p37, %p38
      %p40 = scmp.ne.s32.totalorder %s29, %s32
      %p41 = scmp.eq.s32.totalorder %s24, 1
      %p42 = por %p40, %p41
      %p43 = scmp.ne.s32.totalorder %s32, %s33
      %p44 = scmp.eq.s32.totalorder %s24, 0
      %p45 = por %p43, %p44
      %p46 = scmp.ne.s32.totalorder %s32, %s33
      %p47 = scmp.eq.s32.totalorder %s25, 1
      %p48 = por %p46, %p47
      %p50 = scmp.ne.s32.totalorder %s33, %s49
      %p51 = scmp.eq.s32.totalorder %s25, 0
      %p52 = por %p50, %p51
      %s54 = sadd.s32 %s53, 1
      %p57 = scmp.eq.s32.totalorder %s19, 1
      %p58 = scmp.ne.s32.totalorder %s53, %s55
      %p59 = scmp.eq.s32.totalorder %s19, 0
      %p60 = por %p58, %p59
      %p61 = scmp.ne.s32.totalorder %s53, %s55
      %p62 = scmp.eq.s32.totalorder %s24, 1
      %p63 = por %p61, %p62
      %p64 = scmp.ne.s32.totalorder %s55, %s56
      %p65 = scmp.eq.s32.totalorder %s24, 0
      %p66 = por %p64, %p65
      %p67 = scmp.ne.s32.totalorder %s55, %s56
      %p68 = scmp.eq.s32.totalorder %s25, 1
      %p69 = por %p67, %p68
      %p71 = scmp.ne.s32.totalorder %s56, %s70
      %p72 = scmp.eq.s32.totalorder %s25, 0
      %p73 = por %p71, %p72
      %s75 = sadd.s32 %s74, 1
      %p78 = scmp.eq.s32.totalorder %s19, 1
      %p79 = scmp.ne.s32.totalorder %s74, %s76
      %p80 = scmp.eq.s32.totalorder %s19, 0
      %p81 = por %p79, %p80
      %p82 = scmp.ne.s32.totalorder %s74, %s76
      %p83 = scmp.eq.s32.totalorder %s24, 1
      %p84 = por %p82, %p83
      %p85 = scmp.ne.s32.totalorder %s76, %s77
      %p86 = scmp.eq.s32.totalorder %s24, 0
      %p87 = por %p85, %p86
      %p88 = scmp.ne.s32.totalorder %s76, %s77
      %p89 = scmp.eq.s32.totalorder %s25, 1
      %p90 = por %p88, %p89
      %p92 = scmp.ne.s32.totalorder %s77, %s91
      %p93 = scmp.eq.s32.totalorder %s25, 0
      %p94 = por %p92, %p93
      %s96 = sadd.s32 %s95, 1
      %p99 = scmp.eq.s32.totalorder %s19, 1
      %p100 = scmp.ne.s32.totalorder %s95, %s97
      %p101 = scmp.eq.s32.totalorder %s19, 0
      %p102 = por %p100, %p101
      %p103 = scmp.ne.s32.totalorder %s95, %s97
      %p104 = scmp.eq.s32.totalorder %s24, 1
      %p105 = por %p103, %p104
      %p106 = scmp.ne.s32.totalorder %s97, %s98
      %p107 = scmp.eq.s32.totalorder %s24, 0
      %p108 = por %p106, %p107
      %p109 = scmp.ne.s32.totalorder %s97, %s98
      %p110 = scmp.eq.s32.totalorder %s25, 1
      %p111 = por %p109, %p110
      %p113 = scmp.ne.s32.totalorder %s98, %s112
      %p114 = scmp.eq.s32.totalorder %s25, 0
      %p115 = por %p113, %p114
      %s117 = sadd.s32 %s116, 1
      %p120 = scmp.eq.s32.totalorder %s19, 1
      %p121 = scmp.ne.s32.totalorder %s116, %s118
      %p122 = scmp.eq.s32.totalorder %s19, 0
      %p123 = por %p121, %p122
      %p124 = scmp.ne.s32.totalorder %s116, %s118
      %p125 = scmp.eq.s32.totalorder %s24, 1
      %p126 = por %p124, %p125
      %p127 = scmp.ne.s32.totalorder %s118, %s119
      %p128 = scmp.eq.s32.totalorder %s24, 0
      %p129 = por %p127, %p128
      %p130 = scmp.ne.s32.totalorder %s118, %s119
      %p131 = scmp.eq.s32.totalorder %s25, 1
      %p132 = por %p130, %p131
      %p134 = scmp.ne.s32.totalorder %s119, %s133
      %p135 = scmp.eq.s32.totalorder %s25, 0
      %p136 = por %p134, %p135
      %s138 = sadd.s32 %s137, 1
      %p141 = scmp.eq.s32.totalorder %s19, 1
      %p142 = scmp.ne.s32.totalorder %s137, %s139
      %p143 = scmp.eq.s32.totalorder %s19, 0
      %p144 = por %p142, %p143
      %p145 = scmp.ne.s32.totalorder %s137, %s139
      %p146 = scmp.eq.s32.totalorder %s24, 1
      %p147 = por %p145, %p146
      %p148 = scmp.ne.s32.totalorder %s139, %s140
      %p149 = scmp.eq.s32.totalorder %s24, 0
      %p150 = por %p148, %p149
      %p151 = scmp.ne.s32.totalorder %s139, %s140
      %p152 = scmp.eq.s32.totalorder %s25, 1
      %p153 = por %p151, %p152
      %p155 = scmp.ne.s32.totalorder %s140, %s154
      %p156 = scmp.eq.s32.totalorder %s25, 0
      %p157 = por %p155, %p156
      %s158 = ssub.s32 %s19, %s26
      %p159 = scmp.eq.s32.totalorder %s158, 0
      %s161 = sadd.s32 %s160, 1
      %s162 = scalar_select %p159, %s160, %s161
      %p165 = pneg %p159
      %p166 = scmp.eq.s32.totalorder %s19, 1
      %p167 = por %p165, %p166
      %p168 = scmp.ne.s32.totalorder %s160, %s163
      %p169 = scmp.eq.s32.totalorder %s19, 0
      %p170 = por %p168, %p169
      %p171 = scmp.ne.s32.totalorder %s160, %s163
      %p172 = scmp.eq.s32.totalorder %s24, 1
      %p173 = por %p171, %p172
      %p174 = scmp.ne.s32.totalorder %s163, %s164
      %p175 = scmp.eq.s32.totalorder %s24, 0
      %p176 = por %p174, %p175
      %p177 = scmp.ne.s32.totalorder %s163, %s164
      %p178 = scmp.eq.s32.totalorder %s25, 1
      %p179 = por %p177, %p178
      %p181 = scmp.ne.s32.totalorder %s164, %s180
      %p182 = scmp.eq.s32.totalorder %s25, 0
      %p183 = por %p181, %p182
      %p184 = scmp.le.s32.totalorder 1, %s19
      %p185 = scmp.lt.s32.totalorder %s19, 3
      %p186 = pnand %p184, %p185
      %p187 = pneg %p186
      // Predicated region
      $region9: #{tpu_custom_call.1} parent=5 // pred_check
        _
      $region10: #{tpu_custom_call.1} parent=5 // pred_check_branch
        %189 = sbr.rel (%p186) target = $region12
      $region11: #{tpu_custom_call.1} parent=5 // pred_region
        %s190 = ssub.s32 %s19, 1
        // Predicated region
        $region13: #{tpu_custom_call.1} parent=11 // pred_check
          %p191 = pneg %p66
        $region14: #{tpu_custom_call.1} parent=11 // pred_check_branch
          %193 = sbr.rel (%p191) target = $region16
        $region15: #{tpu_custom_call.1} parent=11 // pred_region
          _
        $region16: #{tpu_custom_call.1} parent=11 // pred_fallthru
          _
        // Predicated region
        $region17: #{tpu_custom_call.1} parent=11 // pred_check
          %p194 = pneg %p87
        $region18: #{tpu_custom_call.1} parent=11 // pred_check_branch
          %196 = sbr.rel (%p194) target = $region20
        $region19: #{tpu_custom_call.1} parent=11 // pred_region
          _
        $region20: #{tpu_custom_call.1} parent=11 // pred_fallthru
          _
        // Predicated region
        $region21: #{tpu_custom_call.1} parent=11 // pred_check
          %p197 = pneg %p108
        $region22: #{tpu_custom_call.1} parent=11 // pred_check_branch
          %199 = sbr.rel (%p197) target = $region24
        $region23: #{tpu_custom_call.1} parent=11 // pred_region
          %201 = vsyncadd [#allocation7], 0
          %s203 = sshll.u32 %s3, 4
          %s204 = int_to_ptr.hbm [resolvable:$true] %s203
          %s205 = sshll.u32 [#allocation6], 4
          %s206 = int_to_ptr.vmem [resolvable:$true] %s205
          %208 = dma.hbm_to_vmem [thread:$0]  %s204, 32, %s206, [#allocation7]
        $region24: #{tpu_custom_call.1} parent=11 // pred_fallthru
          _
        // Predicated region
        $region25: #{tpu_custom_call.1} parent=11 // pred_check
          %p209 = pneg %p129
        $region26: #{tpu_custom_call.1} parent=11 // pred_check_branch
          %211 = sbr.rel (%p209) target = $region28
        $region27: #{tpu_custom_call.1} parent=11 // pred_region
          _
        $region28: #{tpu_custom_call.1} parent=11 // pred_fallthru
          _
        // Predicated region
        $region29: #{tpu_custom_call.1} parent=11 // pred_check
          %p212 = pneg %p150
        $region30: #{tpu_custom_call.1} parent=11 // pred_check_branch
          %214 = sbr.rel (%p212) target = $region32
        $region31: #{tpu_custom_call.1} parent=11 // pred_region
          _
        $region32: #{tpu_custom_call.1} parent=11 // pred_fallthru
          _
      $region12: #{tpu_custom_call.1} parent=5 // pred_fallthru
        _
      %p215 = scmp.lt.s32.totalorder %s19, 2
      // Predicated region
      $region33: #{tpu_custom_call.1} parent=5 // pred_check
        %p216 = pneg %p215
      $region34: #{tpu_custom_call.1} parent=5 // pred_check_branch
        %218 = sbr.rel (%p216) target = $region36
      $region35: #{tpu_custom_call.1} parent=5 // pred_region
        // Predicated region
        $region37: #{tpu_custom_call.1} parent=35 // pred_check
          %p219 = pneg %p39
        $region38: #{tpu_custom_call.1} parent=35 // pred_check_branch
          %221 = sbr.rel (%p219) target = $region40
        $region39: #{tpu_custom_call.1} parent=35 // pred_region
          %s222 = sand.u32 %s29, 1
          %s223 = scalar_lea.sflag [#allocation4], %s222
          %s224 = sand.u32 %s29, 1
          %s225 = smul.addr %s224, 64
          %s226 = scalar_lea.vmem [#allocation3], %s225
          %228 = vsyncadd %s223, 0
          %s229 = smul.addr %s19, 8
          %s230 = smul.addr %s229, 8
          %s231 = scalar_lea.hbm %s0, %s230
          %s232 = sshll.u32 %s231, 4
          %s233 = int_to_ptr.hbm [resolvable:$true] %s232
          %s234 = sshll.u32 %s226, 4
          %s235 = int_to_ptr.vmem [resolvable:$true] %s234
          %240 = dma.hbm_to_vmem [thread:$0]  %s233, 1024, %s235, %s223, 128, 128, 8
        $region40: #{tpu_custom_call.1} parent=35 // pred_fallthru
          _
      $region36: #{tpu_custom_call.1} parent=5 // pred_fallthru
        _
      %p241 = scmp.le.s32.totalorder 1, %s19
      %p242 = scmp.lt.s32.totalorder %s19, 3
      %p243 = pnand %p241, %p242
      %p244 = pneg %p243
      // Predicated region
      $region41: #{tpu_custom_call.1} parent=5 // pred_check
        _
      $region42: #{tpu_custom_call.1} parent=5 // pred_check_branch
        %246 = sbr.rel (%p243) target = $region44
      $region43: #{tpu_custom_call.1} parent=5 // pred_region
        %s247 = ssub.s32 %s19, 1
        %s248 = sand.u32 %s32, 1
        %s249 = scalar_lea.sflag [#allocation4], %s248
        %s250 = sand.u32 %s32, 1
        %s251 = smul.addr %s250, 64
        %s252 = scalar_lea.vmem [#allocation3], %s251
        // Predicated region
        $region45: #{tpu_custom_call.1} parent=43 // pred_check
          %p253 = pneg %p45
        $region46: #{tpu_custom_call.1} parent=43 // pred_check_branch
          %255 = sbr.rel (%p253) target = $region48
        $region47: #{tpu_custom_call.1} parent=43 // pred_region
          %257 = dma.done %s249, 1024
        $region48: #{tpu_custom_call.1} parent=43 // pred_fallthru
          _
        // Predicated region
        $region49: #{tpu_custom_call.1} parent=43 // pred_check
          %p258 = pneg %p108
        $region50: #{tpu_custom_call.1} parent=43 // pred_check_branch
          %260 = sbr.rel (%p258) target = $region52
        $region51: #{tpu_custom_call.1} parent=43 // pred_region
          %262 = dma.done [#allocation7], 32
        $region52: #{tpu_custom_call.1} parent=43 // pred_fallthru
          _
        %s263 = sand.u32 %s32, 1
        %s264 = scalar_lea.sflag [#allocation4], %s263
        %s265 = sand.u32 %s32, 1
        %s266 = smul.addr %s265, 64
        %s267 = scalar_lea.vmem [#allocation3], %s266
        %p268 = pneg %p45
        %p269 = pneg %p42
        %p270 = pneg %p66
        %p271 = pneg %p63
        %p272 = pneg %p87
        %p273 = pneg %p84
        %p274 = pneg %p108
        %p275 = pneg %p105
        %p276 = pneg %p129
        %p277 = pneg %p126
        %p278 = pneg %p150
        %p279 = pneg %p147
        %p280 = pneg %p176
        %p281 = pneg %p173
        %s282 = sand.u32 %s163, 1
        %s283 = scalar_lea.sflag [#allocation5], %s282
        %s284 = sand.u32 %s163, 1
        %s285 = smul.addr %s284, 128
        %s286 = scalar_lea.vmem [#allocation8], %s285
        %v287 = vld [vmem:[%s1] sm:$0x3]
        %v288 = vld [vmem:[%s252] sm:$0xff]
        %v289 = vld [vmem:[%s252 + $0x8] sm:$0xff]
        %v290 = vld [vmem:[%s252 + $0x10] sm:$0xff]
        %v291 = vld [vmem:[%s252 + $0x18] sm:$0xff]
        %v292 = vld [vmem:[%s252 + $0x20] sm:$0xff]
        %v293 = vld [vmem:[%s252 + $0x28] sm:$0xff]
        %v294 = vld [vmem:[%s252 + $0x30] sm:$0xff]
        %v295 = vld [vmem:[%s252 + $0x38] sm:$0xff]
        %v296 = vld [vmem:[%s2] sm:$0x1]
        %v297 = vld [vmem:[%s2 + $0x1] sm:$0x1]
        %v300 = vperm.slane %v296, 0
        %v301 = vperm.slane %v297, 0
        %302 = vset.pattern.permute.xlu0 0
        %303 = vperm.xlu0 %302, %v300
        %v304 = vpop.permute.xlu0 %303
        %306 = vset.pattern.permute.xlu0 0
        %307 = vperm.xlu0 %306, %v301
        %v308 = vpop.permute.xlu0 %307
        %v310 = vrot.slane %v292, 4
        %vm311 = vcmask 1047556
        %v312 = vsel %vm311, %v310, %v288
        %v313 = vrot.slane %v288, 4
        %v314 = vsel %vm311, %v292, %v313
        %v316 = vunpack.c.l.s4 1983009808
        %v317 = vunpack.c.0.s8 %v316
        %v318 = vperm.slane %v312, %v317
        %v320 = vunpack.c.l.s4 1983009808
        %v321 = vunpack.c.0.s8 %v320
        %v322 = vperm.slane %v314, %v321
        %v323 = vrot.slane %v294, 4
        %v324 = vsel %vm311, %v323, %v290
        %v325 = vrot.slane %v290, 4
        %v326 = vsel %vm311, %v294, %v325
        %v328 = vunpack.c.l.s4 1983009808
        %v329 = vunpack.c.0.s8 %v328
        %v330 = vperm.slane %v324, %v329
        %v332 = vunpack.c.l.s4 1983009808
        %v333 = vunpack.c.0.s8 %v332
        %v334 = vperm.slane %v326, %v333
        %v335 = vrot.slane %v330, 4
        %v336 = vsel %vm311, %v335, %v318
        %v337 = vrot.slane %v318, 4
        %v338 = vsel %vm311, %v330, %v337
        %v340 = vunpack.c.l.s4 1934713408
        %v341 = vunpack.c.0.s8 %v340
        %v342 = vperm.slane %v336, %v341
        %v344 = vunpack.c.l.s4 1934713408
        %v345 = vunpack.c.0.s8 %v344
        %v346 = vperm.slane %v338, %v345
        %v347 = vrot.slane %v334, 4
        %v348 = vsel %vm311, %v347, %v322
        %v349 = vrot.slane %v322, 4
        %v350 = vsel %vm311, %v334, %v349
        %v352 = vunpack.c.l.s4 1934713408
        %v353 = vunpack.c.0.s8 %v352
        %v354 = vperm.slane %v348, %v353
        %v356 = vunpack.c.l.s4 1934713408
        %v357 = vunpack.c.0.s8 %v356
        %v358 = vperm.slane %v350, %v357
        %v359 = vrot.slane %v342, 4
        %v360 = vsel %vm311, 0.0, %v359
        %v361 = vrot.slane %v346, 4
        %v362 = vsel %vm311, 0.0, %v361
        %v363 = vrot.slane %v354, 4
        %v364 = vsel %vm311, 0.0, %v363
        %v365 = vrot.slane %v358, 4
        %v366 = vsel %vm311, 0.0, %v365
        %v367 = vrot.slane %v293, 4
        %v368 = vsel %vm311, %v367, %v289
        %v369 = vrot.slane %v289, 4
        %v370 = vsel %vm311, %v293, %v369
        %v372 = vunpack.c.l.s4 1983009808
        %v373 = vunpack.c.0.s8 %v372
        %v374 = vperm.slane %v368, %v373
        %v376 = vunpack.c.l.s4 1983009808
        %v377 = vunpack.c.0.s8 %v376
        %v378 = vperm.slane %v370, %v377
        %v379 = vrot.slane %v295, 4
        %v380 = vsel %vm311, %v379, %v291
        %v381 = vrot.slane %v291, 4
        %v382 = vsel %vm311, %v295, %v381
        %v384 = vunpack.c.l.s4 1983009808
        %v385 = vunpack.c.0.s8 %v384
        %v386 = vperm.slane %v380, %v385
        %v388 = vunpack.c.l.s4 1983009808
        %v389 = vunpack.c.0.s8 %v388
        %v390 = vperm.slane %v382, %v389
        %v391 = vrot.slane %v386, 4
        %v392 = vsel %vm311, %v391, %v374
        %v393 = vrot.slane %v374, 4
        %v394 = vsel %vm311, %v386, %v393
        %v396 = vunpack.c.l.s4 1934713408
        %v397 = vunpack.c.0.s8 %v396
        %v398 = vperm.slane %v392, %v397
        %v400 = vunpack.c.l.s4 1934713408
        %v401 = vunpack.c.0.s8 %v400
        %v402 = vperm.slane %v394, %v401
        %v403 = vrot.slane %v390, 4
        %v404 = vsel %vm311, %v403, %v378
        %v405 = vrot.slane %v378, 4
        %v406 = vsel %vm311, %v390, %v405
        %v408 = vunpack.c.l.s4 1934713408
        %v409 = vunpack.c.0.s8 %v408
        %v410 = vperm.slane %v404, %v409
        %v412 = vunpack.c.l.s4 1934713408
        %v413 = vunpack.c.0.s8 %v412
        %v414 = vperm.slane %v406, %v413
        %v415 = vrot.slane %v398, 4
        %v416 = vsel %vm311, 0.0, %v415
        %v417 = vrot.slane %v402, 4
        %v418 = vsel %vm311, 0.0, %v417
        %v419 = vrot.slane %v410, 4
        %v420 = vsel %vm311, 0.0, %v419
        %v421 = vrot.slane %v414, 4
        %v422 = vsel %vm311, 0.0, %v421
        %424 = vrot.lane.b32.xlu0 %v360, 16
        %v425 = vpop.permute.xlu0 %424
        %428 = vrot.lane.b32.xlu0 %v346, 32
        %v429 = vpop.permute.xlu0 %428
        %432 = vrot.lane.b32.xlu0 %v362, 48
        %v433 = vpop.permute.xlu0 %432
        %436 = vrot.lane.b32.xlu0 %v354, 64
        %v437 = vpop.permute.xlu0 %436
        %440 = vrot.lane.b32.xlu0 %v364, 80
        %v441 = vpop.permute.xlu0 %440
        %444 = vrot.lane.b32.xlu0 %v358, 96
        %v445 = vpop.permute.xlu0 %444
        %448 = vrot.lane.b32.xlu0 %v366, 112
        %v449 = vpop.permute.xlu0 %448
        %452 = vrot.lane.b32.xlu0 %v416, 16
        %v453 = vpop.permute.xlu0 %452
        %456 = vrot.lane.b32.xlu0 %v402, 32
        %v457 = vpop.permute.xlu0 %456
        %460 = vrot.lane.b32.xlu0 %v418, 48
        %v461 = vpop.permute.xlu0 %460
        %464 = vrot.lane.b32.xlu0 %v410, 64
        %v465 = vpop.permute.xlu0 %464
        %468 = vrot.lane.b32.xlu0 %v420, 80
        %v469 = vpop.permute.xlu0 %468
        %472 = vrot.lane.b32.xlu0 %v414, 96
        %v473 = vpop.permute.xlu0 %472
        %476 = vrot.lane.b32.xlu0 %v422, 112
        %v477 = vpop.permute.xlu0 %476
        %vm479 = vcmask 130048
        %v480 = vsel %vm479, %v342, %v425
        %vm481 = vcmask 261120
        %v482 = vsel %vm481, %v480, %v429
        %vm483 = vcmask 392192
        %v484 = vsel %vm483, %v482, %v433
        %vm485 = vcmask 523264
        %v486 = vsel %vm485, %v484, %v437
        %vm487 = vcmask 654336
        %v488 = vsel %vm487, %v486, %v441
        %vm489 = vcmask 785408
        %v490 = vsel %vm489, %v488, %v445
        %vm491 = vcmask 916480
        %v492 = vsel %vm491, %v490, %v449
        %v493 = vsel %vm479, %v398, %v453
        %v494 = vsel %vm481, %v493, %v457
        %v495 = vsel %vm483, %v494, %v461
        %v496 = vsel %vm485, %v495, %v465
        %v497 = vsel %vm487, %v496, %v469
        %v498 = vsel %vm489, %v497, %v473
        %v499 = vsel %vm491, %v498, %v477
        %v500 = vrot.slane %v304, 4
        %v501 = vsel %vm311, 0.0, %v500
        %v503 = vunpack.c.l.s4 1983009808
        %v504 = vunpack.c.0.s8 %v503
        %v505 = vperm.slane %v304, %v504
        %v507 = vunpack.c.l.s4 1983009808
        %v508 = vunpack.c.0.s8 %v507
        %v509 = vperm.slane %v501, %v508
        %v510 = vrot.slane %v308, 4
        %v511 = vsel %vm311, 0.0, %v510
        %v513 = vunpack.c.l.s4 1983009808
        %v514 = vunpack.c.0.s8 %v513
        %v515 = vperm.slane %v308, %v514
        %v517 = vunpack.c.l.s4 1983009808
        %v518 = vunpack.c.0.s8 %v517
        %v519 = vperm.slane %v511, %v518
        %v520 = vrot.slane %v515, 4
        %v521 = vsel %vm311, %v520, %v505
        %v522 = vrot.slane %v505, 4
        %v523 = vsel %vm311, %v515, %v522
        %v525 = vunpack.c.l.s4 1934713408
        %v526 = vunpack.c.0.s8 %v525
        %v527 = vperm.slane %v521, %v526
        %v529 = vunpack.c.l.s4 1934713408
        %v530 = vunpack.c.0.s8 %v529
        %v531 = vperm.slane %v523, %v530
        %v532 = vrot.slane %v519, 4
        %v533 = vsel %vm311, %v532, %v509
        %v534 = vrot.slane %v509, 4
        %v535 = vsel %vm311, %v519, %v534
        %v537 = vunpack.c.l.s4 1934713408
        %v538 = vunpack.c.0.s8 %v537
        %v539 = vperm.slane %v533, %v538
        %v541 = vunpack.c.l.s4 1934713408
        %v542 = vunpack.c.0.s8 %v541
        %v543 = vperm.slane %v535, %v542
        %v544 = vrot.slane %v527, 4
        %v545 = vsel %vm311, 0.0, %v544
        %v546 = vrot.slane %v531, 4
        %v547 = vsel %vm311, 0.0, %v546
        %v548 = vrot.slane %v539, 4
        %v549 = vsel %vm311, 0.0, %v548
        %v550 = vrot.slane %v543, 4
        %v551 = vsel %vm311, 0.0, %v550
        %553 = vrot.lane.b32.xlu0 %v545, 16
        %v554 = vpop.permute.xlu0 %553
        %557 = vrot.lane.b32.xlu0 %v531, 32
        %v558 = vpop.permute.xlu0 %557
        %561 = vrot.lane.b32.xlu0 %v547, 48
        %v562 = vpop.permute.xlu0 %561
        %565 = vrot.lane.b32.xlu0 %v539, 64
        %v566 = vpop.permute.xlu0 %565
        %569 = vrot.lane.b32.xlu0 %v549, 80
        %v570 = vpop.permute.xlu0 %569
        %573 = vrot.lane.b32.xlu0 %v543, 96
        %v574 = vpop.permute.xlu0 %573
        %577 = vrot.lane.b32.xlu0 %v551, 112
        %v578 = vpop.permute.xlu0 %577
        %v580 = vsel %vm479, %v527, %v554
        %v581 = vsel %vm481, %v580, %v558
        %v582 = vsel %vm483, %v581, %v562
        %v583 = vsel %vm485, %v582, %v566
        %v584 = vsel %vm487, %v583, %v570
        %v585 = vsel %vm489, %v584, %v574
        %v586 = vsel %vm491, %v585, %v578
        %vm587 = vcmask 31744
        %v589 = vsel %vm587, %v287, 0
        %vm591 = vcmask 1043456
        %v593 = vsel %vm591, %v492, 0
        %v596 = vsel %vm591, %v499, 0
        %598 = vmatpush.msra.mxu0 0.0
        %599 = vmatpush.msra.mxu0 0.0
        %600 = vmatpush.msra.mxu0 0.0
        %601 = vmatpush.msra.mxu0 0.0
        %602 = vmatpush.msra.mxu0 0.0
        %603 = vmatpush.msra.mxu0 0.0
        %604 = vmatpush.msra.mxu0 0.0
        %605 = vmatpush.msra.mxu0 0.0
        %606 = vmatpush.msra.mxu0 0.0
        %607 = vmatpush.msra.mxu0 0.0
        %608 = vmatpush.msra.mxu0 0.0
        %609 = vmatpush.msra.mxu0 0.0
        %610 = vmatpush.msra.mxu0 0.0
        %611 = vmatpush.msra.mxu0 0.0
        %612 = vmatpush.msra.mxu0 0.0
        %613 = vmatpush.msra.mxu0 %v593
        %614 = vmatmul.f32.gmra.mxu0 %v589
        %v615 = vpop.f32.mrf.mxu0
        %v616 = vadd.f32 %v586, %v615
        %617 = vdwg.mxu0
        %618 = vmatpush.msra.mxu0 0.0
        %619 = vmatpush.msra.mxu0 0.0
        %620 = vmatpush.msra.mxu0 0.0
        %621 = vmatpush.msra.mxu0 0.0
        %622 = vmatpush.msra.mxu0 0.0
        %623 = vmatpush.msra.mxu0 0.0
        %624 = vmatpush.msra.mxu0 0.0
        %625 = vmatpush.msra.mxu0 0.0
        %626 = vmatpush.msra.mxu0 0.0
        %627 = vmatpush.msra.mxu0 0.0
        %628 = vmatpush.msra.mxu0 0.0
        %629 = vmatpush.msra.mxu0 0.0
        %630 = vmatpush.msra.mxu0 0.0
        %631 = vmatpush.msra.mxu0 0.0
        %632 = vmatpush.msra.mxu0 0.0
        %633 = vmatpush.msra.mxu0 %v596
        %634 = vmatmul.f32.gmra.mxu0 %v589
        %v635 = vpop.f32.mrf.mxu0
        %v636 = vadd.f32 %v586, %v635
        %637 = vdwg.mxu0
        %639 = vrot.lane.b32.xlu0 %v616, 112
        %v640 = vpop.permute.xlu0 %639
        %642 = vrot.lane.b32.xlu0 %v616, 96
        %v643 = vpop.permute.xlu0 %642
        %645 = vrot.lane.b32.xlu0 %v616, 80
        %v646 = vpop.permute.xlu0 %645
        %648 = vrot.lane.b32.xlu0 %v616, 64
        %v649 = vpop.permute.xlu0 %648
        %651 = vrot.lane.b32.xlu0 %v616, 48
        %v652 = vpop.permute.xlu0 %651
        %654 = vrot.lane.b32.xlu0 %v616, 32
        %v655 = vpop.permute.xlu0 %654
        %657 = vrot.lane.b32.xlu0 %v616, 16
        %v658 = vpop.permute.xlu0 %657
        %661 = vrot.lane.b32.xlu0 %v636, 112
        %v662 = vpop.permute.xlu0 %661
        %664 = vrot.lane.b32.xlu0 %v636, 96
        %v665 = vpop.permute.xlu0 %664
        %667 = vrot.lane.b32.xlu0 %v636, 80
        %v668 = vpop.permute.xlu0 %667
        %670 = vrot.lane.b32.xlu0 %v636, 64
        %v671 = vpop.permute.xlu0 %670
        %673 = vrot.lane.b32.xlu0 %v636, 48
        %v674 = vpop.permute.xlu0 %673
        %676 = vrot.lane.b32.xlu0 %v636, 32
        %v677 = vpop.permute.xlu0 %676
        %679 = vrot.lane.b32.xlu0 %v636, 16
        %v680 = vpop.permute.xlu0 %679
        %v682 = vrot.slane %v643, 4
        %v683 = vsel %vm311, %v682, %v616
        %v685 = vunpack.c.l.s4 1983009808
        %v686 = vunpack.c.0.s8 %v685
        %v687 = vperm.slane %v683, %v686
        %v688 = vrot.slane %v646, 4
        %v689 = vsel %vm311, %v688, %v640
        %v691 = vunpack.c.l.s4 1983009808
        %v692 = vunpack.c.0.s8 %v691
        %v693 = vperm.slane %v689, %v692
        %v694 = vrot.slane %v655, 4
        %v695 = vsel %vm311, %v694, %v649
        %v697 = vunpack.c.l.s4 1983009808
        %v698 = vunpack.c.0.s8 %v697
        %v699 = vperm.slane %v695, %v698
        %v700 = vrot.slane %v658, 4
        %v701 = vsel %vm311, %v700, %v652
        %v703 = vunpack.c.l.s4 1983009808
        %v704 = vunpack.c.0.s8 %v703
        %v705 = vperm.slane %v701, %v704
        %v706 = vrot.slane %v693, 4
        %v707 = vsel %vm311, %v706, %v687
        %v709 = vunpack.c.l.s4 1934713408
        %v710 = vunpack.c.0.s8 %v709
        %v711 = vperm.slane %v707, %v710
        %v712 = vrot.slane %v705, 4
        %v713 = vsel %vm311, %v712, %v699
        %v715 = vunpack.c.l.s4 1934713408
        %v716 = vunpack.c.0.s8 %v715
        %v717 = vperm.slane %v713, %v716
        %v718 = vrot.slane %v717, 4
        %v719 = vsel %vm311, %v718, %v711
        %v720 = vrot.slane %v711, 4
        %v721 = vsel %vm311, %v717, %v720
        %v722 = vrot.slane %v665, 4
        %v723 = vsel %vm311, %v722, %v636
        %v725 = vunpack.c.l.s4 1983009808
        %v726 = vunpack.c.0.s8 %v725
        %v727 = vperm.slane %v723, %v726
        %v728 = vrot.slane %v668, 4
        %v729 = vsel %vm311, %v728, %v662
        %v731 = vunpack.c.l.s4 1983009808
        %v732 = vunpack.c.0.s8 %v731
        %v733 = vperm.slane %v729, %v732
        %v734 = vrot.slane %v677, 4
        %v735 = vsel %vm311, %v734, %v671
        %v737 = vunpack.c.l.s4 1983009808
        %v738 = vunpack.c.0.s8 %v737
        %v739 = vperm.slane %v735, %v738
        %v740 = vrot.slane %v680, 4
        %v741 = vsel %vm311, %v740, %v674
        %v743 = vunpack.c.l.s4 1983009808
        %v744 = vunpack.c.0.s8 %v743
        %v745 = vperm.slane %v741, %v744
        %v746 = vrot.slane %v733, 4
        %v747 = vsel %vm311, %v746, %v727
        %v749 = vunpack.c.l.s4 1934713408
        %v750 = vunpack.c.0.s8 %v749
        %v751 = vperm.slane %v747, %v750
        %v752 = vrot.slane %v745, 4
        %v753 = vsel %vm311, %v752, %v739
        %v755 = vunpack.c.l.s4 1934713408
        %v756 = vunpack.c.0.s8 %v755
        %v757 = vperm.slane %v753, %v756
        %v758 = vrot.slane %v757, 4
        %v759 = vsel %vm311, %v758, %v751
        %v760 = vrot.slane %v751, 4
        %v761 = vsel %vm311, %v757, %v760
        %v762 = vsub.f32 0.0, %v719
        %v763 = vsub.f32 0.0, %v759
        %v764 = vsub.f32 0.0, %v721
        %v765 = vsub.f32 0.0, %v761
        %v766 = vmul.f32 %v762, 1.442695
        %v767 = vpow.pop %v766
        %v768 = vmul.f32 %v763, 1.442695
        %v769 = vpow.pop %v768
        %v770 = vmul.f32 %v764, 1.442695
        %v771 = vpow.pop %v770
        %v772 = vmul.f32 %v765, 1.442695
        %v773 = vpow.pop %v772
        %v774 = vadd.f32 %v767, 1.0
        %v775 = vadd.f32 %v769, 1.0
        %v776 = vadd.f32 %v771, 1.0
        %v777 = vadd.f32 %v773, 1.0
        %v778 = vrcp.pop %v774
        %v779 = vmul.f32 %v774, %v778
        %v780 = vsub.f32 1.0, %v779
        %v781 = vmul.f32 %v778, %v780
        %v782 = vadd.f32 %v778, %v781
        %vm783 = vweird.f32 %v774
        %vm784 = vweird.f32 %v778
        %vm785 = vmor %vm783, %vm784
        %v786 = vsel %vm785, %v778, %v782
        %v787 = vand.u32 2147483647, %v774
        %vm788 = vcmp.eq.f32.partialorder %v787, 8.507059e+37
        %v789 = vand.u32 %v774, 2147483648
        %v790 = vor.u32 1.1754944e-38, %v789
        %v791 = vsel %vm788, %v790, %v786
        %v792 = vmul.f32 1.0, %v791
        %v793 = vrcp.pop %v775
        %v794 = vmul.f32 %v775, %v793
        %v795 = vsub.f32 1.0, %v794
        %v796 = vmul.f32 %v793, %v795
        %v797 = vadd.f32 %v793, %v796
        %vm798 = vweird.f32 %v775
        %vm799 = vweird.f32 %v793
        %vm800 = vmor %vm798, %vm799
        %v801 = vsel %vm800, %v793, %v797
        %v802 = vand.u32 2147483647, %v775
        %vm803 = vcmp.eq.f32.partialorder %v802, 8.507059e+37
        %v804 = vand.u32 %v775, 2147483648
        %v805 = vor.u32 1.1754944e-38, %v804
        %v806 = vsel %vm803, %v805, %v801
        %v807 = vmul.f32 1.0, %v806
        %v808 = vrcp.pop %v776
        %v809 = vmul.f32 %v776, %v808
        %v810 = vsub.f32 1.0, %v809
        %v811 = vmul.f32 %v808, %v810
        %v812 = vadd.f32 %v808, %v811
        %vm813 = vweird.f32 %v776
        %vm814 = vweird.f32 %v808
        %vm815 = vmor %vm813, %vm814
        %v816 = vsel %vm815, %v808, %v812
        %v817 = vand.u32 2147483647, %v776
        %vm818 = vcmp.eq.f32.partialorder %v817, 8.507059e+37
        %v819 = vand.u32 %v776, 2147483648
        %v820 = vor.u32 1.1754944e-38, %v819
        %v821 = vsel %vm818, %v820, %v816
        %v822 = vmul.f32 1.0, %v821
        %v823 = vrcp.pop %v777
        %v824 = vmul.f32 %v777, %v823
        %v825 = vsub.f32 1.0, %v824
        %v826 = vmul.f32 %v823, %v825
        %v827 = vadd.f32 %v823, %v826
        %vm828 = vweird.f32 %v777
        %vm829 = vweird.f32 %v823
        %vm830 = vmor %vm828, %vm829
        %v831 = vsel %vm830, %v823, %v827
        %v832 = vand.u32 2147483647, %v777
        %vm833 = vcmp.eq.f32.partialorder %v832, 8.507059e+37
        %v834 = vand.u32 %v777, 2147483648
        %v835 = vor.u32 1.1754944e-38, %v834
        %v836 = vsel %vm833, %v835, %v831
        %v837 = vmul.f32 1.0, %v836
        %v838 = vmul.f32 %v719, %v792
        %v839 = vmul.f32 %v759, %v807
        %v840 = vmul.f32 %v721, %v822
        %v841 = vmul.f32 %v761, %v837
        %vm842 = vcmask 211968
        %843 = vst.msk [vmem:[#allocation2] sm:$0xff] %vm842, 0.0
        %844 = vst.msk [vmem:[#allocation2 + $0x8] sm:$0xff] %vm842, 0.0
        %845 = vst.msk [vmem:[#allocation2 + $0x10] sm:$0xff] %vm842, 0.0
        %vm846 = vcmask 205824
        %847 = vst.msk [vmem:[#allocation2 + $0x18] sm:$0x3] %vm846, 0.0
        %848 = vst.msk [vmem:[#allocation2 + $0x20] sm:$0xff] %vm842, 0.0
        %849 = vst.msk [vmem:[#allocation2 + $0x28] sm:$0xff] %vm842, 0.0
        %850 = vst.msk [vmem:[#allocation2 + $0x30] sm:$0xff] %vm842, 0.0
        %851 = vst.msk [vmem:[#allocation2 + $0x38] sm:$0x3] %vm846, 0.0
        %v852 = vld [vmem:[#allocation6] sm:$0x3]
        %857 = vrot.lane.b32.xlu0 %v838, 5
        %v858 = vpop.permute.xlu0 %857
        %859 = vrot.lane.b32.xlu0 %v839, 5
        %v860 = vpop.permute.xlu0 %859
        %861 = vrot.lane.b32.xlu0 %v840, 5
        %v862 = vpop.permute.xlu0 %861
        %863 = vrot.lane.b32.xlu0 %v841, 5
        %v864 = vpop.permute.xlu0 %863
        %vm869 = vcmask 171048
        %870 = vst.msk [vmem:[#allocation2 + $0x5] sm:$0xff] %vm869, %v858
        %871 = vst.msk [vmem:[#allocation2 + $0xd] sm:$0xff] %vm869, %v860
        %872 = vst.msk [vmem:[#allocation2 + $0x25] sm:$0xff] %vm869, %v862
        %873 = vst.msk [vmem:[#allocation2 + $0x2d] sm:$0xff] %vm869, %v864
        %v874 = vld [vmem:[#allocation2 + $0x4] sm:$0xff]
        %v875 = vld [vmem:[#allocation2 + $0xc] sm:$0xff]
        %v876 = vld [vmem:[#allocation2 + $0x24] sm:$0xff]
        %v877 = vld [vmem:[#allocation2 + $0x2c] sm:$0xff]
        %v878 = vld [vmem:[#allocation2 + $0x5] sm:$0xff]
        %v879 = vld [vmem:[#allocation2 + $0xd] sm:$0xff]
        %v880 = vld [vmem:[#allocation2 + $0x25] sm:$0xff]
        %v881 = vld [vmem:[#allocation2 + $0x2d] sm:$0xff]
        %v882 = vld [vmem:[#allocation2 + $0x6] sm:$0xff]
        %v883 = vld [vmem:[#allocation2 + $0xe] sm:$0xff]
        %v884 = vld [vmem:[#allocation2 + $0x26] sm:$0xff]
        %v885 = vld [vmem:[#allocation2 + $0x2e] sm:$0xff]
        %890 = vrot.lane.b32.xlu0 %v874, 127
        %v891 = vpop.permute.xlu0 %890
        %892 = vrot.lane.b32.xlu0 %v875, 127
        %v893 = vpop.permute.xlu0 %892
        %894 = vrot.lane.b32.xlu0 %v876, 127
        %v895 = vpop.permute.xlu0 %894
        %896 = vrot.lane.b32.xlu0 %v877, 127
        %v897 = vpop.permute.xlu0 %896
        %898 = vrot.lane.b32.xlu0 %v874, 126
        %v899 = vpop.permute.xlu0 %898
        %900 = vrot.lane.b32.xlu0 %v875, 126
        %v901 = vpop.permute.xlu0 %900
        %902 = vrot.lane.b32.xlu0 %v876, 126
        %v903 = vpop.permute.xlu0 %902
        %904 = vrot.lane.b32.xlu0 %v877, 126
        %v905 = vpop.permute.xlu0 %904
        %910 = vrot.lane.b32.xlu0 %v878, 127
        %v911 = vpop.permute.xlu0 %910
        %912 = vrot.lane.b32.xlu0 %v879, 127
        %v913 = vpop.permute.xlu0 %912
        %914 = vrot.lane.b32.xlu0 %v880, 127
        %v915 = vpop.permute.xlu0 %914
        %916 = vrot.lane.b32.xlu0 %v881, 127
        %v917 = vpop.permute.xlu0 %916
        %918 = vrot.lane.b32.xlu0 %v878, 126
        %v919 = vpop.permute.xlu0 %918
        %920 = vrot.lane.b32.xlu0 %v879, 126
        %v921 = vpop.permute.xlu0 %920
        %922 = vrot.lane.b32.xlu0 %v880, 126
        %v923 = vpop.permute.xlu0 %922
        %924 = vrot.lane.b32.xlu0 %v881, 126
        %v925 = vpop.permute.xlu0 %924
        %930 = vrot.lane.b32.xlu0 %v882, 127
        %v931 = vpop.permute.xlu0 %930
        %932 = vrot.lane.b32.xlu0 %v883, 127
        %v933 = vpop.permute.xlu0 %932
        %934 = vrot.lane.b32.xlu0 %v884, 127
        %v935 = vpop.permute.xlu0 %934
        %936 = vrot.lane.b32.xlu0 %v885, 127
        %v937 = vpop.permute.xlu0 %936
        %938 = vrot.lane.b32.xlu0 %v882, 126
        %v939 = vpop.permute.xlu0 %938
        %940 = vrot.lane.b32.xlu0 %v883, 126
        %v941 = vpop.permute.xlu0 %940
        %942 = vrot.lane.b32.xlu0 %v884, 126
        %v943 = vpop.permute.xlu0 %942
        %944 = vrot.lane.b32.xlu0 %v885, 126
        %v945 = vpop.permute.xlu0 %944
        %946 = vrot.lane.b32.xlu0 %v874, 124
        %v947 = vpop.permute.xlu0 %946
        %948 = vrot.lane.b32.xlu0 %v875, 124
        %v949 = vpop.permute.xlu0 %948
        %950 = vrot.lane.b32.xlu0 %v876, 124
        %v951 = vpop.permute.xlu0 %950
        %952 = vrot.lane.b32.xlu0 %v877, 124
        %v953 = vpop.permute.xlu0 %952
        %954 = vrot.lane.b32.xlu0 %v891, 124
        %v955 = vpop.permute.xlu0 %954
        %956 = vrot.lane.b32.xlu0 %v893, 124
        %v957 = vpop.permute.xlu0 %956
        %958 = vrot.lane.b32.xlu0 %v895, 124
        %v959 = vpop.permute.xlu0 %958
        %960 = vrot.lane.b32.xlu0 %v897, 124
        %v961 = vpop.permute.xlu0 %960
        %962 = vrot.lane.b32.xlu0 %v899, 124
        %v963 = vpop.permute.xlu0 %962
        %964 = vrot.lane.b32.xlu0 %v901, 124
        %v965 = vpop.permute.xlu0 %964
        %966 = vrot.lane.b32.xlu0 %v903, 124
        %v967 = vpop.permute.xlu0 %966
        %968 = vrot.lane.b32.xlu0 %v905, 124
        %v969 = vpop.permute.xlu0 %968
        %970 = vrot.lane.b32.xlu0 %v878, 124
        %v971 = vpop.permute.xlu0 %970
        %972 = vrot.lane.b32.xlu0 %v879, 124
        %v973 = vpop.permute.xlu0 %972
        %974 = vrot.lane.b32.xlu0 %v880, 124
        %v975 = vpop.permute.xlu0 %974
        %976 = vrot.lane.b32.xlu0 %v881, 124
        %v977 = vpop.permute.xlu0 %976
        %978 = vrot.lane.b32.xlu0 %v911, 124
        %v979 = vpop.permute.xlu0 %978
        %980 = vrot.lane.b32.xlu0 %v913, 124
        %v981 = vpop.permute.xlu0 %980
        %982 = vrot.lane.b32.xlu0 %v915, 124
        %v983 = vpop.permute.xlu0 %982
        %984 = vrot.lane.b32.xlu0 %v917, 124
        %v985 = vpop.permute.xlu0 %984
        %986 = vrot.lane.b32.xlu0 %v919, 124
        %v987 = vpop.permute.xlu0 %986
        %988 = vrot.lane.b32.xlu0 %v921, 124
        %v989 = vpop.permute.xlu0 %988
        %990 = vrot.lane.b32.xlu0 %v923, 124
        %v991 = vpop.permute.xlu0 %990
        %992 = vrot.lane.b32.xlu0 %v925, 124
        %v993 = vpop.permute.xlu0 %992
        %994 = vrot.lane.b32.xlu0 %v882, 124
        %v995 = vpop.permute.xlu0 %994
        %996 = vrot.lane.b32.xlu0 %v883, 124
        %v997 = vpop.permute.xlu0 %996
        %998 = vrot.lane.b32.xlu0 %v884, 124
        %v999 = vpop.permute.xlu0 %998
        %1000 = vrot.lane.b32.xlu0 %v885, 124
        %v1001 = vpop.permute.xlu0 %1000
        %1002 = vrot.lane.b32.xlu0 %v931, 124
        %v1003 = vpop.permute.xlu0 %1002
        %1004 = vrot.lane.b32.xlu0 %v933, 124
        %v1005 = vpop.permute.xlu0 %1004
        %1006 = vrot.lane.b32.xlu0 %v935, 124
        %v1007 = vpop.permute.xlu0 %1006
        %1008 = vrot.lane.b32.xlu0 %v937, 124
        %v1009 = vpop.permute.xlu0 %1008
        %1010 = vrot.lane.b32.xlu0 %v939, 124
        %v1011 = vpop.permute.xlu0 %1010
        %1012 = vrot.lane.b32.xlu0 %v941, 124
        %v1013 = vpop.permute.xlu0 %1012
        %1014 = vrot.lane.b32.xlu0 %v943, 124
        %v1015 = vpop.permute.xlu0 %1014
        %1016 = vrot.lane.b32.xlu0 %v945, 124
        %v1017 = vpop.permute.xlu0 %1016
        %v1054 = vrot.slane %v955, 4
        %v1055 = vsel %vm311, %v1054, %v947
        %v1056 = vrot.slane %v947, 4
        %v1057 = vsel %vm311, %v955, %v1056
        %v1059 = vunpack.c.l.s4 1983009808
        %v1060 = vunpack.c.0.s8 %v1059
        %v1061 = vperm.slane %v1055, %v1060
        %v1063 = vunpack.c.l.s4 1983009808
        %v1064 = vunpack.c.0.s8 %v1063
        %v1065 = vperm.slane %v1057, %v1064
        %v1066 = vrot.slane %v959, 4
        %v1067 = vsel %vm311, %v1066, %v951
        %v1068 = vrot.slane %v951, 4
        %v1069 = vsel %vm311, %v959, %v1068
        %v1071 = vunpack.c.l.s4 1983009808
        %v1072 = vunpack.c.0.s8 %v1071
        %v1073 = vperm.slane %v1067, %v1072
        %v1075 = vunpack.c.l.s4 1983009808
        %v1076 = vunpack.c.0.s8 %v1075
        %v1077 = vperm.slane %v1069, %v1076
        %v1078 = vrot.slane %v971, 4
        %v1079 = vsel %vm311, %v1078, %v963
        %v1080 = vrot.slane %v963, 4
        %v1081 = vsel %vm311, %v971, %v1080
        %v1083 = vunpack.c.l.s4 1983009808
        %v1084 = vunpack.c.0.s8 %v1083
        %v1085 = vperm.slane %v1079, %v1084
        %v1087 = vunpack.c.l.s4 1983009808
        %v1088 = vunpack.c.0.s8 %v1087
        %v1089 = vperm.slane %v1081, %v1088
        %v1090 = vrot.slane %v975, 4
        %v1091 = vsel %vm311, %v1090, %v967
        %v1092 = vrot.slane %v967, 4
        %v1093 = vsel %vm311, %v975, %v1092
        %v1095 = vunpack.c.l.s4 1983009808
        %v1096 = vunpack.c.0.s8 %v1095
        %v1097 = vperm.slane %v1091, %v1096
        %v1099 = vunpack.c.l.s4 1983009808
        %v1100 = vunpack.c.0.s8 %v1099
        %v1101 = vperm.slane %v1093, %v1100
        %v1102 = vrot.slane %v1073, 4
        %v1103 = vsel %vm311, %v1102, %v1061
        %v1104 = vrot.slane %v1061, 4
        %v1105 = vsel %vm311, %v1073, %v1104
        %v1107 = vunpack.c.l.s4 1934713408
        %v1108 = vunpack.c.0.s8 %v1107
        %v1109 = vperm.slane %v1103, %v1108
        %v1111 = vunpack.c.l.s4 1934713408
        %v1112 = vunpack.c.0.s8 %v1111
        %v1113 = vperm.slane %v1105, %v1112
        %v1114 = vrot.slane %v1077, 4
        %v1115 = vsel %vm311, %v1114, %v1065
        %v1116 = vrot.slane %v1065, 4
        %v1117 = vsel %vm311, %v1077, %v1116
        %v1119 = vunpack.c.l.s4 1934713408
        %v1120 = vunpack.c.0.s8 %v1119
        %v1121 = vperm.slane %v1115, %v1120
        %v1123 = vunpack.c.l.s4 1934713408
        %v1124 = vunpack.c.0.s8 %v1123
        %v1125 = vperm.slane %v1117, %v1124
        %v1126 = vrot.slane %v1097, 4
        %v1127 = vsel %vm311, %v1126, %v1085
        %v1128 = vrot.slane %v1085, 4
        %v1129 = vsel %vm311, %v1097, %v1128
        %v1131 = vunpack.c.l.s4 1934713408
        %v1132 = vunpack.c.0.s8 %v1131
        %v1133 = vperm.slane %v1127, %v1132
        %v1135 = vunpack.c.l.s4 1934713408
        %v1136 = vunpack.c.0.s8 %v1135
        %v1137 = vperm.slane %v1129, %v1136
        %v1138 = vrot.slane %v1101, 4
        %v1139 = vsel %vm311, %v1138, %v1089
        %v1140 = vrot.slane %v1089, 4
        %v1141 = vsel %vm311, %v1101, %v1140
        %v1143 = vunpack.c.l.s4 1934713408
        %v1144 = vunpack.c.0.s8 %v1143
        %v1145 = vperm.slane %v1139, %v1144
        %v1147 = vunpack.c.l.s4 1934713408
        %v1148 = vunpack.c.0.s8 %v1147
        %v1149 = vperm.slane %v1141, %v1148
        %v1150 = vrot.slane %v1133, 4
        %v1151 = vsel %vm311, %v1150, %v1109
        %v1152 = vrot.slane %v1109, 4
        %v1153 = vsel %vm311, %v1133, %v1152
        %v1154 = vrot.slane %v1137, 4
        %v1155 = vsel %vm311, %v1154, %v1113
        %v1156 = vrot.slane %v1113, 4
        %v1157 = vsel %vm311, %v1137, %v1156
        %v1158 = vrot.slane %v1145, 4
        %v1159 = vsel %vm311, %v1158, %v1121
        %v1160 = vrot.slane %v1121, 4
        %v1161 = vsel %vm311, %v1145, %v1160
        %v1162 = vrot.slane %v1149, 4
        %v1163 = vsel %vm311, %v1162, %v1125
        %v1164 = vrot.slane %v1125, 4
        %v1165 = vsel %vm311, %v1149, %v1164
        %v1166 = vrot.slane %v987, 4
        %v1167 = vsel %vm311, %v1166, %v979
        %v1168 = vrot.slane %v979, 4
        %v1169 = vsel %vm311, %v987, %v1168
        %v1171 = vunpack.c.l.s4 1983009808
        %v1172 = vunpack.c.0.s8 %v1171
        %v1173 = vperm.slane %v1167, %v1172
        %v1175 = vunpack.c.l.s4 1983009808
        %v1176 = vunpack.c.0.s8 %v1175
        %v1177 = vperm.slane %v1169, %v1176
        %v1178 = vrot.slane %v991, 4
        %v1179 = vsel %vm311, %v1178, %v983
        %v1180 = vrot.slane %v983, 4
        %v1181 = vsel %vm311, %v991, %v1180
        %v1183 = vunpack.c.l.s4 1983009808
        %v1184 = vunpack.c.0.s8 %v1183
        %v1185 = vperm.slane %v1179, %v1184
        %v1187 = vunpack.c.l.s4 1983009808
        %v1188 = vunpack.c.0.s8 %v1187
        %v1189 = vperm.slane %v1181, %v1188
        %v1190 = vrot.slane %v1003, 4
        %v1191 = vsel %vm311, %v1190, %v995
        %v1192 = vrot.slane %v995, 4
        %v1193 = vsel %vm311, %v1003, %v1192
        %v1195 = vunpack.c.l.s4 1983009808
        %v1196 = vunpack.c.0.s8 %v1195
        %v1197 = vperm.slane %v1191, %v1196
        %v1199 = vunpack.c.l.s4 1983009808
        %v1200 = vunpack.c.0.s8 %v1199
        %v1201 = vperm.slane %v1193, %v1200
        %v1202 = vrot.slane %v1007, 4
        %v1203 = vsel %vm311, %v1202, %v999
        %v1204 = vrot.slane %v999, 4
        %v1205 = vsel %vm311, %v1007, %v1204
        %v1207 = vunpack.c.l.s4 1983009808
        %v1208 = vunpack.c.0.s8 %v1207
        %v1209 = vperm.slane %v1203, %v1208
        %v1211 = vunpack.c.l.s4 1983009808
        %v1212 = vunpack.c.0.s8 %v1211
        %v1213 = vperm.slane %v1205, %v1212
        %v1214 = vrot.slane %v1185, 4
        %v1215 = vsel %vm311, %v1214, %v1173
        %v1216 = vrot.slane %v1173, 4
        %v1217 = vsel %vm311, %v1185, %v1216
        %v1219 = vunpack.c.l.s4 1934713408
        %v1220 = vunpack.c.0.s8 %v1219
        %v1221 = vperm.slane %v1215, %v1220
        %v1223 = vunpack.c.l.s4 1934713408
        %v1224 = vunpack.c.0.s8 %v1223
        %v1225 = vperm.slane %v1217, %v1224
        %v1226 = vrot.slane %v1189, 4
        %v1227 = vsel %vm311, %v1226, %v1177
        %v1228 = vrot.slane %v1177, 4
        %v1229 = vsel %vm311, %v1189, %v1228
        %v1231 = vunpack.c.l.s4 1934713408
        %v1232 = vunpack.c.0.s8 %v1231
        %v1233 = vperm.slane %v1227, %v1232
        %v1235 = vunpack.c.l.s4 1934713408
        %v1236 = vunpack.c.0.s8 %v1235
        %v1237 = vperm.slane %v1229, %v1236
        %v1238 = vrot.slane %v1209, 4
        %v1239 = vsel %vm311, %v1238, %v1197
        %v1240 = vrot.slane %v1197, 4
        %v1241 = vsel %vm311, %v1209, %v1240
        %v1243 = vunpack.c.l.s4 1934713408
        %v1244 = vunpack.c.0.s8 %v1243
        %v1245 = vperm.slane %v1239, %v1244
        %v1247 = vunpack.c.l.s4 1934713408
        %v1248 = vunpack.c.0.s8 %v1247
        %v1249 = vperm.slane %v1241, %v1248
        %v1250 = vrot.slane %v1213, 4
        %v1251 = vsel %vm311, %v1250, %v1201
        %v1252 = vrot.slane %v1201, 4
        %v1253 = vsel %vm311, %v1213, %v1252
        %v1255 = vunpack.c.l.s4 1934713408
        %v1256 = vunpack.c.0.s8 %v1255
        %v1257 = vperm.slane %v1251, %v1256
        %v1259 = vunpack.c.l.s4 1934713408
        %v1260 = vunpack.c.0.s8 %v1259
        %v1261 = vperm.slane %v1253, %v1260
        %v1262 = vrot.slane %v1245, 4
        %v1263 = vsel %vm311, %v1262, %v1221
        %v1264 = vrot.slane %v1221, 4
        %v1265 = vsel %vm311, %v1245, %v1264
        %v1266 = vrot.slane %v1249, 4
        %v1267 = vsel %vm311, %v1266, %v1225
        %v1268 = vrot.slane %v1225, 4
        %v1269 = vsel %vm311, %v1249, %v1268
        %v1270 = vrot.slane %v1257, 4
        %v1271 = vsel %vm311, %v1270, %v1233
        %v1272 = vrot.slane %v1233, 4
        %v1273 = vsel %vm311, %v1257, %v1272
        %v1274 = vrot.slane %v1261, 4
        %v1275 = vsel %vm311, %v1274, %v1237
        %v1276 = vrot.slane %v1237, 4
        %v1277 = vsel %vm311, %v1261, %v1276
        %v1278 = vrot.slane %v1011, 4
        %v1279 = vsel %vm311, 0.0, %v1278
        %v1281 = vunpack.c.l.s4 1983009808
        %v1282 = vunpack.c.0.s8 %v1281
        %v1283 = vperm.slane %v1011, %v1282
        %v1285 = vunpack.c.l.s4 1983009808
        %v1286 = vunpack.c.0.s8 %v1285
        %v1287 = vperm.slane %v1279, %v1286
        %v1288 = vrot.slane %v1015, 4
        %v1289 = vsel %vm311, 0.0, %v1288
        %v1291 = vunpack.c.l.s4 1983009808
        %v1292 = vunpack.c.0.s8 %v1291
        %v1293 = vperm.slane %v1015, %v1292
        %v1295 = vunpack.c.l.s4 1983009808
        %v1296 = vunpack.c.0.s8 %v1295
        %v1297 = vperm.slane %v1289, %v1296
        %v1298 = vrot.slane %v1293, 4
        %v1299 = vsel %vm311, %v1298, %v1283
        %v1300 = vrot.slane %v1283, 4
        %v1301 = vsel %vm311, %v1293, %v1300
        %v1303 = vunpack.c.l.s4 1934713408
        %v1304 = vunpack.c.0.s8 %v1303
        %v1305 = vperm.slane %v1299, %v1304
        %v1307 = vunpack.c.l.s4 1934713408
        %v1308 = vunpack.c.0.s8 %v1307
        %v1309 = vperm.slane %v1301, %v1308
        %v1310 = vrot.slane %v1297, 4
        %v1311 = vsel %vm311, %v1310, %v1287
        %v1312 = vrot.slane %v1287, 4
        %v1313 = vsel %vm311, %v1297, %v1312
        %v1315 = vunpack.c.l.s4 1934713408
        %v1316 = vunpack.c.0.s8 %v1315
        %v1317 = vperm.slane %v1311, %v1316
        %v1319 = vunpack.c.l.s4 1934713408
        %v1320 = vunpack.c.0.s8 %v1319
        %v1321 = vperm.slane %v1313, %v1320
        %v1322 = vrot.slane %v1305, 4
        %v1323 = vsel %vm311, 0.0, %v1322
        %v1324 = vrot.slane %v1309, 4
        %v1325 = vsel %vm311, 0.0, %v1324
        %v1326 = vrot.slane %v1317, 4
        %v1327 = vsel %vm311, 0.0, %v1326
        %v1328 = vrot.slane %v1321, 4
        %v1329 = vsel %vm311, 0.0, %v1328
        %v1330 = vrot.slane %v957, 4
        %v1331 = vsel %vm311, %v1330, %v949
        %v1332 = vrot.slane %v949, 4
        %v1333 = vsel %vm311, %v957, %v1332
        %v1335 = vunpack.c.l.s4 1983009808
        %v1336 = vunpack.c.0.s8 %v1335
        %v1337 = vperm.slane %v1331, %v1336
        %v1339 = vunpack.c.l.s4 1983009808
        %v1340 = vunpack.c.0.s8 %v1339
        %v1341 = vperm.slane %v1333, %v1340
        %v1342 = vrot.slane %v961, 4
        %v1343 = vsel %vm311, %v1342, %v953
        %v1344 = vrot.slane %v953, 4
        %v1345 = vsel %vm311, %v961, %v1344
        %v1347 = vunpack.c.l.s4 1983009808
        %v1348 = vunpack.c.0.s8 %v1347
        %v1349 = vperm.slane %v1343, %v1348
        %v1351 = vunpack.c.l.s4 1983009808
        %v1352 = vunpack.c.0.s8 %v1351
        %v1353 = vperm.slane %v1345, %v1352
        %v1354 = vrot.slane %v973, 4
        %v1355 = vsel %vm311, %v1354, %v965
        %v1356 = vrot.slane %v965, 4
        %v1357 = vsel %vm311, %v973, %v1356
        %v1359 = vunpack.c.l.s4 1983009808
        %v1360 = vunpack.c.0.s8 %v1359
        %v1361 = vperm.slane %v1355, %v1360
        %v1363 = vunpack.c.l.s4 1983009808
        %v1364 = vunpack.c.0.s8 %v1363
        %v1365 = vperm.slane %v1357, %v1364
        %v1366 = vrot.slane %v977, 4
        %v1367 = vsel %vm311, %v1366, %v969
        %v1368 = vrot.slane %v969, 4
        %v1369 = vsel %vm311, %v977, %v1368
        %v1371 = vunpack.c.l.s4 1983009808
        %v1372 = vunpack.c.0.s8 %v1371
        %v1373 = vperm.slane %v1367, %v1372
        %v1375 = vunpack.c.l.s4 1983009808
        %v1376 = vunpack.c.0.s8 %v1375
        %v1377 = vperm.slane %v1369, %v1376
        %v1378 = vrot.slane %v1349, 4
        %v1379 = vsel %vm311, %v1378, %v1337
        %v1380 = vrot.slane %v1337, 4
        %v1381 = vsel %vm311, %v1349, %v1380
        %v1383 = vunpack.c.l.s4 1934713408
        %v1384 = vunpack.c.0.s8 %v1383
        %v1385 = vperm.slane %v1379, %v1384
        %v1387 = vunpack.c.l.s4 1934713408
        %v1388 = vunpack.c.0.s8 %v1387
        %v1389 = vperm.slane %v1381, %v1388
        %v1390 = vrot.slane %v1353, 4
        %v1391 = vsel %vm311, %v1390, %v1341
        %v1392 = vrot.slane %v1341, 4
        %v1393 = vsel %vm311, %v1353, %v1392
        %v1395 = vunpack.c.l.s4 1934713408
        %v1396 = vunpack.c.0.s8 %v1395
        %v1397 = vperm.slane %v1391, %v1396
        %v1399 = vunpack.c.l.s4 1934713408
        %v1400 = vunpack.c.0.s8 %v1399
        %v1401 = vperm.slane %v1393, %v1400
        %v1402 = vrot.slane %v1373, 4
        %v1403 = vsel %vm311, %v1402, %v1361
        %v1404 = vrot.slane %v1361, 4
        %v1405 = vsel %vm311, %v1373, %v1404
        %v1407 = vunpack.c.l.s4 1934713408
        %v1408 = vunpack.c.0.s8 %v1407
        %v1409 = vperm.slane %v1403, %v1408
        %v1411 = vunpack.c.l.s4 1934713408
        %v1412 = vunpack.c.0.s8 %v1411
        %v1413 = vperm.slane %v1405, %v1412
        %v1414 = vrot.slane %v1377, 4
        %v1415 = vsel %vm311, %v1414, %v1365
        %v1416 = vrot.slane %v1365, 4
        %v1417 = vsel %vm311, %v1377, %v1416
        %v1419 = vunpack.c.l.s4 1934713408
        %v1420 = vunpack.c.0.s8 %v1419
        %v1421 = vperm.slane %v1415, %v1420
        %v1423 = vunpack.c.l.s4 1934713408
        %v1424 = vunpack.c.0.s8 %v1423
        %v1425 = vperm.slane %v1417, %v1424
        %v1426 = vrot.slane %v1409, 4
        %v1427 = vsel %vm311, %v1426, %v1385
        %v1428 = vrot.slane %v1385, 4
        %v1429 = vsel %vm311, %v1409, %v1428
        %v1430 = vrot.slane %v1413, 4
        %v1431 = vsel %vm311, %v1430, %v1389
        %v1432 = vrot.slane %v1389, 4
        %v1433 = vsel %vm311, %v1413, %v1432
        %v1434 = vrot.slane %v1421, 4
        %v1435 = vsel %vm311, %v1434, %v1397
        %v1436 = vrot.slane %v1397, 4
        %v1437 = vsel %vm311, %v1421, %v1436
        %v1438 = vrot.slane %v1425, 4
        %v1439 = vsel %vm311, %v1438, %v1401
        %v1440 = vrot.slane %v1401, 4
        %v1441 = vsel %vm311, %v1425, %v1440
        %v1442 = vrot.slane %v989, 4
        %v1443 = vsel %vm311, %v1442, %v981
        %v1444 = vrot.slane %v981, 4
        %v1445 = vsel %vm311, %v989, %v1444
        %v1447 = vunpack.c.l.s4 1983009808
        %v1448 = vunpack.c.0.s8 %v1447
        %v1449 = vperm.slane %v1443, %v1448
        %v1451 = vunpack.c.l.s4 1983009808
        %v1452 = vunpack.c.0.s8 %v1451
        %v1453 = vperm.slane %v1445, %v1452
        %v1454 = vrot.slane %v993, 4
        %v1455 = vsel %vm311, %v1454, %v985
        %v1456 = vrot.slane %v985, 4
        %v1457 = vsel %vm311, %v993, %v1456
        %v1459 = vunpack.c.l.s4 1983009808
        %v1460 = vunpack.c.0.s8 %v1459
        %v1461 = vperm.slane %v1455, %v1460
        %v1463 = vunpack.c.l.s4 1983009808
        %v1464 = vunpack.c.0.s8 %v1463
        %v1465 = vperm.slane %v1457, %v1464
        %v1466 = vrot.slane %v1005, 4
        %v1467 = vsel %vm311, %v1466, %v997
        %v1468 = vrot.slane %v997, 4
        %v1469 = vsel %vm311, %v1005, %v1468
        %v1471 = vunpack.c.l.s4 1983009808
        %v1472 = vunpack.c.0.s8 %v1471
        %v1473 = vperm.slane %v1467, %v1472
        %v1475 = vunpack.c.l.s4 1983009808
        %v1476 = vunpack.c.0.s8 %v1475
        %v1477 = vperm.slane %v1469, %v1476
        %v1478 = vrot.slane %v1009, 4
        %v1479 = vsel %vm311, %v1478, %v1001
        %v1480 = vrot.slane %v1001, 4
        %v1481 = vsel %vm311, %v1009, %v1480
        %v1483 = vunpack.c.l.s4 1983009808
        %v1484 = vunpack.c.0.s8 %v1483
        %v1485 = vperm.slane %v1479, %v1484
        %v1487 = vunpack.c.l.s4 1983009808
        %v1488 = vunpack.c.0.s8 %v1487
        %v1489 = vperm.slane %v1481, %v1488
        %v1490 = vrot.slane %v1461, 4
        %v1491 = vsel %vm311, %v1490, %v1449
        %v1492 = vrot.slane %v1449, 4
        %v1493 = vsel %vm311, %v1461, %v1492
        %v1495 = vunpack.c.l.s4 1934713408
        %v1496 = vunpack.c.0.s8 %v1495
        %v1497 = vperm.slane %v1491, %v1496
        %v1499 = vunpack.c.l.s4 1934713408
        %v1500 = vunpack.c.0.s8 %v1499
        %v1501 = vperm.slane %v1493, %v1500
        %v1502 = vrot.slane %v1465, 4
        %v1503 = vsel %vm311, %v1502, %v1453
        %v1504 = vrot.slane %v1453, 4
        %v1505 = vsel %vm311, %v1465, %v1504
        %v1507 = vunpack.c.l.s4 1934713408
        %v1508 = vunpack.c.0.s8 %v1507
        %v1509 = vperm.slane %v1503, %v1508
        %v1511 = vunpack.c.l.s4 1934713408
        %v1512 = vunpack.c.0.s8 %v1511
        %v1513 = vperm.slane %v1505, %v1512
        %v1514 = vrot.slane %v1485, 4
        %v1515 = vsel %vm311, %v1514, %v1473
        %v1516 = vrot.slane %v1473, 4
        %v1517 = vsel %vm311, %v1485, %v1516
        %v1519 = vunpack.c.l.s4 1934713408
        %v1520 = vunpack.c.0.s8 %v1519
        %v1521 = vperm.slane %v1515, %v1520
        %v1523 = vunpack.c.l.s4 1934713408
        %v1524 = vunpack.c.0.s8 %v1523
        %v1525 = vperm.slane %v1517, %v1524
        %v1526 = vrot.slane %v1489, 4
        %v1527 = vsel %vm311, %v1526, %v1477
        %v1528 = vrot.slane %v1477, 4
        %v1529 = vsel %vm311, %v1489, %v1528
        %v1531 = vunpack.c.l.s4 1934713408
        %v1532 = vunpack.c.0.s8 %v1531
        %v1533 = vperm.slane %v1527, %v1532
        %v1535 = vunpack.c.l.s4 1934713408
        %v1536 = vunpack.c.0.s8 %v1535
        %v1537 = vperm.slane %v1529, %v1536
        %v1538 = vrot.slane %v1521, 4
        %v1539 = vsel %vm311, %v1538, %v1497
        %v1540 = vrot.slane %v1497, 4
        %v1541 = vsel %vm311, %v1521, %v1540
        %v1542 = vrot.slane %v1525, 4
        %v1543 = vsel %vm311, %v1542, %v1501
        %v1544 = vrot.slane %v1501, 4
        %v1545 = vsel %vm311, %v1525, %v1544
        %v1546 = vrot.slane %v1533, 4
        %v1547 = vsel %vm311, %v1546, %v1509
        %v1548 = vrot.slane %v1509, 4
        %v1549 = vsel %vm311, %v1533, %v1548
        %v1550 = vrot.slane %v1537, 4
        %v1551 = vsel %vm311, %v1550, %v1513
        %v1552 = vrot.slane %v1513, 4
        %v1553 = vsel %vm311, %v1537, %v1552
        %v1554 = vrot.slane %v1013, 4
        %v1555 = vsel %vm311, 0.0, %v1554
        %v1557 = vunpack.c.l.s4 1983009808
        %v1558 = vunpack.c.0.s8 %v1557
        %v1559 = vperm.slane %v1013, %v1558
        %v1561 = vunpack.c.l.s4 1983009808
        %v1562 = vunpack.c.0.s8 %v1561
        %v1563 = vperm.slane %v1555, %v1562
        %v1564 = vrot.slane %v1017, 4
        %v1565 = vsel %vm311, 0.0, %v1564
        %v1567 = vunpack.c.l.s4 1983009808
        %v1568 = vunpack.c.0.s8 %v1567
        %v1569 = vperm.slane %v1017, %v1568
        %v1571 = vunpack.c.l.s4 1983009808
        %v1572 = vunpack.c.0.s8 %v1571
        %v1573 = vperm.slane %v1565, %v1572
        %v1574 = vrot.slane %v1569, 4
        %v1575 = vsel %vm311, %v1574, %v1559
        %v1576 = vrot.slane %v1559, 4
        %v1577 = vsel %vm311, %v1569, %v1576
        %v1579 = vunpack.c.l.s4 1934713408
        %v1580 = vunpack.c.0.s8 %v1579
        %v1581 = vperm.slane %v1575, %v1580
        %v1583 = vunpack.c.l.s4 1934713408
        %v1584 = vunpack.c.0.s8 %v1583
        %v1585 = vperm.slane %v1577, %v1584
        %v1586 = vrot.slane %v1573, 4
        %v1587 = vsel %vm311, %v1586, %v1563
        %v1588 = vrot.slane %v1563, 4
        %v1589 = vsel %vm311, %v1573, %v1588
        %v1591 = vunpack.c.l.s4 1934713408
        %v1592 = vunpack.c.0.s8 %v1591
        %v1593 = vperm.slane %v1587, %v1592
        %v1595 = vunpack.c.l.s4 1934713408
        %v1596 = vunpack.c.0.s8 %v1595
        %v1597 = vperm.slane %v1589, %v1596
        %v1598 = vrot.slane %v1581, 4
        %v1599 = vsel %vm311, 0.0, %v1598
        %v1600 = vrot.slane %v1585, 4
        %v1601 = vsel %vm311, 0.0, %v1600
        %v1602 = vrot.slane %v1593, 4
        %v1603 = vsel %vm311, 0.0, %v1602
        %v1604 = vrot.slane %v1597, 4
        %v1605 = vsel %vm311, 0.0, %v1604
        %1609 = vrot.lane.b32.xlu0 %v1153, 16
        %v1610 = vpop.permute.xlu0 %1609
        %1611 = vrot.lane.b32.xlu0 %v1265, 16
        %v1612 = vpop.permute.xlu0 %1611
        %1613 = vrot.lane.b32.xlu0 %v1323, 16
        %v1614 = vpop.permute.xlu0 %1613
        %1621 = vrot.lane.b32.xlu0 %v1155, 32
        %v1622 = vpop.permute.xlu0 %1621
        %1623 = vrot.lane.b32.xlu0 %v1267, 32
        %v1624 = vpop.permute.xlu0 %1623
        %1625 = vrot.lane.b32.xlu0 %v1309, 32
        %v1626 = vpop.permute.xlu0 %1625
        %1633 = vrot.lane.b32.xlu0 %v1157, 48
        %v1634 = vpop.permute.xlu0 %1633
        %1635 = vrot.lane.b32.xlu0 %v1269, 48
        %v1636 = vpop.permute.xlu0 %1635
        %1637 = vrot.lane.b32.xlu0 %v1325, 48
        %v1638 = vpop.permute.xlu0 %1637
        %1645 = vrot.lane.b32.xlu0 %v1159, 64
        %v1646 = vpop.permute.xlu0 %1645
        %1647 = vrot.lane.b32.xlu0 %v1271, 64
        %v1648 = vpop.permute.xlu0 %1647
        %1649 = vrot.lane.b32.xlu0 %v1317, 64
        %v1650 = vpop.permute.xlu0 %1649
        %1657 = vrot.lane.b32.xlu0 %v1161, 80
        %v1658 = vpop.permute.xlu0 %1657
        %1659 = vrot.lane.b32.xlu0 %v1273, 80
        %v1660 = vpop.permute.xlu0 %1659
        %1661 = vrot.lane.b32.xlu0 %v1327, 80
        %v1662 = vpop.permute.xlu0 %1661
        %1669 = vrot.lane.b32.xlu0 %v1163, 96
        %v1670 = vpop.permute.xlu0 %1669
        %1671 = vrot.lane.b32.xlu0 %v1275, 96
        %v1672 = vpop.permute.xlu0 %1671
        %1673 = vrot.lane.b32.xlu0 %v1321, 96
        %v1674 = vpop.permute.xlu0 %1673
        %1681 = vrot.lane.b32.xlu0 %v1165, 112
        %v1682 = vpop.permute.xlu0 %1681
        %1683 = vrot.lane.b32.xlu0 %v1277, 112
        %v1684 = vpop.permute.xlu0 %1683
        %1685 = vrot.lane.b32.xlu0 %v1329, 112
        %v1686 = vpop.permute.xlu0 %1685
        %1693 = vrot.lane.b32.xlu0 %v1429, 16
        %v1694 = vpop.permute.xlu0 %1693
        %1695 = vrot.lane.b32.xlu0 %v1541, 16
        %v1696 = vpop.permute.xlu0 %1695
        %1697 = vrot.lane.b32.xlu0 %v1599, 16
        %v1698 = vpop.permute.xlu0 %1697
        %1705 = vrot.lane.b32.xlu0 %v1431, 32
        %v1706 = vpop.permute.xlu0 %1705
        %1707 = vrot.lane.b32.xlu0 %v1543, 32
        %v1708 = vpop.permute.xlu0 %1707
        %1709 = vrot.lane.b32.xlu0 %v1585, 32
        %v1710 = vpop.permute.xlu0 %1709
        %1717 = vrot.lane.b32.xlu0 %v1433, 48
        %v1718 = vpop.permute.xlu0 %1717
        %1719 = vrot.lane.b32.xlu0 %v1545, 48
        %v1720 = vpop.permute.xlu0 %1719
        %1721 = vrot.lane.b32.xlu0 %v1601, 48
        %v1722 = vpop.permute.xlu0 %1721
        %1729 = vrot.lane.b32.xlu0 %v1435, 64
        %v1730 = vpop.permute.xlu0 %1729
        %1731 = vrot.lane.b32.xlu0 %v1547, 64
        %v1732 = vpop.permute.xlu0 %1731
        %1733 = vrot.lane.b32.xlu0 %v1593, 64
        %v1734 = vpop.permute.xlu0 %1733
        %1741 = vrot.lane.b32.xlu0 %v1437, 80
        %v1742 = vpop.permute.xlu0 %1741
        %1743 = vrot.lane.b32.xlu0 %v1549, 80
        %v1744 = vpop.permute.xlu0 %1743
        %1745 = vrot.lane.b32.xlu0 %v1603, 80
        %v1746 = vpop.permute.xlu0 %1745
        %1753 = vrot.lane.b32.xlu0 %v1439, 96
        %v1754 = vpop.permute.xlu0 %1753
        %1755 = vrot.lane.b32.xlu0 %v1551, 96
        %v1756 = vpop.permute.xlu0 %1755
        %1757 = vrot.lane.b32.xlu0 %v1597, 96
        %v1758 = vpop.permute.xlu0 %1757
        %1765 = vrot.lane.b32.xlu0 %v1441, 112
        %v1766 = vpop.permute.xlu0 %1765
        %1767 = vrot.lane.b32.xlu0 %v1553, 112
        %v1768 = vpop.permute.xlu0 %1767
        %1769 = vrot.lane.b32.xlu0 %v1605, 112
        %v1770 = vpop.permute.xlu0 %1769
        %v1774 = vsel %vm479, %v1151, %v1610
        %v1775 = vsel %vm479, %v1263, %v1612
        %v1776 = vsel %vm479, %v1305, %v1614
        %v1777 = vsel %vm481, %v1774, %v1622
        %v1778 = vsel %vm481, %v1775, %v1624
        %v1779 = vsel %vm481, %v1776, %v1626
        %v1780 = vsel %vm483, %v1777, %v1634
        %v1781 = vsel %vm483, %v1778, %v1636
        %v1782 = vsel %vm483, %v1779, %v1638
        %v1783 = vsel %vm485, %v1780, %v1646
        %v1784 = vsel %vm485, %v1781, %v1648
        %v1785 = vsel %vm485, %v1782, %v1650
        %v1786 = vsel %vm487, %v1783, %v1658
        %v1787 = vsel %vm487, %v1784, %v1660
        %v1788 = vsel %vm487, %v1785, %v1662
        %v1789 = vsel %vm489, %v1786, %v1670
        %v1790 = vsel %vm489, %v1787, %v1672
        %v1791 = vsel %vm489, %v1788, %v1674
        %v1792 = vsel %vm491, %v1789, %v1682
        %v1793 = vsel %vm491, %v1790, %v1684
        %v1794 = vsel %vm491, %v1791, %v1686
        %v1795 = vsel %vm479, %v1427, %v1694
        %v1796 = vsel %vm479, %v1539, %v1696
        %v1797 = vsel %vm479, %v1581, %v1698
        %v1798 = vsel %vm481, %v1795, %v1706
        %v1799 = vsel %vm481, %v1796, %v1708
        %v1800 = vsel %vm481, %v1797, %v1710
        %v1801 = vsel %vm483, %v1798, %v1718
        %v1802 = vsel %vm483, %v1799, %v1720
        %v1803 = vsel %vm483, %v1800, %v1722
        %v1804 = vsel %vm485, %v1801, %v1730
        %v1805 = vsel %vm485, %v1802, %v1732
        %v1806 = vsel %vm485, %v1803, %v1734
        %v1807 = vsel %vm487, %v1804, %v1742
        %v1808 = vsel %vm487, %v1805, %v1744
        %v1809 = vsel %vm487, %v1806, %v1746
        %v1810 = vsel %vm489, %v1807, %v1754
        %v1811 = vsel %vm489, %v1808, %v1756
        %v1812 = vsel %vm489, %v1809, %v1758
        %v1813 = vsel %vm491, %v1810, %v1766
        %v1814 = vsel %vm491, %v1811, %v1768
        %v1815 = vsel %vm491, %v1812, %v1770
        %v1816 = vsel %vm311, 0.0, 0.0
        %v1818 = vunpack.c.l.s4 1983009808
        %v1819 = vunpack.c.0.s8 %v1818
        %v1820 = vperm.slane 0.0, %v1819
        %v1822 = vunpack.c.l.s4 1983009808
        %v1823 = vunpack.c.0.s8 %v1822
        %v1824 = vperm.slane %v1816, %v1823
        %v1825 = vrot.slane %v1820, 4
        %v1826 = vsel %vm311, %v1825, %v1820
        %v1827 = vsel %vm311, %v1820, %v1825
        %v1829 = vunpack.c.l.s4 1934713408
        %v1830 = vunpack.c.0.s8 %v1829
        %v1831 = vperm.slane %v1826, %v1830
        %v1833 = vunpack.c.l.s4 1934713408
        %v1834 = vunpack.c.0.s8 %v1833
        %v1835 = vperm.slane %v1827, %v1834
        %v1836 = vrot.slane %v1824, 4
        %v1837 = vsel %vm311, %v1836, %v1824
        %v1838 = vsel %vm311, %v1824, %v1836
        %v1840 = vunpack.c.l.s4 1934713408
        %v1841 = vunpack.c.0.s8 %v1840
        %v1842 = vperm.slane %v1837, %v1841
        %v1844 = vunpack.c.l.s4 1934713408
        %v1845 = vunpack.c.0.s8 %v1844
        %v1846 = vperm.slane %v1838, %v1845
        %v1847 = vrot.slane %v1831, 4
        %v1848 = vsel %vm311, 0.0, %v1847
        %v1849 = vrot.slane %v1835, 4
        %v1850 = vsel %vm311, 0.0, %v1849
        %v1851 = vrot.slane %v1842, 4
        %v1852 = vsel %vm311, 0.0, %v1851
        %v1853 = vrot.slane %v1846, 4
        %v1854 = vsel %vm311, 0.0, %v1853
        %1856 = vrot.lane.b32.xlu0 %v1848, 16
        %v1857 = vpop.permute.xlu0 %1856
        %1860 = vrot.lane.b32.xlu0 %v1835, 32
        %v1861 = vpop.permute.xlu0 %1860
        %1864 = vrot.lane.b32.xlu0 %v1850, 48
        %v1865 = vpop.permute.xlu0 %1864
        %1868 = vrot.lane.b32.xlu0 %v1842, 64
        %v1869 = vpop.permute.xlu0 %1868
        %1872 = vrot.lane.b32.xlu0 %v1852, 80
        %v1873 = vpop.permute.xlu0 %1872
        %1876 = vrot.lane.b32.xlu0 %v1846, 96
        %v1877 = vpop.permute.xlu0 %1876
        %1880 = vrot.lane.b32.xlu0 %v1854, 112
        %v1881 = vpop.permute.xlu0 %1880
        %v1883 = vsel %vm479, %v1831, %v1857
        %v1884 = vsel %vm481, %v1883, %v1861
        %v1885 = vsel %vm483, %v1884, %v1865
        %v1886 = vsel %vm485, %v1885, %v1869
        %v1887 = vsel %vm487, %v1886, %v1873
        %v1888 = vsel %vm489, %v1887, %v1877
        %v1889 = vsel %vm491, %v1888, %v1881
        %vm1890 = vcmask 146432
        %v1892 = vsel %vm1890, %v852, 0
        %vm1894 = vcmask 1041408
        %v1896 = vsel %vm1894, %v1794, 0
        %v1899 = vsel %vm1894, %v1815, 0
        %1901 = vmatpush.msra.mxu0 0.0
        %1902 = vmatpush.msra.mxu0 0.0
        %1903 = vmatpush.msra.mxu0 0.0
        %1904 = vmatpush.msra.mxu0 0.0
        %1905 = vmatpush.msra.mxu0 0.0
        %1906 = vmatpush.msra.mxu0 0.0
        %1907 = vmatpush.msra.mxu0 0.0
        %1908 = vmatpush.msra.mxu0 0.0
        %1909 = vmatpush.msra.mxu0 0.0
        %1910 = vmatpush.msra.mxu0 0.0
        %1911 = vmatpush.msra.mxu0 0.0
        %1912 = vmatpush.msra.mxu0 0.0
        %1913 = vmatpush.msra.mxu0 0.0
        %1914 = vmatpush.msra.mxu0 %v1896
        %1915 = vmatpush.msra.mxu0 %v1793
        %1916 = vmatpush.msra.mxu0 %v1792
        %1917 = vmatmul.f32.gmra.mxu0 %v1892
        %v1918 = vpop.f32.mrf.mxu0
        %v1919 = vadd.f32 %v1889, %v1918
        %1920 = vdwg.mxu0
        %1921 = vmatpush.msra.mxu0 0.0
        %1922 = vmatpush.msra.mxu0 0.0
        %1923 = vmatpush.msra.mxu0 0.0
        %1924 = vmatpush.msra.mxu0 0.0
        %1925 = vmatpush.msra.mxu0 0.0
        %1926 = vmatpush.msra.mxu0 0.0
        %1927 = vmatpush.msra.mxu0 0.0
        %1928 = vmatpush.msra.mxu0 0.0
        %1929 = vmatpush.msra.mxu0 0.0
        %1930 = vmatpush.msra.mxu0 0.0
        %1931 = vmatpush.msra.mxu0 0.0
        %1932 = vmatpush.msra.mxu0 0.0
        %1933 = vmatpush.msra.mxu0 0.0
        %1934 = vmatpush.msra.mxu0 %v1899
        %1935 = vmatpush.msra.mxu0 %v1814
        %1936 = vmatpush.msra.mxu0 %v1813
        %1937 = vmatmul.f32.gmra.mxu0 %v1892
        %v1938 = vpop.f32.mrf.mxu0
        %v1939 = vadd.f32 %v1889, %v1938
        %1940 = vdwg.mxu0
        %1942 = vrot.lane.b32.xlu0 %v1919, 112
        %v1943 = vpop.permute.xlu0 %1942
        %1945 = vrot.lane.b32.xlu0 %v1919, 96
        %v1946 = vpop.permute.xlu0 %1945
        %1948 = vrot.lane.b32.xlu0 %v1919, 80
        %v1949 = vpop.permute.xlu0 %1948
        %1951 = vrot.lane.b32.xlu0 %v1919, 64
        %v1952 = vpop.permute.xlu0 %1951
        %1954 = vrot.lane.b32.xlu0 %v1919, 48
        %v1955 = vpop.permute.xlu0 %1954
        %1957 = vrot.lane.b32.xlu0 %v1919, 32
        %v1958 = vpop.permute.xlu0 %1957
        %1960 = vrot.lane.b32.xlu0 %v1919, 16
        %v1961 = vpop.permute.xlu0 %1960
        %1964 = vrot.lane.b32.xlu0 %v1939, 112
        %v1965 = vpop.permute.xlu0 %1964
        %1967 = vrot.lane.b32.xlu0 %v1939, 96
        %v1968 = vpop.permute.xlu0 %1967
        %1970 = vrot.lane.b32.xlu0 %v1939, 80
        %v1971 = vpop.permute.xlu0 %1970
        %1973 = vrot.lane.b32.xlu0 %v1939, 64
        %v1974 = vpop.permute.xlu0 %1973
        %1976 = vrot.lane.b32.xlu0 %v1939, 48
        %v1977 = vpop.permute.xlu0 %1976
        %1979 = vrot.lane.b32.xlu0 %v1939, 32
        %v1980 = vpop.permute.xlu0 %1979
        %1982 = vrot.lane.b32.xlu0 %v1939, 16
        %v1983 = vpop.permute.xlu0 %1982
        %v1985 = vrot.slane %v1946, 4
        %v1986 = vsel %vm311, %v1985, %v1919
        %v1988 = vunpack.c.l.s4 1983009808
        %v1989 = vunpack.c.0.s8 %v1988
        %v1990 = vperm.slane %v1986, %v1989
        %v1991 = vrot.slane %v1949, 4
        %v1992 = vsel %vm311, %v1991, %v1943
        %v1994 = vunpack.c.l.s4 1983009808
        %v1995 = vunpack.c.0.s8 %v1994
        %v1996 = vperm.slane %v1992, %v1995
        %v1997 = vrot.slane %v1958, 4
        %v1998 = vsel %vm311, %v1997, %v1952
        %v2000 = vunpack.c.l.s4 1983009808
        %v2001 = vunpack.c.0.s8 %v2000
        %v2002 = vperm.slane %v1998, %v2001
        %v2003 = vrot.slane %v1961, 4
        %v2004 = vsel %vm311, %v2003, %v1955
        %v2006 = vunpack.c.l.s4 1983009808
        %v2007 = vunpack.c.0.s8 %v2006
        %v2008 = vperm.slane %v2004, %v2007
        %v2009 = vrot.slane %v1996, 4
        %v2010 = vsel %vm311, %v2009, %v1990
        %v2012 = vunpack.c.l.s4 1934713408
        %v2013 = vunpack.c.0.s8 %v2012
        %v2014 = vperm.slane %v2010, %v2013
        %v2015 = vrot.slane %v2008, 4
        %v2016 = vsel %vm311, %v2015, %v2002
        %v2018 = vunpack.c.l.s4 1934713408
        %v2019 = vunpack.c.0.s8 %v2018
        %v2020 = vperm.slane %v2016, %v2019
        %v2021 = vrot.slane %v2020, 4
        %v2022 = vsel %vm311, %v2021, %v2014
        %v2023 = vrot.slane %v2014, 4
        %v2024 = vsel %vm311, %v2020, %v2023
        %v2025 = vrot.slane %v1968, 4
        %v2026 = vsel %vm311, %v2025, %v1939
        %v2028 = vunpack.c.l.s4 1983009808
        %v2029 = vunpack.c.0.s8 %v2028
        %v2030 = vperm.slane %v2026, %v2029
        %v2031 = vrot.slane %v1971, 4
        %v2032 = vsel %vm311, %v2031, %v1965
        %v2034 = vunpack.c.l.s4 1983009808
        %v2035 = vunpack.c.0.s8 %v2034
        %v2036 = vperm.slane %v2032, %v2035
        %v2037 = vrot.slane %v1980, 4
        %v2038 = vsel %vm311, %v2037, %v1974
        %v2040 = vunpack.c.l.s4 1983009808
        %v2041 = vunpack.c.0.s8 %v2040
        %v2042 = vperm.slane %v2038, %v2041
        %v2043 = vrot.slane %v1983, 4
        %v2044 = vsel %vm311, %v2043, %v1977
        %v2046 = vunpack.c.l.s4 1983009808
        %v2047 = vunpack.c.0.s8 %v2046
        %v2048 = vperm.slane %v2044, %v2047
        %v2049 = vrot.slane %v2036, 4
        %v2050 = vsel %vm311, %v2049, %v2030
        %v2052 = vunpack.c.l.s4 1934713408
        %v2053 = vunpack.c.0.s8 %v2052
        %v2054 = vperm.slane %v2050, %v2053
        %v2055 = vrot.slane %v2048, 4
        %v2056 = vsel %vm311, %v2055, %v2042
        %v2058 = vunpack.c.l.s4 1934713408
        %v2059 = vunpack.c.0.s8 %v2058
        %v2060 = vperm.slane %v2056, %v2059
        %v2061 = vrot.slane %v2060, 4
        %v2062 = vsel %vm311, %v2061, %v2054
        %v2063 = vrot.slane %v2054, 4
        %v2064 = vsel %vm311, %v2060, %v2063
        %2069 = vrot.lane.b32.xlu0 %v2022, 5
        %v2070 = vpop.permute.xlu0 %2069
        %2071 = vrot.lane.b32.xlu0 %v2062, 5
        %v2072 = vpop.permute.xlu0 %2071
        %2073 = vrot.lane.b32.xlu0 %v2024, 5
        %v2074 = vpop.permute.xlu0 %2073
        %2075 = vrot.lane.b32.xlu0 %v2064, 5
        %v2076 = vpop.permute.xlu0 %2075
        %2081 = vst.msk [vmem:[#allocation2 + $0x5] sm:$0xff] %vm869, %v2070
        %2082 = vst.msk [vmem:[#allocation2 + $0xd] sm:$0xff] %vm869, %v2072
        %2083 = vst.msk [vmem:[#allocation2 + $0x25] sm:$0xff] %vm869, %v2074
        %2084 = vst.msk [vmem:[#allocation2 + $0x2d] sm:$0xff] %vm869, %v2076
        %v2085 = vld [vmem:[#allocation2 + $0x2] sm:$0xff]
        %v2086 = vld [vmem:[#allocation2 + $0xa] sm:$0xff]
        %v2087 = vld [vmem:[#allocation2 + $0x22] sm:$0xff]
        %v2088 = vld [vmem:[#allocation2 + $0x2a] sm:$0xff]
        %v2089 = vld [vmem:[#allocation2 + $0x5] sm:$0xff]
        %v2090 = vld [vmem:[#allocation2 + $0xd] sm:$0xff]
        %v2091 = vld [vmem:[#allocation2 + $0x25] sm:$0xff]
        %v2092 = vld [vmem:[#allocation2 + $0x2d] sm:$0xff]
        %v2093 = vld [vmem:[#allocation2 + $0x8] sm:$0xff]
        %v2094 = vld [vmem:[#allocation2 + $0x10] sm:$0xff]
        %v2095 = vld [vmem:[#allocation2 + $0x28] sm:$0xff]
        %v2096 = vld [vmem:[#allocation2 + $0x30] sm:$0xff]
        %2101 = vrot.lane.b32.xlu0 %v2085, 125
        %v2102 = vpop.permute.xlu0 %2101
        %2103 = vrot.lane.b32.xlu0 %v2086, 125
        %v2104 = vpop.permute.xlu0 %2103
        %2105 = vrot.lane.b32.xlu0 %v2087, 125
        %v2106 = vpop.permute.xlu0 %2105
        %2107 = vrot.lane.b32.xlu0 %v2088, 125
        %v2108 = vpop.permute.xlu0 %2107
        %2109 = vrot.lane.b32.xlu0 %v2085, 122
        %v2110 = vpop.permute.xlu0 %2109
        %2111 = vrot.lane.b32.xlu0 %v2086, 122
        %v2112 = vpop.permute.xlu0 %2111
        %2113 = vrot.lane.b32.xlu0 %v2087, 122
        %v2114 = vpop.permute.xlu0 %2113
        %2115 = vrot.lane.b32.xlu0 %v2088, 122
        %v2116 = vpop.permute.xlu0 %2115
        %2121 = vrot.lane.b32.xlu0 %v2089, 125
        %v2122 = vpop.permute.xlu0 %2121
        %2123 = vrot.lane.b32.xlu0 %v2090, 125
        %v2124 = vpop.permute.xlu0 %2123
        %2125 = vrot.lane.b32.xlu0 %v2091, 125
        %v2126 = vpop.permute.xlu0 %2125
        %2127 = vrot.lane.b32.xlu0 %v2092, 125
        %v2128 = vpop.permute.xlu0 %2127
        %2129 = vrot.lane.b32.xlu0 %v2089, 122
        %v2130 = vpop.permute.xlu0 %2129
        %2131 = vrot.lane.b32.xlu0 %v2090, 122
        %v2132 = vpop.permute.xlu0 %2131
        %2133 = vrot.lane.b32.xlu0 %v2091, 122
        %v2134 = vpop.permute.xlu0 %2133
        %2135 = vrot.lane.b32.xlu0 %v2092, 122
        %v2136 = vpop.permute.xlu0 %2135
        %2141 = vrot.lane.b32.xlu0 %v2093, 125
        %v2142 = vpop.permute.xlu0 %2141
        %2143 = vrot.lane.b32.xlu0 %v2094, 125
        %v2144 = vpop.permute.xlu0 %2143
        %2145 = vrot.lane.b32.xlu0 %v2095, 125
        %v2146 = vpop.permute.xlu0 %2145
        %2147 = vrot.lane.b32.xlu0 %v2096, 125
        %v2148 = vpop.permute.xlu0 %2147
        %2149 = vrot.lane.b32.xlu0 %v2093, 122
        %v2150 = vpop.permute.xlu0 %2149
        %2151 = vrot.lane.b32.xlu0 %v2094, 122
        %v2152 = vpop.permute.xlu0 %2151
        %2153 = vrot.lane.b32.xlu0 %v2095, 122
        %v2154 = vpop.permute.xlu0 %2153
        %2155 = vrot.lane.b32.xlu0 %v2096, 122
        %v2156 = vpop.permute.xlu0 %2155
        %2157 = vrot.lane.b32.xlu0 %v2085, 126
        %v2158 = vpop.permute.xlu0 %2157
        %2159 = vrot.lane.b32.xlu0 %v2086, 126
        %v2160 = vpop.permute.xlu0 %2159
        %2161 = vrot.lane.b32.xlu0 %v2087, 126
        %v2162 = vpop.permute.xlu0 %2161
        %2163 = vrot.lane.b32.xlu0 %v2088, 126
        %v2164 = vpop.permute.xlu0 %2163
        %2165 = vrot.lane.b32.xlu0 %v2102, 126
        %v2166 = vpop.permute.xlu0 %2165
        %2167 = vrot.lane.b32.xlu0 %v2104, 126
        %v2168 = vpop.permute.xlu0 %2167
        %2169 = vrot.lane.b32.xlu0 %v2106, 126
        %v2170 = vpop.permute.xlu0 %2169
        %2171 = vrot.lane.b32.xlu0 %v2108, 126
        %v2172 = vpop.permute.xlu0 %2171
        %2173 = vrot.lane.b32.xlu0 %v2110, 126
        %v2174 = vpop.permute.xlu0 %2173
        %2175 = vrot.lane.b32.xlu0 %v2112, 126
        %v2176 = vpop.permute.xlu0 %2175
        %2177 = vrot.lane.b32.xlu0 %v2114, 126
        %v2178 = vpop.permute.xlu0 %2177
        %2179 = vrot.lane.b32.xlu0 %v2116, 126
        %v2180 = vpop.permute.xlu0 %2179
        %2181 = vrot.lane.b32.xlu0 %v2089, 126
        %v2182 = vpop.permute.xlu0 %2181
        %2183 = vrot.lane.b32.xlu0 %v2090, 126
        %v2184 = vpop.permute.xlu0 %2183
        %2185 = vrot.lane.b32.xlu0 %v2091, 126
        %v2186 = vpop.permute.xlu0 %2185
        %2187 = vrot.lane.b32.xlu0 %v2092, 126
        %v2188 = vpop.permute.xlu0 %2187
        %2189 = vrot.lane.b32.xlu0 %v2122, 126
        %v2190 = vpop.permute.xlu0 %2189
        %2191 = vrot.lane.b32.xlu0 %v2124, 126
        %v2192 = vpop.permute.xlu0 %2191
        %2193 = vrot.lane.b32.xlu0 %v2126, 126
        %v2194 = vpop.permute.xlu0 %2193
        %2195 = vrot.lane.b32.xlu0 %v2128, 126
        %v2196 = vpop.permute.xlu0 %2195
        %2197 = vrot.lane.b32.xlu0 %v2130, 126
        %v2198 = vpop.permute.xlu0 %2197
        %2199 = vrot.lane.b32.xlu0 %v2132, 126
        %v2200 = vpop.permute.xlu0 %2199
        %2201 = vrot.lane.b32.xlu0 %v2134, 126
        %v2202 = vpop.permute.xlu0 %2201
        %2203 = vrot.lane.b32.xlu0 %v2136, 126
        %v2204 = vpop.permute.xlu0 %2203
        %2205 = vrot.lane.b32.xlu0 %v2093, 126
        %v2206 = vpop.permute.xlu0 %2205
        %2207 = vrot.lane.b32.xlu0 %v2094, 126
        %v2208 = vpop.permute.xlu0 %2207
        %2209 = vrot.lane.b32.xlu0 %v2095, 126
        %v2210 = vpop.permute.xlu0 %2209
        %2211 = vrot.lane.b32.xlu0 %v2096, 126
        %v2212 = vpop.permute.xlu0 %2211
        %2213 = vrot.lane.b32.xlu0 %v2142, 126
        %v2214 = vpop.permute.xlu0 %2213
        %2215 = vrot.lane.b32.xlu0 %v2144, 126
        %v2216 = vpop.permute.xlu0 %2215
        %2217 = vrot.lane.b32.xlu0 %v2146, 126
        %v2218 = vpop.permute.xlu0 %2217
        %2219 = vrot.lane.b32.xlu0 %v2148, 126
        %v2220 = vpop.permute.xlu0 %2219
        %2221 = vrot.lane.b32.xlu0 %v2150, 126
        %v2222 = vpop.permute.xlu0 %2221
        %2223 = vrot.lane.b32.xlu0 %v2152, 126
        %v2224 = vpop.permute.xlu0 %2223
        %2225 = vrot.lane.b32.xlu0 %v2154, 126
        %v2226 = vpop.permute.xlu0 %2225
        %2227 = vrot.lane.b32.xlu0 %v2156, 126
        %v2228 = vpop.permute.xlu0 %2227
        %v2265 = vrot.slane %v2166, 4
        %v2266 = vsel %vm311, %v2265, %v2158
        %v2267 = vrot.slane %v2158, 4
        %v2268 = vsel %vm311, %v2166, %v2267
        %v2270 = vunpack.c.l.s4 1983009808
        %v2271 = vunpack.c.0.s8 %v2270
        %v2272 = vperm.slane %v2266, %v2271
        %v2274 = vunpack.c.l.s4 1983009808
        %v2275 = vunpack.c.0.s8 %v2274
        %v2276 = vperm.slane %v2268, %v2275
        %v2277 = vrot.slane %v2170, 4
        %v2278 = vsel %vm311, %v2277, %v2162
        %v2279 = vrot.slane %v2162, 4
        %v2280 = vsel %vm311, %v2170, %v2279
        %v2282 = vunpack.c.l.s4 1983009808
        %v2283 = vunpack.c.0.s8 %v2282
        %v2284 = vperm.slane %v2278, %v2283
        %v2286 = vunpack.c.l.s4 1983009808
        %v2287 = vunpack.c.0.s8 %v2286
        %v2288 = vperm.slane %v2280, %v2287
        %v2289 = vrot.slane %v2182, 4
        %v2290 = vsel %vm311, %v2289, %v2174
        %v2291 = vrot.slane %v2174, 4
        %v2292 = vsel %vm311, %v2182, %v2291
        %v2294 = vunpack.c.l.s4 1983009808
        %v2295 = vunpack.c.0.s8 %v2294
        %v2296 = vperm.slane %v2290, %v2295
        %v2298 = vunpack.c.l.s4 1983009808
        %v2299 = vunpack.c.0.s8 %v2298
        %v2300 = vperm.slane %v2292, %v2299
        %v2301 = vrot.slane %v2186, 4
        %v2302 = vsel %vm311, %v2301, %v2178
        %v2303 = vrot.slane %v2178, 4
        %v2304 = vsel %vm311, %v2186, %v2303
        %v2306 = vunpack.c.l.s4 1983009808
        %v2307 = vunpack.c.0.s8 %v2306
        %v2308 = vperm.slane %v2302, %v2307
        %v2310 = vunpack.c.l.s4 1983009808
        %v2311 = vunpack.c.0.s8 %v2310
        %v2312 = vperm.slane %v2304, %v2311
        %v2313 = vrot.slane %v2284, 4
        %v2314 = vsel %vm311, %v2313, %v2272
        %v2315 = vrot.slane %v2272, 4
        %v2316 = vsel %vm311, %v2284, %v2315
        %v2318 = vunpack.c.l.s4 1934713408
        %v2319 = vunpack.c.0.s8 %v2318
        %v2320 = vperm.slane %v2314, %v2319
        %v2322 = vunpack.c.l.s4 1934713408
        %v2323 = vunpack.c.0.s8 %v2322
        %v2324 = vperm.slane %v2316, %v2323
        %v2325 = vrot.slane %v2288, 4
        %v2326 = vsel %vm311, %v2325, %v2276
        %v2327 = vrot.slane %v2276, 4
        %v2328 = vsel %vm311, %v2288, %v2327
        %v2330 = vunpack.c.l.s4 1934713408
        %v2331 = vunpack.c.0.s8 %v2330
        %v2332 = vperm.slane %v2326, %v2331
        %v2334 = vunpack.c.l.s4 1934713408
        %v2335 = vunpack.c.0.s8 %v2334
        %v2336 = vperm.slane %v2328, %v2335
        %v2337 = vrot.slane %v2308, 4
        %v2338 = vsel %vm311, %v2337, %v2296
        %v2339 = vrot.slane %v2296, 4
        %v2340 = vsel %vm311, %v2308, %v2339
        %v2342 = vunpack.c.l.s4 1934713408
        %v2343 = vunpack.c.0.s8 %v2342
        %v2344 = vperm.slane %v2338, %v2343
        %v2346 = vunpack.c.l.s4 1934713408
        %v2347 = vunpack.c.0.s8 %v2346
        %v2348 = vperm.slane %v2340, %v2347
        %v2349 = vrot.slane %v2312, 4
        %v2350 = vsel %vm311, %v2349, %v2300
        %v2351 = vrot.slane %v2300, 4
        %v2352 = vsel %vm311, %v2312, %v2351
        %v2354 = vunpack.c.l.s4 1934713408
        %v2355 = vunpack.c.0.s8 %v2354
        %v2356 = vperm.slane %v2350, %v2355
        %v2358 = vunpack.c.l.s4 1934713408
        %v2359 = vunpack.c.0.s8 %v2358
        %v2360 = vperm.slane %v2352, %v2359
        %v2361 = vrot.slane %v2344, 4
        %v2362 = vsel %vm311, %v2361, %v2320
        %v2363 = vrot.slane %v2320, 4
        %v2364 = vsel %vm311, %v2344, %v2363
        %v2365 = vrot.slane %v2348, 4
        %v2366 = vsel %vm311, %v2365, %v2324
        %v2367 = vrot.slane %v2324, 4
        %v2368 = vsel %vm311, %v2348, %v2367
        %v2369 = vrot.slane %v2356, 4
        %v2370 = vsel %vm311, %v2369, %v2332
        %v2371 = vrot.slane %v2332, 4
        %v2372 = vsel %vm311, %v2356, %v2371
        %v2373 = vrot.slane %v2360, 4
        %v2374 = vsel %vm311, %v2373, %v2336
        %v2375 = vrot.slane %v2336, 4
        %v2376 = vsel %vm311, %v2360, %v2375
        %v2377 = vrot.slane %v2198, 4
        %v2378 = vsel %vm311, %v2377, %v2190
        %v2379 = vrot.slane %v2190, 4
        %v2380 = vsel %vm311, %v2198, %v2379
        %v2382 = vunpack.c.l.s4 1983009808
        %v2383 = vunpack.c.0.s8 %v2382
        %v2384 = vperm.slane %v2378, %v2383
        %v2386 = vunpack.c.l.s4 1983009808
        %v2387 = vunpack.c.0.s8 %v2386
        %v2388 = vperm.slane %v2380, %v2387
        %v2389 = vrot.slane %v2202, 4
        %v2390 = vsel %vm311, %v2389, %v2194
        %v2391 = vrot.slane %v2194, 4
        %v2392 = vsel %vm311, %v2202, %v2391
        %v2394 = vunpack.c.l.s4 1983009808
        %v2395 = vunpack.c.0.s8 %v2394
        %v2396 = vperm.slane %v2390, %v2395
        %v2398 = vunpack.c.l.s4 1983009808
        %v2399 = vunpack.c.0.s8 %v2398
        %v2400 = vperm.slane %v2392, %v2399
        %v2401 = vrot.slane %v2214, 4
        %v2402 = vsel %vm311, %v2401, %v2206
        %v2403 = vrot.slane %v2206, 4
        %v2404 = vsel %vm311, %v2214, %v2403
        %v2406 = vunpack.c.l.s4 1983009808
        %v2407 = vunpack.c.0.s8 %v2406
        %v2408 = vperm.slane %v2402, %v2407
        %v2410 = vunpack.c.l.s4 1983009808
        %v2411 = vunpack.c.0.s8 %v2410
        %v2412 = vperm.slane %v2404, %v2411
        %v2413 = vrot.slane %v2218, 4
        %v2414 = vsel %vm311, %v2413, %v2210
        %v2415 = vrot.slane %v2210, 4
        %v2416 = vsel %vm311, %v2218, %v2415
        %v2418 = vunpack.c.l.s4 1983009808
        %v2419 = vunpack.c.0.s8 %v2418
        %v2420 = vperm.slane %v2414, %v2419
        %v2422 = vunpack.c.l.s4 1983009808
        %v2423 = vunpack.c.0.s8 %v2422
        %v2424 = vperm.slane %v2416, %v2423
        %v2425 = vrot.slane %v2396, 4
        %v2426 = vsel %vm311, %v2425, %v2384
        %v2427 = vrot.slane %v2384, 4
        %v2428 = vsel %vm311, %v2396, %v2427
        %v2430 = vunpack.c.l.s4 1934713408
        %v2431 = vunpack.c.0.s8 %v2430
        %v2432 = vperm.slane %v2426, %v2431
        %v2434 = vunpack.c.l.s4 1934713408
        %v2435 = vunpack.c.0.s8 %v2434
        %v2436 = vperm.slane %v2428, %v2435
        %v2437 = vrot.slane %v2400, 4
        %v2438 = vsel %vm311, %v2437, %v2388
        %v2439 = vrot.slane %v2388, 4
        %v2440 = vsel %vm311, %v2400, %v2439
        %v2442 = vunpack.c.l.s4 1934713408
        %v2443 = vunpack.c.0.s8 %v2442
        %v2444 = vperm.slane %v2438, %v2443
        %v2446 = vunpack.c.l.s4 1934713408
        %v2447 = vunpack.c.0.s8 %v2446
        %v2448 = vperm.slane %v2440, %v2447
        %v2449 = vrot.slane %v2420, 4
        %v2450 = vsel %vm311, %v2449, %v2408
        %v2451 = vrot.slane %v2408, 4
        %v2452 = vsel %vm311, %v2420, %v2451
        %v2454 = vunpack.c.l.s4 1934713408
        %v2455 = vunpack.c.0.s8 %v2454
        %v2456 = vperm.slane %v2450, %v2455
        %v2458 = vunpack.c.l.s4 1934713408
        %v2459 = vunpack.c.0.s8 %v2458
        %v2460 = vperm.slane %v2452, %v2459
        %v2461 = vrot.slane %v2424, 4
        %v2462 = vsel %vm311, %v2461, %v2412
        %v2463 = vrot.slane %v2412, 4
        %v2464 = vsel %vm311, %v2424, %v2463
        %v2466 = vunpack.c.l.s4 1934713408
        %v2467 = vunpack.c.0.s8 %v2466
        %v2468 = vperm.slane %v2462, %v2467
        %v2470 = vunpack.c.l.s4 1934713408
        %v2471 = vunpack.c.0.s8 %v2470
        %v2472 = vperm.slane %v2464, %v2471
        %v2473 = vrot.slane %v2456, 4
        %v2474 = vsel %vm311, %v2473, %v2432
        %v2475 = vrot.slane %v2432, 4
        %v2476 = vsel %vm311, %v2456, %v2475
        %v2477 = vrot.slane %v2460, 4
        %v2478 = vsel %vm311, %v2477, %v2436
        %v2479 = vrot.slane %v2436, 4
        %v2480 = vsel %vm311, %v2460, %v2479
        %v2481 = vrot.slane %v2468, 4
        %v2482 = vsel %vm311, %v2481, %v2444
        %v2483 = vrot.slane %v2444, 4
        %v2484 = vsel %vm311, %v2468, %v2483
        %v2485 = vrot.slane %v2472, 4
        %v2486 = vsel %vm311, %v2485, %v2448
        %v2487 = vrot.slane %v2448, 4
        %v2488 = vsel %vm311, %v2472, %v2487
        %v2489 = vrot.slane %v2222, 4
        %v2490 = vsel %vm311, 0.0, %v2489
        %v2492 = vunpack.c.l.s4 1983009808
        %v2493 = vunpack.c.0.s8 %v2492
        %v2494 = vperm.slane %v2222, %v2493
        %v2496 = vunpack.c.l.s4 1983009808
        %v2497 = vunpack.c.0.s8 %v2496
        %v2498 = vperm.slane %v2490, %v2497
        %v2499 = vrot.slane %v2226, 4
        %v2500 = vsel %vm311, 0.0, %v2499
        %v2502 = vunpack.c.l.s4 1983009808
        %v2503 = vunpack.c.0.s8 %v2502
        %v2504 = vperm.slane %v2226, %v2503
        %v2506 = vunpack.c.l.s4 1983009808
        %v2507 = vunpack.c.0.s8 %v2506
        %v2508 = vperm.slane %v2500, %v2507
        %v2509 = vrot.slane %v2504, 4
        %v2510 = vsel %vm311, %v2509, %v2494
        %v2511 = vrot.slane %v2494, 4
        %v2512 = vsel %vm311, %v2504, %v2511
        %v2514 = vunpack.c.l.s4 1934713408
        %v2515 = vunpack.c.0.s8 %v2514
        %v2516 = vperm.slane %v2510, %v2515
        %v2518 = vunpack.c.l.s4 1934713408
        %v2519 = vunpack.c.0.s8 %v2518
        %v2520 = vperm.slane %v2512, %v2519
        %v2521 = vrot.slane %v2508, 4
        %v2522 = vsel %vm311, %v2521, %v2498
        %v2523 = vrot.slane %v2498, 4
        %v2524 = vsel %vm311, %v2508, %v2523
        %v2526 = vunpack.c.l.s4 1934713408
        %v2527 = vunpack.c.0.s8 %v2526
        %v2528 = vperm.slane %v2522, %v2527
        %v2530 = vunpack.c.l.s4 1934713408
        %v2531 = vunpack.c.0.s8 %v2530
        %v2532 = vperm.slane %v2524, %v2531
        %v2533 = vrot.slane %v2516, 4
        %v2534 = vsel %vm311, 0.0, %v2533
        %v2535 = vrot.slane %v2520, 4
        %v2536 = vsel %vm311, 0.0, %v2535
        %v2537 = vrot.slane %v2528, 4
        %v2538 = vsel %vm311, 0.0, %v2537
        %v2539 = vrot.slane %v2532, 4
        %v2540 = vsel %vm311, 0.0, %v2539
        %v2541 = vrot.slane %v2168, 4
        %v2542 = vsel %vm311, %v2541, %v2160
        %v2543 = vrot.slane %v2160, 4
        %v2544 = vsel %vm311, %v2168, %v2543
        %v2546 = vunpack.c.l.s4 1983009808
        %v2547 = vunpack.c.0.s8 %v2546
        %v2548 = vperm.slane %v2542, %v2547
        %v2550 = vunpack.c.l.s4 1983009808
        %v2551 = vunpack.c.0.s8 %v2550
        %v2552 = vperm.slane %v2544, %v2551
        %v2553 = vrot.slane %v2172, 4
        %v2554 = vsel %vm311, %v2553, %v2164
        %v2555 = vrot.slane %v2164, 4
        %v2556 = vsel %vm311, %v2172, %v2555
        %v2558 = vunpack.c.l.s4 1983009808
        %v2559 = vunpack.c.0.s8 %v2558
        %v2560 = vperm.slane %v2554, %v2559
        %v2562 = vunpack.c.l.s4 1983009808
        %v2563 = vunpack.c.0.s8 %v2562
        %v2564 = vperm.slane %v2556, %v2563
        %v2565 = vrot.slane %v2184, 4
        %v2566 = vsel %vm311, %v2565, %v2176
        %v2567 = vrot.slane %v2176, 4
        %v2568 = vsel %vm311, %v2184, %v2567
        %v2570 = vunpack.c.l.s4 1983009808
        %v2571 = vunpack.c.0.s8 %v2570
        %v2572 = vperm.slane %v2566, %v2571
        %v2574 = vunpack.c.l.s4 1983009808
        %v2575 = vunpack.c.0.s8 %v2574
        %v2576 = vperm.slane %v2568, %v2575
        %v2577 = vrot.slane %v2188, 4
        %v2578 = vsel %vm311, %v2577, %v2180
        %v2579 = vrot.slane %v2180, 4
        %v2580 = vsel %vm311, %v2188, %v2579
        %v2582 = vunpack.c.l.s4 1983009808
        %v2583 = vunpack.c.0.s8 %v2582
        %v2584 = vperm.slane %v2578, %v2583
        %v2586 = vunpack.c.l.s4 1983009808
        %v2587 = vunpack.c.0.s8 %v2586
        %v2588 = vperm.slane %v2580, %v2587
        %v2589 = vrot.slane %v2560, 4
        %v2590 = vsel %vm311, %v2589, %v2548
        %v2591 = vrot.slane %v2548, 4
        %v2592 = vsel %vm311, %v2560, %v2591
        %v2594 = vunpack.c.l.s4 1934713408
        %v2595 = vunpack.c.0.s8 %v2594
        %v2596 = vperm.slane %v2590, %v2595
        %v2598 = vunpack.c.l.s4 1934713408
        %v2599 = vunpack.c.0.s8 %v2598
        %v2600 = vperm.slane %v2592, %v2599
        %v2601 = vrot.slane %v2564, 4
        %v2602 = vsel %vm311, %v2601, %v2552
        %v2603 = vrot.slane %v2552, 4
        %v2604 = vsel %vm311, %v2564, %v2603
        %v2606 = vunpack.c.l.s4 1934713408
        %v2607 = vunpack.c.0.s8 %v2606
        %v2608 = vperm.slane %v2602, %v2607
        %v2610 = vunpack.c.l.s4 1934713408
        %v2611 = vunpack.c.0.s8 %v2610
        %v2612 = vperm.slane %v2604, %v2611
        %v2613 = vrot.slane %v2584, 4
        %v2614 = vsel %vm311, %v2613, %v2572
        %v2615 = vrot.slane %v2572, 4
        %v2616 = vsel %vm311, %v2584, %v2615
        %v2618 = vunpack.c.l.s4 1934713408
        %v2619 = vunpack.c.0.s8 %v2618
        %v2620 = vperm.slane %v2614, %v2619
        %v2622 = vunpack.c.l.s4 1934713408
        %v2623 = vunpack.c.0.s8 %v2622
        %v2624 = vperm.slane %v2616, %v2623
        %v2625 = vrot.slane %v2588, 4
        %v2626 = vsel %vm311, %v2625, %v2576
        %v2627 = vrot.slane %v2576, 4
        %v2628 = vsel %vm311, %v2588, %v2627
        %v2630 = vunpack.c.l.s4 1934713408
        %v2631 = vunpack.c.0.s8 %v2630
        %v2632 = vperm.slane %v2626, %v2631
        %v2634 = vunpack.c.l.s4 1934713408
        %v2635 = vunpack.c.0.s8 %v2634
        %v2636 = vperm.slane %v2628, %v2635
        %v2637 = vrot.slane %v2620, 4
        %v2638 = vsel %vm311, %v2637, %v2596
        %v2639 = vrot.slane %v2596, 4
        %v2640 = vsel %vm311, %v2620, %v2639
        %v2641 = vrot.slane %v2624, 4
        %v2642 = vsel %vm311, %v2641, %v2600
        %v2643 = vrot.slane %v2600, 4
        %v2644 = vsel %vm311, %v2624, %v2643
        %v2645 = vrot.slane %v2632, 4
        %v2646 = vsel %vm311, %v2645, %v2608
        %v2647 = vrot.slane %v2608, 4
        %v2648 = vsel %vm311, %v2632, %v2647
        %v2649 = vrot.slane %v2636, 4
        %v2650 = vsel %vm311, %v2649, %v2612
        %v2651 = vrot.slane %v2612, 4
        %v2652 = vsel %vm311, %v2636, %v2651
        %v2653 = vrot.slane %v2200, 4
        %v2654 = vsel %vm311, %v2653, %v2192
        %v2655 = vrot.slane %v2192, 4
        %v2656 = vsel %vm311, %v2200, %v2655
        %v2658 = vunpack.c.l.s4 1983009808
        %v2659 = vunpack.c.0.s8 %v2658
        %v2660 = vperm.slane %v2654, %v2659
        %v2662 = vunpack.c.l.s4 1983009808
        %v2663 = vunpack.c.0.s8 %v2662
        %v2664 = vperm.slane %v2656, %v2663
        %v2665 = vrot.slane %v2204, 4
        %v2666 = vsel %vm311, %v2665, %v2196
        %v2667 = vrot.slane %v2196, 4
        %v2668 = vsel %vm311, %v2204, %v2667
        %v2670 = vunpack.c.l.s4 1983009808
        %v2671 = vunpack.c.0.s8 %v2670
        %v2672 = vperm.slane %v2666, %v2671
        %v2674 = vunpack.c.l.s4 1983009808
        %v2675 = vunpack.c.0.s8 %v2674
        %v2676 = vperm.slane %v2668, %v2675
        %v2677 = vrot.slane %v2216, 4
        %v2678 = vsel %vm311, %v2677, %v2208
        %v2679 = vrot.slane %v2208, 4
        %v2680 = vsel %vm311, %v2216, %v2679
        %v2682 = vunpack.c.l.s4 1983009808
        %v2683 = vunpack.c.0.s8 %v2682
        %v2684 = vperm.slane %v2678, %v2683
        %v2686 = vunpack.c.l.s4 1983009808
        %v2687 = vunpack.c.0.s8 %v2686
        %v2688 = vperm.slane %v2680, %v2687
        %v2689 = vrot.slane %v2220, 4
        %v2690 = vsel %vm311, %v2689, %v2212
        %v2691 = vrot.slane %v2212, 4
        %v2692 = vsel %vm311, %v2220, %v2691
        %v2694 = vunpack.c.l.s4 1983009808
        %v2695 = vunpack.c.0.s8 %v2694
        %v2696 = vperm.slane %v2690, %v2695
        %v2698 = vunpack.c.l.s4 1983009808
        %v2699 = vunpack.c.0.s8 %v2698
        %v2700 = vperm.slane %v2692, %v2699
        %v2701 = vrot.slane %v2672, 4
        %v2702 = vsel %vm311, %v2701, %v2660
        %v2703 = vrot.slane %v2660, 4
        %v2704 = vsel %vm311, %v2672, %v2703
        %v2706 = vunpack.c.l.s4 1934713408
        %v2707 = vunpack.c.0.s8 %v2706
        %v2708 = vperm.slane %v2702, %v2707
        %v2710 = vunpack.c.l.s4 1934713408
        %v2711 = vunpack.c.0.s8 %v2710
        %v2712 = vperm.slane %v2704, %v2711
        %v2713 = vrot.slane %v2676, 4
        %v2714 = vsel %vm311, %v2713, %v2664
        %v2715 = vrot.slane %v2664, 4
        %v2716 = vsel %vm311, %v2676, %v2715
        %v2718 = vunpack.c.l.s4 1934713408
        %v2719 = vunpack.c.0.s8 %v2718
        %v2720 = vperm.slane %v2714, %v2719
        %v2722 = vunpack.c.l.s4 1934713408
        %v2723 = vunpack.c.0.s8 %v2722
        %v2724 = vperm.slane %v2716, %v2723
        %v2725 = vrot.slane %v2696, 4
        %v2726 = vsel %vm311, %v2725, %v2684
        %v2727 = vrot.slane %v2684, 4
        %v2728 = vsel %vm311, %v2696, %v2727
        %v2730 = vunpack.c.l.s4 1934713408
        %v2731 = vunpack.c.0.s8 %v2730
        %v2732 = vperm.slane %v2726, %v2731
        %v2734 = vunpack.c.l.s4 1934713408
        %v2735 = vunpack.c.0.s8 %v2734
        %v2736 = vperm.slane %v2728, %v2735
        %v2737 = vrot.slane %v2700, 4
        %v2738 = vsel %vm311, %v2737, %v2688
        %v2739 = vrot.slane %v2688, 4
        %v2740 = vsel %vm311, %v2700, %v2739
        %v2742 = vunpack.c.l.s4 1934713408
        %v2743 = vunpack.c.0.s8 %v2742
        %v2744 = vperm.slane %v2738, %v2743
        %v2746 = vunpack.c.l.s4 1934713408
        %v2747 = vunpack.c.0.s8 %v2746
        %v2748 = vperm.slane %v2740, %v2747
        %v2749 = vrot.slane %v2732, 4
        %v2750 = vsel %vm311, %v2749, %v2708
        %v2751 = vrot.slane %v2708, 4
        %v2752 = vsel %vm311, %v2732, %v2751
        %v2753 = vrot.slane %v2736, 4
        %v2754 = vsel %vm311, %v2753, %v2712
        %v2755 = vrot.slane %v2712, 4
        %v2756 = vsel %vm311, %v2736, %v2755
        %v2757 = vrot.slane %v2744, 4
        %v2758 = vsel %vm311, %v2757, %v2720
        %v2759 = vrot.slane %v2720, 4
        %v2760 = vsel %vm311, %v2744, %v2759
        %v2761 = vrot.slane %v2748, 4
        %v2762 = vsel %vm311, %v2761, %v2724
        %v2763 = vrot.slane %v2724, 4
        %v2764 = vsel %vm311, %v2748, %v2763
        %v2765 = vrot.slane %v2224, 4
        %v2766 = vsel %vm311, 0.0, %v2765
        %v2768 = vunpack.c.l.s4 1983009808
        %v2769 = vunpack.c.0.s8 %v2768
        %v2770 = vperm.slane %v2224, %v2769
        %v2772 = vunpack.c.l.s4 1983009808
        %v2773 = vunpack.c.0.s8 %v2772
        %v2774 = vperm.slane %v2766, %v2773
        %v2775 = vrot.slane %v2228, 4
        %v2776 = vsel %vm311, 0.0, %v2775
        %v2778 = vunpack.c.l.s4 1983009808
        %v2779 = vunpack.c.0.s8 %v2778
        %v2780 = vperm.slane %v2228, %v2779
        %v2782 = vunpack.c.l.s4 1983009808
        %v2783 = vunpack.c.0.s8 %v2782
        %v2784 = vperm.slane %v2776, %v2783
        %v2785 = vrot.slane %v2780, 4
        %v2786 = vsel %vm311, %v2785, %v2770
        %v2787 = vrot.slane %v2770, 4
        %v2788 = vsel %vm311, %v2780, %v2787
        %v2790 = vunpack.c.l.s4 1934713408
        %v2791 = vunpack.c.0.s8 %v2790
        %v2792 = vperm.slane %v2786, %v2791
        %v2794 = vunpack.c.l.s4 1934713408
        %v2795 = vunpack.c.0.s8 %v2794
        %v2796 = vperm.slane %v2788, %v2795
        %v2797 = vrot.slane %v2784, 4
        %v2798 = vsel %vm311, %v2797, %v2774
        %v2799 = vrot.slane %v2774, 4
        %v2800 = vsel %vm311, %v2784, %v2799
        %v2802 = vunpack.c.l.s4 1934713408
        %v2803 = vunpack.c.0.s8 %v2802
        %v2804 = vperm.slane %v2798, %v2803
        %v2806 = vunpack.c.l.s4 1934713408
        %v2807 = vunpack.c.0.s8 %v2806
        %v2808 = vperm.slane %v2800, %v2807
        %v2809 = vrot.slane %v2792, 4
        %v2810 = vsel %vm311, 0.0, %v2809
        %v2811 = vrot.slane %v2796, 4
        %v2812 = vsel %vm311, 0.0, %v2811
        %v2813 = vrot.slane %v2804, 4
        %v2814 = vsel %vm311, 0.0, %v2813
        %v2815 = vrot.slane %v2808, 4
        %v2816 = vsel %vm311, 0.0, %v2815
        %2820 = vrot.lane.b32.xlu0 %v2364, 16
        %v2821 = vpop.permute.xlu0 %2820
        %2822 = vrot.lane.b32.xlu0 %v2476, 16
        %v2823 = vpop.permute.xlu0 %2822
        %2824 = vrot.lane.b32.xlu0 %v2534, 16
        %v2825 = vpop.permute.xlu0 %2824
        %2832 = vrot.lane.b32.xlu0 %v2366, 32
        %v2833 = vpop.permute.xlu0 %2832
        %2834 = vrot.lane.b32.xlu0 %v2478, 32
        %v2835 = vpop.permute.xlu0 %2834
        %2836 = vrot.lane.b32.xlu0 %v2520, 32
        %v2837 = vpop.permute.xlu0 %2836
        %2844 = vrot.lane.b32.xlu0 %v2368, 48
        %v2845 = vpop.permute.xlu0 %2844
        %2846 = vrot.lane.b32.xlu0 %v2480, 48
        %v2847 = vpop.permute.xlu0 %2846
        %2848 = vrot.lane.b32.xlu0 %v2536, 48
        %v2849 = vpop.permute.xlu0 %2848
        %2856 = vrot.lane.b32.xlu0 %v2370, 64
        %v2857 = vpop.permute.xlu0 %2856
        %2858 = vrot.lane.b32.xlu0 %v2482, 64
        %v2859 = vpop.permute.xlu0 %2858
        %2860 = vrot.lane.b32.xlu0 %v2528, 64
        %v2861 = vpop.permute.xlu0 %2860
        %2868 = vrot.lane.b32.xlu0 %v2372, 80
        %v2869 = vpop.permute.xlu0 %2868
        %2870 = vrot.lane.b32.xlu0 %v2484, 80
        %v2871 = vpop.permute.xlu0 %2870
        %2872 = vrot.lane.b32.xlu0 %v2538, 80
        %v2873 = vpop.permute.xlu0 %2872
        %2880 = vrot.lane.b32.xlu0 %v2374, 96
        %v2881 = vpop.permute.xlu0 %2880
        %2882 = vrot.lane.b32.xlu0 %v2486, 96
        %v2883 = vpop.permute.xlu0 %2882
        %2884 = vrot.lane.b32.xlu0 %v2532, 96
        %v2885 = vpop.permute.xlu0 %2884
        %2892 = vrot.lane.b32.xlu0 %v2376, 112
        %v2893 = vpop.permute.xlu0 %2892
        %2894 = vrot.lane.b32.xlu0 %v2488, 112
        %v2895 = vpop.permute.xlu0 %2894
        %2896 = vrot.lane.b32.xlu0 %v2540, 112
        %v2897 = vpop.permute.xlu0 %2896
        %2904 = vrot.lane.b32.xlu0 %v2640, 16
        %v2905 = vpop.permute.xlu0 %2904
        %2906 = vrot.lane.b32.xlu0 %v2752, 16
        %v2907 = vpop.permute.xlu0 %2906
        %2908 = vrot.lane.b32.xlu0 %v2810, 16
        %v2909 = vpop.permute.xlu0 %2908
        %2916 = vrot.lane.b32.xlu0 %v2642, 32
        %v2917 = vpop.permute.xlu0 %2916
        %2918 = vrot.lane.b32.xlu0 %v2754, 32
        %v2919 = vpop.permute.xlu0 %2918
        %2920 = vrot.lane.b32.xlu0 %v2796, 32
        %v2921 = vpop.permute.xlu0 %2920
        %2928 = vrot.lane.b32.xlu0 %v2644, 48
        %v2929 = vpop.permute.xlu0 %2928
        %2930 = vrot.lane.b32.xlu0 %v2756, 48
        %v2931 = vpop.permute.xlu0 %2930
        %2932 = vrot.lane.b32.xlu0 %v2812, 48
        %v2933 = vpop.permute.xlu0 %2932
        %2940 = vrot.lane.b32.xlu0 %v2646, 64
        %v2941 = vpop.permute.xlu0 %2940
        %2942 = vrot.lane.b32.xlu0 %v2758, 64
        %v2943 = vpop.permute.xlu0 %2942
        %2944 = vrot.lane.b32.xlu0 %v2804, 64
        %v2945 = vpop.permute.xlu0 %2944
        %2952 = vrot.lane.b32.xlu0 %v2648, 80
        %v2953 = vpop.permute.xlu0 %2952
        %2954 = vrot.lane.b32.xlu0 %v2760, 80
        %v2955 = vpop.permute.xlu0 %2954
        %2956 = vrot.lane.b32.xlu0 %v2814, 80
        %v2957 = vpop.permute.xlu0 %2956
        %2964 = vrot.lane.b32.xlu0 %v2650, 96
        %v2965 = vpop.permute.xlu0 %2964
        %2966 = vrot.lane.b32.xlu0 %v2762, 96
        %v2967 = vpop.permute.xlu0 %2966
        %2968 = vrot.lane.b32.xlu0 %v2808, 96
        %v2969 = vpop.permute.xlu0 %2968
        %2976 = vrot.lane.b32.xlu0 %v2652, 112
        %v2977 = vpop.permute.xlu0 %2976
        %2978 = vrot.lane.b32.xlu0 %v2764, 112
        %v2979 = vpop.permute.xlu0 %2978
        %2980 = vrot.lane.b32.xlu0 %v2816, 112
        %v2981 = vpop.permute.xlu0 %2980
        %v2985 = vsel %vm479, %v2362, %v2821
        %v2986 = vsel %vm479, %v2474, %v2823
        %v2987 = vsel %vm479, %v2516, %v2825
        %v2988 = vsel %vm481, %v2985, %v2833
        %v2989 = vsel %vm481, %v2986, %v2835
        %v2990 = vsel %vm481, %v2987, %v2837
        %v2991 = vsel %vm483, %v2988, %v2845
        %v2992 = vsel %vm483, %v2989, %v2847
        %v2993 = vsel %vm483, %v2990, %v2849
        %v2994 = vsel %vm485, %v2991, %v2857
        %v2995 = vsel %vm485, %v2992, %v2859
        %v2996 = vsel %vm485, %v2993, %v2861
        %v2997 = vsel %vm487, %v2994, %v2869
        %v2998 = vsel %vm487, %v2995, %v2871
        %v2999 = vsel %vm487, %v2996, %v2873
        %v3000 = vsel %vm489, %v2997, %v2881
        %v3001 = vsel %vm489, %v2998, %v2883
        %v3002 = vsel %vm489, %v2999, %v2885
        %v3003 = vsel %vm491, %v3000, %v2893
        %v3004 = vsel %vm491, %v3001, %v2895
        %v3005 = vsel %vm491, %v3002, %v2897
        %v3006 = vsel %vm479, %v2638, %v2905
        %v3007 = vsel %vm479, %v2750, %v2907
        %v3008 = vsel %vm479, %v2792, %v2909
        %v3009 = vsel %vm481, %v3006, %v2917
        %v3010 = vsel %vm481, %v3007, %v2919
        %v3011 = vsel %vm481, %v3008, %v2921
        %v3012 = vsel %vm483, %v3009, %v2929
        %v3013 = vsel %vm483, %v3010, %v2931
        %v3014 = vsel %vm483, %v3011, %v2933
        %v3015 = vsel %vm485, %v3012, %v2941
        %v3016 = vsel %vm485, %v3013, %v2943
        %v3017 = vsel %vm485, %v3014, %v2945
        %v3018 = vsel %vm487, %v3015, %v2953
        %v3019 = vsel %vm487, %v3016, %v2955
        %v3020 = vsel %vm487, %v3017, %v2957
        %v3021 = vsel %vm489, %v3018, %v2965
        %v3022 = vsel %vm489, %v3019, %v2967
        %v3023 = vsel %vm489, %v3020, %v2969
        %v3024 = vsel %vm491, %v3021, %v2977
        %v3025 = vsel %vm491, %v3022, %v2979
        %v3026 = vsel %vm491, %v3023, %v2981
        %v3028 = vsel %vm1894, %v3005, 0
        %v3031 = vsel %vm1894, %v3026, 0
        %3033 = vmatpush.msra.mxu0 0.0
        %3034 = vmatpush.msra.mxu0 0.0
        %3035 = vmatpush.msra.mxu0 0.0
        %3036 = vmatpush.msra.mxu0 0.0
        %3037 = vmatpush.msra.mxu0 0.0
        %3038 = vmatpush.msra.mxu0 0.0
        %3039 = vmatpush.msra.mxu0 0.0
        %3040 = vmatpush.msra.mxu0 0.0
        %3041 = vmatpush.msra.mxu0 0.0
        %3042 = vmatpush.msra.mxu0 0.0
        %3043 = vmatpush.msra.mxu0 0.0
        %3044 = vmatpush.msra.mxu0 0.0
        %3045 = vmatpush.msra.mxu0 0.0
        %3046 = vmatpush.msra.mxu0 %v3028
        %3047 = vmatpush.msra.mxu0 %v3004
        %3048 = vmatpush.msra.mxu0 %v3003
        %3049 = vmatmul.f32.gmra.mxu0 %v1892
        %v3050 = vpop.f32.mrf.mxu0
        %v3051 = vadd.f32 %v1889, %v3050
        %3052 = vdwg.mxu0
        %3053 = vmatpush.msra.mxu0 0.0
        %3054 = vmatpush.msra.mxu0 0.0
        %3055 = vmatpush.msra.mxu0 0.0
        %3056 = vmatpush.msra.mxu0 0.0
        %3057 = vmatpush.msra.mxu0 0.0
        %3058 = vmatpush.msra.mxu0 0.0
        %3059 = vmatpush.msra.mxu0 0.0
        %3060 = vmatpush.msra.mxu0 0.0
        %3061 = vmatpush.msra.mxu0 0.0
        %3062 = vmatpush.msra.mxu0 0.0
        %3063 = vmatpush.msra.mxu0 0.0
        %3064 = vmatpush.msra.mxu0 0.0
        %3065 = vmatpush.msra.mxu0 0.0
        %3066 = vmatpush.msra.mxu0 %v3031
        %3067 = vmatpush.msra.mxu0 %v3025
        %3068 = vmatpush.msra.mxu0 %v3024
        %3069 = vmatmul.f32.gmra.mxu0 %v1892
        %v3070 = vpop.f32.mrf.mxu0
        %v3071 = vadd.f32 %v1889, %v3070
        %3072 = vdwg.mxu0
        %3074 = vrot.lane.b32.xlu0 %v3051, 112
        %v3075 = vpop.permute.xlu0 %3074
        %3077 = vrot.lane.b32.xlu0 %v3051, 96
        %v3078 = vpop.permute.xlu0 %3077
        %3080 = vrot.lane.b32.xlu0 %v3051, 80
        %v3081 = vpop.permute.xlu0 %3080
        %3083 = vrot.lane.b32.xlu0 %v3051, 64
        %v3084 = vpop.permute.xlu0 %3083
        %3086 = vrot.lane.b32.xlu0 %v3051, 48
        %v3087 = vpop.permute.xlu0 %3086
        %3089 = vrot.lane.b32.xlu0 %v3051, 32
        %v3090 = vpop.permute.xlu0 %3089
        %3092 = vrot.lane.b32.xlu0 %v3051, 16
        %v3093 = vpop.permute.xlu0 %3092
        %3096 = vrot.lane.b32.xlu0 %v3071, 112
        %v3097 = vpop.permute.xlu0 %3096
        %3099 = vrot.lane.b32.xlu0 %v3071, 96
        %v3100 = vpop.permute.xlu0 %3099
        %3102 = vrot.lane.b32.xlu0 %v3071, 80
        %v3103 = vpop.permute.xlu0 %3102
        %3105 = vrot.lane.b32.xlu0 %v3071, 64
        %v3106 = vpop.permute.xlu0 %3105
        %3108 = vrot.lane.b32.xlu0 %v3071, 48
        %v3109 = vpop.permute.xlu0 %3108
        %3111 = vrot.lane.b32.xlu0 %v3071, 32
        %v3112 = vpop.permute.xlu0 %3111
        %3114 = vrot.lane.b32.xlu0 %v3071, 16
        %v3115 = vpop.permute.xlu0 %3114
        %v3117 = vrot.slane %v3078, 4
        %v3118 = vsel %vm311, %v3117, %v3051
        %v3120 = vunpack.c.l.s4 1983009808
        %v3121 = vunpack.c.0.s8 %v3120
        %v3122 = vperm.slane %v3118, %v3121
        %v3123 = vrot.slane %v3081, 4
        %v3124 = vsel %vm311, %v3123, %v3075
        %v3126 = vunpack.c.l.s4 1983009808
        %v3127 = vunpack.c.0.s8 %v3126
        %v3128 = vperm.slane %v3124, %v3127
        %v3129 = vrot.slane %v3090, 4
        %v3130 = vsel %vm311, %v3129, %v3084
        %v3132 = vunpack.c.l.s4 1983009808
        %v3133 = vunpack.c.0.s8 %v3132
        %v3134 = vperm.slane %v3130, %v3133
        %v3135 = vrot.slane %v3093, 4
        %v3136 = vsel %vm311, %v3135, %v3087
        %v3138 = vunpack.c.l.s4 1983009808
        %v3139 = vunpack.c.0.s8 %v3138
        %v3140 = vperm.slane %v3136, %v3139
        %v3141 = vrot.slane %v3128, 4
        %v3142 = vsel %vm311, %v3141, %v3122
        %v3144 = vunpack.c.l.s4 1934713408
        %v3145 = vunpack.c.0.s8 %v3144
        %v3146 = vperm.slane %v3142, %v3145
        %v3147 = vrot.slane %v3140, 4
        %v3148 = vsel %vm311, %v3147, %v3134
        %v3150 = vunpack.c.l.s4 1934713408
        %v3151 = vunpack.c.0.s8 %v3150
        %v3152 = vperm.slane %v3148, %v3151
        %v3153 = vrot.slane %v3152, 4
        %v3154 = vsel %vm311, %v3153, %v3146
        %v3155 = vrot.slane %v3146, 4
        %v3156 = vsel %vm311, %v3152, %v3155
        %v3157 = vrot.slane %v3100, 4
        %v3158 = vsel %vm311, %v3157, %v3071
        %v3160 = vunpack.c.l.s4 1983009808
        %v3161 = vunpack.c.0.s8 %v3160
        %v3162 = vperm.slane %v3158, %v3161
        %v3163 = vrot.slane %v3103, 4
        %v3164 = vsel %vm311, %v3163, %v3097
        %v3166 = vunpack.c.l.s4 1983009808
        %v3167 = vunpack.c.0.s8 %v3166
        %v3168 = vperm.slane %v3164, %v3167
        %v3169 = vrot.slane %v3112, 4
        %v3170 = vsel %vm311, %v3169, %v3106
        %v3172 = vunpack.c.l.s4 1983009808
        %v3173 = vunpack.c.0.s8 %v3172
        %v3174 = vperm.slane %v3170, %v3173
        %v3175 = vrot.slane %v3115, 4
        %v3176 = vsel %vm311, %v3175, %v3109
        %v3178 = vunpack.c.l.s4 1983009808
        %v3179 = vunpack.c.0.s8 %v3178
        %v3180 = vperm.slane %v3176, %v3179
        %v3181 = vrot.slane %v3168, 4
        %v3182 = vsel %vm311, %v3181, %v3162
        %v3184 = vunpack.c.l.s4 1934713408
        %v3185 = vunpack.c.0.s8 %v3184
        %v3186 = vperm.slane %v3182, %v3185
        %v3187 = vrot.slane %v3180, 4
        %v3188 = vsel %vm311, %v3187, %v3174
        %v3190 = vunpack.c.l.s4 1934713408
        %v3191 = vunpack.c.0.s8 %v3190
        %v3192 = vperm.slane %v3188, %v3191
        %v3193 = vrot.slane %v3192, 4
        %v3194 = vsel %vm311, %v3193, %v3186
        %v3195 = vrot.slane %v3186, 4
        %v3196 = vsel %vm311, %v3192, %v3195
        %3201 = vrot.lane.b32.xlu0 %v3154, 5
        %v3202 = vpop.permute.xlu0 %3201
        %3203 = vrot.lane.b32.xlu0 %v3194, 5
        %v3204 = vpop.permute.xlu0 %3203
        %3205 = vrot.lane.b32.xlu0 %v3156, 5
        %v3206 = vpop.permute.xlu0 %3205
        %3207 = vrot.lane.b32.xlu0 %v3196, 5
        %v3208 = vpop.permute.xlu0 %3207
        %3213 = vst.msk [vmem:[#allocation2 + $0x5] sm:$0xff] %vm869, %v3202
        %3214 = vst.msk [vmem:[#allocation2 + $0xd] sm:$0xff] %vm869, %v3204
        %3215 = vst.msk [vmem:[#allocation2 + $0x25] sm:$0xff] %vm869, %v3206
        %3216 = vst.msk [vmem:[#allocation2 + $0x2d] sm:$0xff] %vm869, %v3208
        %v3217 = vld [vmem:[#allocation2] sm:$0xff]
        %v3218 = vld [vmem:[#allocation2 + $0x8] sm:$0xff]
        %v3219 = vld [vmem:[#allocation2 + $0x20] sm:$0xff]
        %v3220 = vld [vmem:[#allocation2 + $0x28] sm:$0xff]
        %v3221 = vld [vmem:[#allocation2 + $0x5] sm:$0xff]
        %v3222 = vld [vmem:[#allocation2 + $0xd] sm:$0xff]
        %v3223 = vld [vmem:[#allocation2 + $0x25] sm:$0xff]
        %v3224 = vld [vmem:[#allocation2 + $0x2d] sm:$0xff]
        %v3225 = vld [vmem:[#allocation2 + $0xa] sm:$0xff]
        %v3226 = vld [vmem:[#allocation2 + $0x12] sm:$0xff]
        %v3227 = vld [vmem:[#allocation2 + $0x2a] sm:$0xff]
        %v3228 = vld [vmem:[#allocation2 + $0x32] sm:$0xff]
        %3233 = vrot.lane.b32.xlu0 %v3217, 123
        %v3234 = vpop.permute.xlu0 %3233
        %3235 = vrot.lane.b32.xlu0 %v3218, 123
        %v3236 = vpop.permute.xlu0 %3235
        %3237 = vrot.lane.b32.xlu0 %v3219, 123
        %v3238 = vpop.permute.xlu0 %3237
        %3239 = vrot.lane.b32.xlu0 %v3220, 123
        %v3240 = vpop.permute.xlu0 %3239
        %3245 = vrot.lane.b32.xlu0 %v3217, 118
        %v3246 = vpop.permute.xlu0 %3245
        %3247 = vrot.lane.b32.xlu0 %v3218, 118
        %v3248 = vpop.permute.xlu0 %3247
        %3249 = vrot.lane.b32.xlu0 %v3219, 118
        %v3250 = vpop.permute.xlu0 %3249
        %3251 = vrot.lane.b32.xlu0 %v3220, 118
        %v3252 = vpop.permute.xlu0 %3251
        %3261 = vrot.lane.b32.xlu0 %v3221, 123
        %v3262 = vpop.permute.xlu0 %3261
        %3263 = vrot.lane.b32.xlu0 %v3222, 123
        %v3264 = vpop.permute.xlu0 %3263
        %3265 = vrot.lane.b32.xlu0 %v3223, 123
        %v3266 = vpop.permute.xlu0 %3265
        %3267 = vrot.lane.b32.xlu0 %v3224, 123
        %v3268 = vpop.permute.xlu0 %3267
        %3273 = vrot.lane.b32.xlu0 %v3221, 118
        %v3274 = vpop.permute.xlu0 %3273
        %3275 = vrot.lane.b32.xlu0 %v3222, 118
        %v3276 = vpop.permute.xlu0 %3275
        %3277 = vrot.lane.b32.xlu0 %v3223, 118
        %v3278 = vpop.permute.xlu0 %3277
        %3279 = vrot.lane.b32.xlu0 %v3224, 118
        %v3280 = vpop.permute.xlu0 %3279
        %3289 = vrot.lane.b32.xlu0 %v3225, 123
        %v3290 = vpop.permute.xlu0 %3289
        %3291 = vrot.lane.b32.xlu0 %v3226, 123
        %v3292 = vpop.permute.xlu0 %3291
        %3293 = vrot.lane.b32.xlu0 %v3227, 123
        %v3294 = vpop.permute.xlu0 %3293
        %3295 = vrot.lane.b32.xlu0 %v3228, 123
        %v3296 = vpop.permute.xlu0 %3295
        %3301 = vrot.lane.b32.xlu0 %v3225, 118
        %v3302 = vpop.permute.xlu0 %3301
        %3303 = vrot.lane.b32.xlu0 %v3226, 118
        %v3304 = vpop.permute.xlu0 %3303
        %3305 = vrot.lane.b32.xlu0 %v3227, 118
        %v3306 = vpop.permute.xlu0 %3305
        %3307 = vrot.lane.b32.xlu0 %v3228, 118
        %v3308 = vpop.permute.xlu0 %3307
        %v3313 = vrot.slane %v3234, 4
        %v3314 = vsel %vm311, %v3313, %v3217
        %v3315 = vrot.slane %v3217, 4
        %v3316 = vsel %vm311, %v3234, %v3315
        %v3318 = vunpack.c.l.s4 1983009808
        %v3319 = vunpack.c.0.s8 %v3318
        %v3320 = vperm.slane %v3314, %v3319
        %v3322 = vunpack.c.l.s4 1983009808
        %v3323 = vunpack.c.0.s8 %v3322
        %v3324 = vperm.slane %v3316, %v3323
        %v3325 = vrot.slane %v3238, 4
        %v3326 = vsel %vm311, %v3325, %v3219
        %v3327 = vrot.slane %v3219, 4
        %v3328 = vsel %vm311, %v3238, %v3327
        %v3330 = vunpack.c.l.s4 1983009808
        %v3331 = vunpack.c.0.s8 %v3330
        %v3332 = vperm.slane %v3326, %v3331
        %v3334 = vunpack.c.l.s4 1983009808
        %v3335 = vunpack.c.0.s8 %v3334
        %v3336 = vperm.slane %v3328, %v3335
        %v3337 = vrot.slane %v3221, 4
        %v3338 = vsel %vm311, %v3337, %v3246
        %v3339 = vrot.slane %v3246, 4
        %v3340 = vsel %vm311, %v3221, %v3339
        %v3342 = vunpack.c.l.s4 1983009808
        %v3343 = vunpack.c.0.s8 %v3342
        %v3344 = vperm.slane %v3338, %v3343
        %v3346 = vunpack.c.l.s4 1983009808
        %v3347 = vunpack.c.0.s8 %v3346
        %v3348 = vperm.slane %v3340, %v3347
        %v3349 = vrot.slane %v3223, 4
        %v3350 = vsel %vm311, %v3349, %v3250
        %v3351 = vrot.slane %v3250, 4
        %v3352 = vsel %vm311, %v3223, %v3351
        %v3354 = vunpack.c.l.s4 1983009808
        %v3355 = vunpack.c.0.s8 %v3354
        %v3356 = vperm.slane %v3350, %v3355
        %v3358 = vunpack.c.l.s4 1983009808
        %v3359 = vunpack.c.0.s8 %v3358
        %v3360 = vperm.slane %v3352, %v3359
        %v3361 = vrot.slane %v3332, 4
        %v3362 = vsel %vm311, %v3361, %v3320
        %v3363 = vrot.slane %v3320, 4
        %v3364 = vsel %vm311, %v3332, %v3363
        %v3366 = vunpack.c.l.s4 1934713408
        %v3367 = vunpack.c.0.s8 %v3366
        %v3368 = vperm.slane %v3362, %v3367
        %v3370 = vunpack.c.l.s4 1934713408
        %v3371 = vunpack.c.0.s8 %v3370
        %v3372 = vperm.slane %v3364, %v3371
        %v3373 = vrot.slane %v3336, 4
        %v3374 = vsel %vm311, %v3373, %v3324
        %v3375 = vrot.slane %v3324, 4
        %v3376 = vsel %vm311, %v3336, %v3375
        %v3378 = vunpack.c.l.s4 1934713408
        %v3379 = vunpack.c.0.s8 %v3378
        %v3380 = vperm.slane %v3374, %v3379
        %v3382 = vunpack.c.l.s4 1934713408
        %v3383 = vunpack.c.0.s8 %v3382
        %v3384 = vperm.slane %v3376, %v3383
        %v3385 = vrot.slane %v3356, 4
        %v3386 = vsel %vm311, %v3385, %v3344
        %v3387 = vrot.slane %v3344, 4
        %v3388 = vsel %vm311, %v3356, %v3387
        %v3390 = vunpack.c.l.s4 1934713408
        %v3391 = vunpack.c.0.s8 %v3390
        %v3392 = vperm.slane %v3386, %v3391
        %v3394 = vunpack.c.l.s4 1934713408
        %v3395 = vunpack.c.0.s8 %v3394
        %v3396 = vperm.slane %v3388, %v3395
        %v3397 = vrot.slane %v3360, 4
        %v3398 = vsel %vm311, %v3397, %v3348
        %v3399 = vrot.slane %v3348, 4
        %v3400 = vsel %vm311, %v3360, %v3399
        %v3402 = vunpack.c.l.s4 1934713408
        %v3403 = vunpack.c.0.s8 %v3402
        %v3404 = vperm.slane %v3398, %v3403
        %v3406 = vunpack.c.l.s4 1934713408
        %v3407 = vunpack.c.0.s8 %v3406
        %v3408 = vperm.slane %v3400, %v3407
        %v3409 = vrot.slane %v3392, 4
        %v3410 = vsel %vm311, %v3409, %v3368
        %v3411 = vrot.slane %v3368, 4
        %v3412 = vsel %vm311, %v3392, %v3411
        %v3413 = vrot.slane %v3396, 4
        %v3414 = vsel %vm311, %v3413, %v3372
        %v3415 = vrot.slane %v3372, 4
        %v3416 = vsel %vm311, %v3396, %v3415
        %v3417 = vrot.slane %v3404, 4
        %v3418 = vsel %vm311, %v3417, %v3380
        %v3419 = vrot.slane %v3380, 4
        %v3420 = vsel %vm311, %v3404, %v3419
        %v3421 = vrot.slane %v3408, 4
        %v3422 = vsel %vm311, %v3421, %v3384
        %v3423 = vrot.slane %v3384, 4
        %v3424 = vsel %vm311, %v3408, %v3423
        %v3425 = vrot.slane %v3274, 4
        %v3426 = vsel %vm311, %v3425, %v3262
        %v3427 = vrot.slane %v3262, 4
        %v3428 = vsel %vm311, %v3274, %v3427
        %v3430 = vunpack.c.l.s4 1983009808
        %v3431 = vunpack.c.0.s8 %v3430
        %v3432 = vperm.slane %v3426, %v3431
        %v3434 = vunpack.c.l.s4 1983009808
        %v3435 = vunpack.c.0.s8 %v3434
        %v3436 = vperm.slane %v3428, %v3435
        %v3437 = vrot.slane %v3278, 4
        %v3438 = vsel %vm311, %v3437, %v3266
        %v3439 = vrot.slane %v3266, 4
        %v3440 = vsel %vm311, %v3278, %v3439
        %v3442 = vunpack.c.l.s4 1983009808
        %v3443 = vunpack.c.0.s8 %v3442
        %v3444 = vperm.slane %v3438, %v3443
        %v3446 = vunpack.c.l.s4 1983009808
        %v3447 = vunpack.c.0.s8 %v3446
        %v3448 = vperm.slane %v3440, %v3447
        %v3449 = vrot.slane %v3290, 4
        %v3450 = vsel %vm311, %v3449, %v3225
        %v3451 = vrot.slane %v3225, 4
        %v3452 = vsel %vm311, %v3290, %v3451
        %v3454 = vunpack.c.l.s4 1983009808
        %v3455 = vunpack.c.0.s8 %v3454
        %v3456 = vperm.slane %v3450, %v3455
        %v3458 = vunpack.c.l.s4 1983009808
        %v3459 = vunpack.c.0.s8 %v3458
        %v3460 = vperm.slane %v3452, %v3459
        %v3461 = vrot.slane %v3294, 4
        %v3462 = vsel %vm311, %v3461, %v3227
        %v3463 = vrot.slane %v3227, 4
        %v3464 = vsel %vm311, %v3294, %v3463
        %v3466 = vunpack.c.l.s4 1983009808
        %v3467 = vunpack.c.0.s8 %v3466
        %v3468 = vperm.slane %v3462, %v3467
        %v3470 = vunpack.c.l.s4 1983009808
        %v3471 = vunpack.c.0.s8 %v3470
        %v3472 = vperm.slane %v3464, %v3471
        %v3473 = vrot.slane %v3444, 4
        %v3474 = vsel %vm311, %v3473, %v3432
        %v3475 = vrot.slane %v3432, 4
        %v3476 = vsel %vm311, %v3444, %v3475
        %v3478 = vunpack.c.l.s4 1934713408
        %v3479 = vunpack.c.0.s8 %v3478
        %v3480 = vperm.slane %v3474, %v3479
        %v3482 = vunpack.c.l.s4 1934713408
        %v3483 = vunpack.c.0.s8 %v3482
        %v3484 = vperm.slane %v3476, %v3483
        %v3485 = vrot.slane %v3448, 4
        %v3486 = vsel %vm311, %v3485, %v3436
        %v3487 = vrot.slane %v3436, 4
        %v3488 = vsel %vm311, %v3448, %v3487
        %v3490 = vunpack.c.l.s4 1934713408
        %v3491 = vunpack.c.0.s8 %v3490
        %v3492 = vperm.slane %v3486, %v3491
        %v3494 = vunpack.c.l.s4 1934713408
        %v3495 = vunpack.c.0.s8 %v3494
        %v3496 = vperm.slane %v3488, %v3495
        %v3497 = vrot.slane %v3468, 4
        %v3498 = vsel %vm311, %v3497, %v3456
        %v3499 = vrot.slane %v3456, 4
        %v3500 = vsel %vm311, %v3468, %v3499
        %v3502 = vunpack.c.l.s4 1934713408
        %v3503 = vunpack.c.0.s8 %v3502
        %v3504 = vperm.slane %v3498, %v3503
        %v3506 = vunpack.c.l.s4 1934713408
        %v3507 = vunpack.c.0.s8 %v3506
        %v3508 = vperm.slane %v3500, %v3507
        %v3509 = vrot.slane %v3472, 4
        %v3510 = vsel %vm311, %v3509, %v3460
        %v3511 = vrot.slane %v3460, 4
        %v3512 = vsel %vm311, %v3472, %v3511
        %v3514 = vunpack.c.l.s4 1934713408
        %v3515 = vunpack.c.0.s8 %v3514
        %v3516 = vperm.slane %v3510, %v3515
        %v3518 = vunpack.c.l.s4 1934713408
        %v3519 = vunpack.c.0.s8 %v3518
        %v3520 = vperm.slane %v3512, %v3519
        %v3521 = vrot.slane %v3504, 4
        %v3522 = vsel %vm311, %v3521, %v3480
        %v3523 = vrot.slane %v3480, 4
        %v3524 = vsel %vm311, %v3504, %v3523
        %v3525 = vrot.slane %v3508, 4
        %v3526 = vsel %vm311, %v3525, %v3484
        %v3527 = vrot.slane %v3484, 4
        %v3528 = vsel %vm311, %v3508, %v3527
        %v3529 = vrot.slane %v3516, 4
        %v3530 = vsel %vm311, %v3529, %v3492
        %v3531 = vrot.slane %v3492, 4
        %v3532 = vsel %vm311, %v3516, %v3531
        %v3533 = vrot.slane %v3520, 4
        %v3534 = vsel %vm311, %v3533, %v3496
        %v3535 = vrot.slane %v3496, 4
        %v3536 = vsel %vm311, %v3520, %v3535
        %v3537 = vrot.slane %v3302, 4
        %v3538 = vsel %vm311, 0.0, %v3537
        %v3540 = vunpack.c.l.s4 1983009808
        %v3541 = vunpack.c.0.s8 %v3540
        %v3542 = vperm.slane %v3302, %v3541
        %v3544 = vunpack.c.l.s4 1983009808
        %v3545 = vunpack.c.0.s8 %v3544
        %v3546 = vperm.slane %v3538, %v3545
        %v3547 = vrot.slane %v3306, 4
        %v3548 = vsel %vm311, 0.0, %v3547
        %v3550 = vunpack.c.l.s4 1983009808
        %v3551 = vunpack.c.0.s8 %v3550
        %v3552 = vperm.slane %v3306, %v3551
        %v3554 = vunpack.c.l.s4 1983009808
        %v3555 = vunpack.c.0.s8 %v3554
        %v3556 = vperm.slane %v3548, %v3555
        %v3557 = vrot.slane %v3552, 4
        %v3558 = vsel %vm311, %v3557, %v3542
        %v3559 = vrot.slane %v3542, 4
        %v3560 = vsel %vm311, %v3552, %v3559
        %v3562 = vunpack.c.l.s4 1934713408
        %v3563 = vunpack.c.0.s8 %v3562
        %v3564 = vperm.slane %v3558, %v3563
        %v3566 = vunpack.c.l.s4 1934713408
        %v3567 = vunpack.c.0.s8 %v3566
        %v3568 = vperm.slane %v3560, %v3567
        %v3569 = vrot.slane %v3556, 4
        %v3570 = vsel %vm311, %v3569, %v3546
        %v3571 = vrot.slane %v3546, 4
        %v3572 = vsel %vm311, %v3556, %v3571
        %v3574 = vunpack.c.l.s4 1934713408
        %v3575 = vunpack.c.0.s8 %v3574
        %v3576 = vperm.slane %v3570, %v3575
        %v3578 = vunpack.c.l.s4 1934713408
        %v3579 = vunpack.c.0.s8 %v3578
        %v3580 = vperm.slane %v3572, %v3579
        %v3581 = vrot.slane %v3564, 4
        %v3582 = vsel %vm311, 0.0, %v3581
        %v3583 = vrot.slane %v3568, 4
        %v3584 = vsel %vm311, 0.0, %v3583
        %v3585 = vrot.slane %v3576, 4
        %v3586 = vsel %vm311, 0.0, %v3585
        %v3587 = vrot.slane %v3580, 4
        %v3588 = vsel %vm311, 0.0, %v3587
        %v3589 = vrot.slane %v3236, 4
        %v3590 = vsel %vm311, %v3589, %v3218
        %v3591 = vrot.slane %v3218, 4
        %v3592 = vsel %vm311, %v3236, %v3591
        %v3594 = vunpack.c.l.s4 1983009808
        %v3595 = vunpack.c.0.s8 %v3594
        %v3596 = vperm.slane %v3590, %v3595
        %v3598 = vunpack.c.l.s4 1983009808
        %v3599 = vunpack.c.0.s8 %v3598
        %v3600 = vperm.slane %v3592, %v3599
        %v3601 = vrot.slane %v3240, 4
        %v3602 = vsel %vm311, %v3601, %v3220
        %v3603 = vrot.slane %v3220, 4
        %v3604 = vsel %vm311, %v3240, %v3603
        %v3606 = vunpack.c.l.s4 1983009808
        %v3607 = vunpack.c.0.s8 %v3606
        %v3608 = vperm.slane %v3602, %v3607
        %v3610 = vunpack.c.l.s4 1983009808
        %v3611 = vunpack.c.0.s8 %v3610
        %v3612 = vperm.slane %v3604, %v3611
        %v3613 = vrot.slane %v3222, 4
        %v3614 = vsel %vm311, %v3613, %v3248
        %v3615 = vrot.slane %v3248, 4
        %v3616 = vsel %vm311, %v3222, %v3615
        %v3618 = vunpack.c.l.s4 1983009808
        %v3619 = vunpack.c.0.s8 %v3618
        %v3620 = vperm.slane %v3614, %v3619
        %v3622 = vunpack.c.l.s4 1983009808
        %v3623 = vunpack.c.0.s8 %v3622
        %v3624 = vperm.slane %v3616, %v3623
        %v3625 = vrot.slane %v3224, 4
        %v3626 = vsel %vm311, %v3625, %v3252
        %v3627 = vrot.slane %v3252, 4
        %v3628 = vsel %vm311, %v3224, %v3627
        %v3630 = vunpack.c.l.s4 1983009808
        %v3631 = vunpack.c.0.s8 %v3630
        %v3632 = vperm.slane %v3626, %v3631
        %v3634 = vunpack.c.l.s4 1983009808
        %v3635 = vunpack.c.0.s8 %v3634
        %v3636 = vperm.slane %v3628, %v3635
        %v3637 = vrot.slane %v3608, 4
        %v3638 = vsel %vm311, %v3637, %v3596
        %v3639 = vrot.slane %v3596, 4
        %v3640 = vsel %vm311, %v3608, %v3639
        %v3642 = vunpack.c.l.s4 1934713408
        %v3643 = vunpack.c.0.s8 %v3642
        %v3644 = vperm.slane %v3638, %v3643
        %v3646 = vunpack.c.l.s4 1934713408
        %v3647 = vunpack.c.0.s8 %v3646
        %v3648 = vperm.slane %v3640, %v3647
        %v3649 = vrot.slane %v3612, 4
        %v3650 = vsel %vm311, %v3649, %v3600
        %v3651 = vrot.slane %v3600, 4
        %v3652 = vsel %vm311, %v3612, %v3651
        %v3654 = vunpack.c.l.s4 1934713408
        %v3655 = vunpack.c.0.s8 %v3654
        %v3656 = vperm.slane %v3650, %v3655
        %v3658 = vunpack.c.l.s4 1934713408
        %v3659 = vunpack.c.0.s8 %v3658
        %v3660 = vperm.slane %v3652, %v3659
        %v3661 = vrot.slane %v3632, 4
        %v3662 = vsel %vm311, %v3661, %v3620
        %v3663 = vrot.slane %v3620, 4
        %v3664 = vsel %vm311, %v3632, %v3663
        %v3666 = vunpack.c.l.s4 1934713408
        %v3667 = vunpack.c.0.s8 %v3666
        %v3668 = vperm.slane %v3662, %v3667
        %v3670 = vunpack.c.l.s4 1934713408
        %v3671 = vunpack.c.0.s8 %v3670
        %v3672 = vperm.slane %v3664, %v3671
        %v3673 = vrot.slane %v3636, 4
        %v3674 = vsel %vm311, %v3673, %v3624
        %v3675 = vrot.slane %v3624, 4
        %v3676 = vsel %vm311, %v3636, %v3675
        %v3678 = vunpack.c.l.s4 1934713408
        %v3679 = vunpack.c.0.s8 %v3678
        %v3680 = vperm.slane %v3674, %v3679
        %v3682 = vunpack.c.l.s4 1934713408
        %v3683 = vunpack.c.0.s8 %v3682
        %v3684 = vperm.slane %v3676, %v3683
        %v3685 = vrot.slane %v3668, 4
        %v3686 = vsel %vm311, %v3685, %v3644
        %v3687 = vrot.slane %v3644, 4
        %v3688 = vsel %vm311, %v3668, %v3687
        %v3689 = vrot.slane %v3672, 4
        %v3690 = vsel %vm311, %v3689, %v3648
        %v3691 = vrot.slane %v3648, 4
        %v3692 = vsel %vm311, %v3672, %v3691
        %v3693 = vrot.slane %v3680, 4
        %v3694 = vsel %vm311, %v3693, %v3656
        %v3695 = vrot.slane %v3656, 4
        %v3696 = vsel %vm311, %v3680, %v3695
        %v3697 = vrot.slane %v3684, 4
        %v3698 = vsel %vm311, %v3697, %v3660
        %v3699 = vrot.slane %v3660, 4
        %v3700 = vsel %vm311, %v3684, %v3699
        %v3701 = vrot.slane %v3276, 4
        %v3702 = vsel %vm311, %v3701, %v3264
        %v3703 = vrot.slane %v3264, 4
        %v3704 = vsel %vm311, %v3276, %v3703
        %v3706 = vunpack.c.l.s4 1983009808
        %v3707 = vunpack.c.0.s8 %v3706
        %v3708 = vperm.slane %v3702, %v3707
        %v3710 = vunpack.c.l.s4 1983009808
        %v3711 = vunpack.c.0.s8 %v3710
        %v3712 = vperm.slane %v3704, %v3711
        %v3713 = vrot.slane %v3280, 4
        %v3714 = vsel %vm311, %v3713, %v3268
        %v3715 = vrot.slane %v3268, 4
        %v3716 = vsel %vm311, %v3280, %v3715
        %v3718 = vunpack.c.l.s4 1983009808
        %v3719 = vunpack.c.0.s8 %v3718
        %v3720 = vperm.slane %v3714, %v3719
        %v3722 = vunpack.c.l.s4 1983009808
        %v3723 = vunpack.c.0.s8 %v3722
        %v3724 = vperm.slane %v3716, %v3723
        %v3725 = vrot.slane %v3292, 4
        %v3726 = vsel %vm311, %v3725, %v3226
        %v3727 = vrot.slane %v3226, 4
        %v3728 = vsel %vm311, %v3292, %v3727
        %v3730 = vunpack.c.l.s4 1983009808
        %v3731 = vunpack.c.0.s8 %v3730
        %v3732 = vperm.slane %v3726, %v3731
        %v3734 = vunpack.c.l.s4 1983009808
        %v3735 = vunpack.c.0.s8 %v3734
        %v3736 = vperm.slane %v3728, %v3735
        %v3737 = vrot.slane %v3296, 4
        %v3738 = vsel %vm311, %v3737, %v3228
        %v3739 = vrot.slane %v3228, 4
        %v3740 = vsel %vm311, %v3296, %v3739
        %v3742 = vunpack.c.l.s4 1983009808
        %v3743 = vunpack.c.0.s8 %v3742
        %v3744 = vperm.slane %v3738, %v3743
        %v3746 = vunpack.c.l.s4 1983009808
        %v3747 = vunpack.c.0.s8 %v3746
        %v3748 = vperm.slane %v3740, %v3747
        %v3749 = vrot.slane %v3720, 4
        %v3750 = vsel %vm311, %v3749, %v3708
        %v3751 = vrot.slane %v3708, 4
        %v3752 = vsel %vm311, %v3720, %v3751
        %v3754 = vunpack.c.l.s4 1934713408
        %v3755 = vunpack.c.0.s8 %v3754
        %v3756 = vperm.slane %v3750, %v3755
        %v3758 = vunpack.c.l.s4 1934713408
        %v3759 = vunpack.c.0.s8 %v3758
        %v3760 = vperm.slane %v3752, %v3759
        %v3761 = vrot.slane %v3724, 4
        %v3762 = vsel %vm311, %v3761, %v3712
        %v3763 = vrot.slane %v3712, 4
        %v3764 = vsel %vm311, %v3724, %v3763
        %v3766 = vunpack.c.l.s4 1934713408
        %v3767 = vunpack.c.0.s8 %v3766
        %v3768 = vperm.slane %v3762, %v3767
        %v3770 = vunpack.c.l.s4 1934713408
        %v3771 = vunpack.c.0.s8 %v3770
        %v3772 = vperm.slane %v3764, %v3771
        %v3773 = vrot.slane %v3744, 4
        %v3774 = vsel %vm311, %v3773, %v3732
        %v3775 = vrot.slane %v3732, 4
        %v3776 = vsel %vm311, %v3744, %v3775
        %v3778 = vunpack.c.l.s4 1934713408
        %v3779 = vunpack.c.0.s8 %v3778
        %v3780 = vperm.slane %v3774, %v3779
        %v3782 = vunpack.c.l.s4 1934713408
        %v3783 = vunpack.c.0.s8 %v3782
        %v3784 = vperm.slane %v3776, %v3783
        %v3785 = vrot.slane %v3748, 4
        %v3786 = vsel %vm311, %v3785, %v3736
        %v3787 = vrot.slane %v3736, 4
        %v3788 = vsel %vm311, %v3748, %v3787
        %v3790 = vunpack.c.l.s4 1934713408
        %v3791 = vunpack.c.0.s8 %v3790
        %v3792 = vperm.slane %v3786, %v3791
        %v3794 = vunpack.c.l.s4 1934713408
        %v3795 = vunpack.c.0.s8 %v3794
        %v3796 = vperm.slane %v3788, %v3795
        %v3797 = vrot.slane %v3780, 4
        %v3798 = vsel %vm311, %v3797, %v3756
        %v3799 = vrot.slane %v3756, 4
        %v3800 = vsel %vm311, %v3780, %v3799
        %v3801 = vrot.slane %v3784, 4
        %v3802 = vsel %vm311, %v3801, %v3760
        %v3803 = vrot.slane %v3760, 4
        %v3804 = vsel %vm311, %v3784, %v3803
        %v3805 = vrot.slane %v3792, 4
        %v3806 = vsel %vm311, %v3805, %v3768
        %v3807 = vrot.slane %v3768, 4
        %v3808 = vsel %vm311, %v3792, %v3807
        %v3809 = vrot.slane %v3796, 4
        %v3810 = vsel %vm311, %v3809, %v3772
        %v3811 = vrot.slane %v3772, 4
        %v3812 = vsel %vm311, %v3796, %v3811
        %v3813 = vrot.slane %v3304, 4
        %v3814 = vsel %vm311, 0.0, %v3813
        %v3816 = vunpack.c.l.s4 1983009808
        %v3817 = vunpack.c.0.s8 %v3816
        %v3818 = vperm.slane %v3304, %v3817
        %v3820 = vunpack.c.l.s4 1983009808
        %v3821 = vunpack.c.0.s8 %v3820
        %v3822 = vperm.slane %v3814, %v3821
        %v3823 = vrot.slane %v3308, 4
        %v3824 = vsel %vm311, 0.0, %v3823
        %v3826 = vunpack.c.l.s4 1983009808
        %v3827 = vunpack.c.0.s8 %v3826
        %v3828 = vperm.slane %v3308, %v3827
        %v3830 = vunpack.c.l.s4 1983009808
        %v3831 = vunpack.c.0.s8 %v3830
        %v3832 = vperm.slane %v3824, %v3831
        %v3833 = vrot.slane %v3828, 4
        %v3834 = vsel %vm311, %v3833, %v3818
        %v3835 = vrot.slane %v3818, 4
        %v3836 = vsel %vm311, %v3828, %v3835
        %v3838 = vunpack.c.l.s4 1934713408
        %v3839 = vunpack.c.0.s8 %v3838
        %v3840 = vperm.slane %v3834, %v3839
        %v3842 = vunpack.c.l.s4 1934713408
        %v3843 = vunpack.c.0.s8 %v3842
        %v3844 = vperm.slane %v3836, %v3843
        %v3845 = vrot.slane %v3832, 4
        %v3846 = vsel %vm311, %v3845, %v3822
        %v3847 = vrot.slane %v3822, 4
        %v3848 = vsel %vm311, %v3832, %v3847
        %v3850 = vunpack.c.l.s4 1934713408
        %v3851 = vunpack.c.0.s8 %v3850
        %v3852 = vperm.slane %v3846, %v3851
        %v3854 = vunpack.c.l.s4 1934713408
        %v3855 = vunpack.c.0.s8 %v3854
        %v3856 = vperm.slane %v3848, %v3855
        %v3857 = vrot.slane %v3840, 4
        %v3858 = vsel %vm311, 0.0, %v3857
        %v3859 = vrot.slane %v3844, 4
        %v3860 = vsel %vm311, 0.0, %v3859
        %v3861 = vrot.slane %v3852, 4
        %v3862 = vsel %vm311, 0.0, %v3861
        %v3863 = vrot.slane %v3856, 4
        %v3864 = vsel %vm311, 0.0, %v3863
        %3868 = vrot.lane.b32.xlu0 %v3412, 16
        %v3869 = vpop.permute.xlu0 %3868
        %3870 = vrot.lane.b32.xlu0 %v3524, 16
        %v3871 = vpop.permute.xlu0 %3870
        %3872 = vrot.lane.b32.xlu0 %v3582, 16
        %v3873 = vpop.permute.xlu0 %3872
        %3880 = vrot.lane.b32.xlu0 %v3414, 32
        %v3881 = vpop.permute.xlu0 %3880
        %3882 = vrot.lane.b32.xlu0 %v3526, 32
        %v3883 = vpop.permute.xlu0 %3882
        %3884 = vrot.lane.b32.xlu0 %v3568, 32
        %v3885 = vpop.permute.xlu0 %3884
        %3892 = vrot.lane.b32.xlu0 %v3416, 48
        %v3893 = vpop.permute.xlu0 %3892
        %3894 = vrot.lane.b32.xlu0 %v3528, 48
        %v3895 = vpop.permute.xlu0 %3894
        %3896 = vrot.lane.b32.xlu0 %v3584, 48
        %v3897 = vpop.permute.xlu0 %3896
        %3904 = vrot.lane.b32.xlu0 %v3418, 64
        %v3905 = vpop.permute.xlu0 %3904
        %3906 = vrot.lane.b32.xlu0 %v3530, 64
        %v3907 = vpop.permute.xlu0 %3906
        %3908 = vrot.lane.b32.xlu0 %v3576, 64
        %v3909 = vpop.permute.xlu0 %3908
        %3916 = vrot.lane.b32.xlu0 %v3420, 80
        %v3917 = vpop.permute.xlu0 %3916
        %3918 = vrot.lane.b32.xlu0 %v3532, 80
        %v3919 = vpop.permute.xlu0 %3918
        %3920 = vrot.lane.b32.xlu0 %v3586, 80
        %v3921 = vpop.permute.xlu0 %3920
        %3928 = vrot.lane.b32.xlu0 %v3422, 96
        %v3929 = vpop.permute.xlu0 %3928
        %3930 = vrot.lane.b32.xlu0 %v3534, 96
        %v3931 = vpop.permute.xlu0 %3930
        %3932 = vrot.lane.b32.xlu0 %v3580, 96
        %v3933 = vpop.permute.xlu0 %3932
        %3940 = vrot.lane.b32.xlu0 %v3424, 112
        %v3941 = vpop.permute.xlu0 %3940
        %3942 = vrot.lane.b32.xlu0 %v3536, 112
        %v3943 = vpop.permute.xlu0 %3942
        %3944 = vrot.lane.b32.xlu0 %v3588, 112
        %v3945 = vpop.permute.xlu0 %3944
        %3952 = vrot.lane.b32.xlu0 %v3688, 16
        %v3953 = vpop.permute.xlu0 %3952
        %3954 = vrot.lane.b32.xlu0 %v3800, 16
        %v3955 = vpop.permute.xlu0 %3954
        %3956 = vrot.lane.b32.xlu0 %v3858, 16
        %v3957 = vpop.permute.xlu0 %3956
        %3964 = vrot.lane.b32.xlu0 %v3690, 32
        %v3965 = vpop.permute.xlu0 %3964
        %3966 = vrot.lane.b32.xlu0 %v3802, 32
        %v3967 = vpop.permute.xlu0 %3966
        %3968 = vrot.lane.b32.xlu0 %v3844, 32
        %v3969 = vpop.permute.xlu0 %3968
        %3976 = vrot.lane.b32.xlu0 %v3692, 48
        %v3977 = vpop.permute.xlu0 %3976
        %3978 = vrot.lane.b32.xlu0 %v3804, 48
        %v3979 = vpop.permute.xlu0 %3978
        %3980 = vrot.lane.b32.xlu0 %v3860, 48
        %v3981 = vpop.permute.xlu0 %3980
        %3988 = vrot.lane.b32.xlu0 %v3694, 64
        %v3989 = vpop.permute.xlu0 %3988
        %3990 = vrot.lane.b32.xlu0 %v3806, 64
        %v3991 = vpop.permute.xlu0 %3990
        %3992 = vrot.lane.b32.xlu0 %v3852, 64
        %v3993 = vpop.permute.xlu0 %3992
        %4000 = vrot.lane.b32.xlu0 %v3696, 80
        %v4001 = vpop.permute.xlu0 %4000
        %4002 = vrot.lane.b32.xlu0 %v3808, 80
        %v4003 = vpop.permute.xlu0 %4002
        %4004 = vrot.lane.b32.xlu0 %v3862, 80
        %v4005 = vpop.permute.xlu0 %4004
        %4012 = vrot.lane.b32.xlu0 %v3698, 96
        %v4013 = vpop.permute.xlu0 %4012
        %4014 = vrot.lane.b32.xlu0 %v3810, 96
        %v4015 = vpop.permute.xlu0 %4014
        %4016 = vrot.lane.b32.xlu0 %v3856, 96
        %v4017 = vpop.permute.xlu0 %4016
        %4024 = vrot.lane.b32.xlu0 %v3700, 112
        %v4025 = vpop.permute.xlu0 %4024
        %4026 = vrot.lane.b32.xlu0 %v3812, 112
        %v4027 = vpop.permute.xlu0 %4026
        %4028 = vrot.lane.b32.xlu0 %v3864, 112
        %v4029 = vpop.permute.xlu0 %4028
        %v4033 = vsel %vm479, %v3410, %v3869
        %v4034 = vsel %vm479, %v3522, %v3871
        %v4035 = vsel %vm479, %v3564, %v3873
        %v4036 = vsel %vm481, %v4033, %v3881
        %v4037 = vsel %vm481, %v4034, %v3883
        %v4038 = vsel %vm481, %v4035, %v3885
        %v4039 = vsel %vm483, %v4036, %v3893
        %v4040 = vsel %vm483, %v4037, %v3895
        %v4041 = vsel %vm483, %v4038, %v3897
        %v4042 = vsel %vm485, %v4039, %v3905
        %v4043 = vsel %vm485, %v4040, %v3907
        %v4044 = vsel %vm485, %v4041, %v3909
        %v4045 = vsel %vm487, %v4042, %v3917
        %v4046 = vsel %vm487, %v4043, %v3919
        %v4047 = vsel %vm487, %v4044, %v3921
        %v4048 = vsel %vm489, %v4045, %v3929
        %v4049 = vsel %vm489, %v4046, %v3931
        %v4050 = vsel %vm489, %v4047, %v3933
        %v4051 = vsel %vm491, %v4048, %v3941
        %v4052 = vsel %vm491, %v4049, %v3943
        %v4053 = vsel %vm491, %v4050, %v3945
        %v4054 = vsel %vm479, %v3686, %v3953
        %v4055 = vsel %vm479, %v3798, %v3955
        %v4056 = vsel %vm479, %v3840, %v3957
        %v4057 = vsel %vm481, %v4054, %v3965
        %v4058 = vsel %vm481, %v4055, %v3967
        %v4059 = vsel %vm481, %v4056, %v3969
        %v4060 = vsel %vm483, %v4057, %v3977
        %v4061 = vsel %vm483, %v4058, %v3979
        %v4062 = vsel %vm483, %v4059, %v3981
        %v4063 = vsel %vm485, %v4060, %v3989
        %v4064 = vsel %vm485, %v4061, %v3991
        %v4065 = vsel %vm485, %v4062, %v3993
        %v4066 = vsel %vm487, %v4063, %v4001
        %v4067 = vsel %vm487, %v4064, %v4003
        %v4068 = vsel %vm487, %v4065, %v4005
        %v4069 = vsel %vm489, %v4066, %v4013
        %v4070 = vsel %vm489, %v4067, %v4015
        %v4071 = vsel %vm489, %v4068, %v4017
        %v4072 = vsel %vm491, %v4069, %v4025
        %v4073 = vsel %vm491, %v4070, %v4027
        %v4074 = vsel %vm491, %v4071, %v4029
        %v4076 = vsel %vm1894, %v4053, 0
        %v4079 = vsel %vm1894, %v4074, 0
        %4081 = vmatpush.msra.mxu0 0.0
        %4082 = vmatpush.msra.mxu0 0.0
        %4083 = vmatpush.msra.mxu0 0.0
        %4084 = vmatpush.msra.mxu0 0.0
        %4085 = vmatpush.msra.mxu0 0.0
        %4086 = vmatpush.msra.mxu0 0.0
        %4087 = vmatpush.msra.mxu0 0.0
        %4088 = vmatpush.msra.mxu0 0.0
        %4089 = vmatpush.msra.mxu0 0.0
        %4090 = vmatpush.msra.mxu0 0.0
        %4091 = vmatpush.msra.mxu0 0.0
        %4092 = vmatpush.msra.mxu0 0.0
        %4093 = vmatpush.msra.mxu0 0.0
        %4094 = vmatpush.msra.mxu0 %v4076
        %4095 = vmatpush.msra.mxu0 %v4052
        %4096 = vmatpush.msra.mxu0 %v4051
        %4097 = vmatmul.f32.gmra.mxu0 %v1892
        %v4098 = vpop.f32.mrf.mxu0
        %v4099 = vadd.f32 %v1889, %v4098
        %4100 = vdwg.mxu0
        %4101 = vmatpush.msra.mxu0 0.0
        %4102 = vmatpush.msra.mxu0 0.0
        %4103 = vmatpush.msra.mxu0 0.0
        %4104 = vmatpush.msra.mxu0 0.0
        %4105 = vmatpush.msra.mxu0 0.0
        %4106 = vmatpush.msra.mxu0 0.0
        %4107 = vmatpush.msra.mxu0 0.0
        %4108 = vmatpush.msra.mxu0 0.0
        %4109 = vmatpush.msra.mxu0 0.0
        %4110 = vmatpush.msra.mxu0 0.0
        %4111 = vmatpush.msra.mxu0 0.0
        %4112 = vmatpush.msra.mxu0 0.0
        %4113 = vmatpush.msra.mxu0 0.0
        %4114 = vmatpush.msra.mxu0 %v4079
        %4115 = vmatpush.msra.mxu0 %v4073
        %4116 = vmatpush.msra.mxu0 %v4072
        %4117 = vmatmul.f32.gmra.mxu0 %v1892
        %v4118 = vpop.f32.mrf.mxu0
        %v4119 = vadd.f32 %v1889, %v4118
        %4120 = vdwg.mxu0
        %4122 = vrot.lane.b32.xlu0 %v4099, 112
        %v4123 = vpop.permute.xlu0 %4122
        %4125 = vrot.lane.b32.xlu0 %v4099, 96
        %v4126 = vpop.permute.xlu0 %4125
        %4128 = vrot.lane.b32.xlu0 %v4099, 80
        %v4129 = vpop.permute.xlu0 %4128
        %4131 = vrot.lane.b32.xlu0 %v4099, 64
        %v4132 = vpop.permute.xlu0 %4131
        %4134 = vrot.lane.b32.xlu0 %v4099, 48
        %v4135 = vpop.permute.xlu0 %4134
        %4137 = vrot.lane.b32.xlu0 %v4099, 32
        %v4138 = vpop.permute.xlu0 %4137
        %4140 = vrot.lane.b32.xlu0 %v4099, 16
        %v4141 = vpop.permute.xlu0 %4140
        %4144 = vrot.lane.b32.xlu0 %v4119, 112
        %v4145 = vpop.permute.xlu0 %4144
        %4147 = vrot.lane.b32.xlu0 %v4119, 96
        %v4148 = vpop.permute.xlu0 %4147
        %4150 = vrot.lane.b32.xlu0 %v4119, 80
        %v4151 = vpop.permute.xlu0 %4150
        %4153 = vrot.lane.b32.xlu0 %v4119, 64
        %v4154 = vpop.permute.xlu0 %4153
        %4156 = vrot.lane.b32.xlu0 %v4119, 48
        %v4157 = vpop.permute.xlu0 %4156
        %4159 = vrot.lane.b32.xlu0 %v4119, 32
        %v4160 = vpop.permute.xlu0 %4159
        %4162 = vrot.lane.b32.xlu0 %v4119, 16
        %v4163 = vpop.permute.xlu0 %4162
        %v4165 = vrot.slane %v4126, 4
        %v4166 = vsel %vm311, %v4165, %v4099
        %v4168 = vunpack.c.l.s4 1983009808
        %v4169 = vunpack.c.0.s8 %v4168
        %v4170 = vperm.slane %v4166, %v4169
        %v4171 = vrot.slane %v4129, 4
        %v4172 = vsel %vm311, %v4171, %v4123
        %v4174 = vunpack.c.l.s4 1983009808
        %v4175 = vunpack.c.0.s8 %v4174
        %v4176 = vperm.slane %v4172, %v4175
        %v4177 = vrot.slane %v4138, 4
        %v4178 = vsel %vm311, %v4177, %v4132
        %v4180 = vunpack.c.l.s4 1983009808
        %v4181 = vunpack.c.0.s8 %v4180
        %v4182 = vperm.slane %v4178, %v4181
        %v4183 = vrot.slane %v4141, 4
        %v4184 = vsel %vm311, %v4183, %v4135
        %v4186 = vunpack.c.l.s4 1983009808
        %v4187 = vunpack.c.0.s8 %v4186
        %v4188 = vperm.slane %v4184, %v4187
        %v4189 = vrot.slane %v4176, 4
        %v4190 = vsel %vm311, %v4189, %v4170
        %v4192 = vunpack.c.l.s4 1934713408
        %v4193 = vunpack.c.0.s8 %v4192
        %v4194 = vperm.slane %v4190, %v4193
        %v4195 = vrot.slane %v4188, 4
        %v4196 = vsel %vm311, %v4195, %v4182
        %v4198 = vunpack.c.l.s4 1934713408
        %v4199 = vunpack.c.0.s8 %v4198
        %v4200 = vperm.slane %v4196, %v4199
        %v4201 = vrot.slane %v4200, 4
        %v4202 = vsel %vm311, %v4201, %v4194
        %v4203 = vrot.slane %v4194, 4
        %v4204 = vsel %vm311, %v4200, %v4203
        %v4205 = vrot.slane %v4148, 4
        %v4206 = vsel %vm311, %v4205, %v4119
        %v4208 = vunpack.c.l.s4 1983009808
        %v4209 = vunpack.c.0.s8 %v4208
        %v4210 = vperm.slane %v4206, %v4209
        %v4211 = vrot.slane %v4151, 4
        %v4212 = vsel %vm311, %v4211, %v4145
        %v4214 = vunpack.c.l.s4 1983009808
        %v4215 = vunpack.c.0.s8 %v4214
        %v4216 = vperm.slane %v4212, %v4215
        %v4217 = vrot.slane %v4160, 4
        %v4218 = vsel %vm311, %v4217, %v4154
        %v4220 = vunpack.c.l.s4 1983009808
        %v4221 = vunpack.c.0.s8 %v4220
        %v4222 = vperm.slane %v4218, %v4221
        %v4223 = vrot.slane %v4163, 4
        %v4224 = vsel %vm311, %v4223, %v4157
        %v4226 = vunpack.c.l.s4 1983009808
        %v4227 = vunpack.c.0.s8 %v4226
        %v4228 = vperm.slane %v4224, %v4227
        %v4229 = vrot.slane %v4216, 4
        %v4230 = vsel %vm311, %v4229, %v4210
        %v4232 = vunpack.c.l.s4 1934713408
        %v4233 = vunpack.c.0.s8 %v4232
        %v4234 = vperm.slane %v4230, %v4233
        %v4235 = vrot.slane %v4228, 4
        %v4236 = vsel %vm311, %v4235, %v4222
        %v4238 = vunpack.c.l.s4 1934713408
        %v4239 = vunpack.c.0.s8 %v4238
        %v4240 = vperm.slane %v4236, %v4239
        %v4241 = vrot.slane %v4240, 4
        %v4242 = vsel %vm311, %v4241, %v4234
        %v4243 = vrot.slane %v4234, 4
        %v4244 = vsel %vm311, %v4240, %v4243
        %v4245 = vld [vmem:[%s4] sm:$0xff]
        %v4246 = vld [vmem:[%s5] sm:$0x1]
        %v4247 = vld [vmem:[%s5 + $0x1] sm:$0x1]
        %v4248 = vld [vmem:[%s5 + $0x2] sm:$0x1]
        %v4249 = vld [vmem:[%s5 + $0x3] sm:$0x1]
        %v4250 = vld [vmem:[%s5 + $0x4] sm:$0x1]
        %v4251 = vld [vmem:[%s5 + $0x5] sm:$0x1]
        %v4252 = vld [vmem:[%s5 + $0x6] sm:$0x1]
        %v4253 = vld [vmem:[%s5 + $0x7] sm:$0x1]
        %v4262 = vperm.slane %v4246, 0
        %v4263 = vperm.slane %v4247, 0
        %v4264 = vperm.slane %v4248, 0
        %v4265 = vperm.slane %v4249, 0
        %v4266 = vperm.slane %v4250, 0
        %v4267 = vperm.slane %v4251, 0
        %v4268 = vperm.slane %v4252, 0
        %v4269 = vperm.slane %v4253, 0
        %4270 = vset.pattern.permute.xlu0 0
        %4271 = vperm.xlu0 %4270, %v4262
        %v4272 = vpop.permute.xlu0 %4271
        %4274 = vset.pattern.permute.xlu0 0
        %4275 = vperm.xlu0 %4274, %v4263
        %v4276 = vpop.permute.xlu0 %4275
        %4278 = vset.pattern.permute.xlu0 0
        %4279 = vperm.xlu0 %4278, %v4264
        %v4280 = vpop.permute.xlu0 %4279
        %4282 = vset.pattern.permute.xlu0 0
        %4283 = vperm.xlu0 %4282, %v4265
        %v4284 = vpop.permute.xlu0 %4283
        %4286 = vset.pattern.permute.xlu0 0
        %4287 = vperm.xlu0 %4286, %v4266
        %v4288 = vpop.permute.xlu0 %4287
        %4290 = vset.pattern.permute.xlu0 0
        %4291 = vperm.xlu0 %4290, %v4267
        %v4292 = vpop.permute.xlu0 %4291
        %4294 = vset.pattern.permute.xlu0 0
        %4295 = vperm.xlu0 %4294, %v4268
        %v4296 = vpop.permute.xlu0 %4295
        %4298 = vset.pattern.permute.xlu0 0
        %4299 = vperm.xlu0 %4298, %v4269
        %v4300 = vpop.permute.xlu0 %4299
        %v4302 = vrot.slane %v2022, 4
        %v4303 = vsel %vm311, %v4302, %v838
        %v4304 = vrot.slane %v838, 4
        %v4305 = vsel %vm311, %v2022, %v4304
        %v4307 = vunpack.c.l.s4 1983009808
        %v4308 = vunpack.c.0.s8 %v4307
        %v4309 = vperm.slane %v4303, %v4308
        %v4311 = vunpack.c.l.s4 1983009808
        %v4312 = vunpack.c.0.s8 %v4311
        %v4313 = vperm.slane %v4305, %v4312
        %v4314 = vrot.slane %v2024, 4
        %v4315 = vsel %vm311, %v4314, %v840
        %v4316 = vrot.slane %v840, 4
        %v4317 = vsel %vm311, %v2024, %v4316
        %v4319 = vunpack.c.l.s4 1983009808
        %v4320 = vunpack.c.0.s8 %v4319
        %v4321 = vperm.slane %v4315, %v4320
        %v4323 = vunpack.c.l.s4 1983009808
        %v4324 = vunpack.c.0.s8 %v4323
        %v4325 = vperm.slane %v4317, %v4324
        %v4326 = vrot.slane %v4202, 4
        %v4327 = vsel %vm311, %v4326, %v3154
        %v4328 = vrot.slane %v3154, 4
        %v4329 = vsel %vm311, %v4202, %v4328
        %v4331 = vunpack.c.l.s4 1983009808
        %v4332 = vunpack.c.0.s8 %v4331
        %v4333 = vperm.slane %v4327, %v4332
        %v4335 = vunpack.c.l.s4 1983009808
        %v4336 = vunpack.c.0.s8 %v4335
        %v4337 = vperm.slane %v4329, %v4336
        %v4338 = vrot.slane %v4204, 4
        %v4339 = vsel %vm311, %v4338, %v3156
        %v4340 = vrot.slane %v3156, 4
        %v4341 = vsel %vm311, %v4204, %v4340
        %v4343 = vunpack.c.l.s4 1983009808
        %v4344 = vunpack.c.0.s8 %v4343
        %v4345 = vperm.slane %v4339, %v4344
        %v4347 = vunpack.c.l.s4 1983009808
        %v4348 = vunpack.c.0.s8 %v4347
        %v4349 = vperm.slane %v4341, %v4348
        %v4350 = vrot.slane %v4321, 4
        %v4351 = vsel %vm311, %v4350, %v4309
        %v4352 = vrot.slane %v4309, 4
        %v4353 = vsel %vm311, %v4321, %v4352
        %v4355 = vunpack.c.l.s4 1934713408
        %v4356 = vunpack.c.0.s8 %v4355
        %v4357 = vperm.slane %v4351, %v4356
        %v4359 = vunpack.c.l.s4 1934713408
        %v4360 = vunpack.c.0.s8 %v4359
        %v4361 = vperm.slane %v4353, %v4360
        %v4362 = vrot.slane %v4325, 4
        %v4363 = vsel %vm311, %v4362, %v4313
        %v4364 = vrot.slane %v4313, 4
        %v4365 = vsel %vm311, %v4325, %v4364
        %v4367 = vunpack.c.l.s4 1934713408
        %v4368 = vunpack.c.0.s8 %v4367
        %v4369 = vperm.slane %v4363, %v4368
        %v4371 = vunpack.c.l.s4 1934713408
        %v4372 = vunpack.c.0.s8 %v4371
        %v4373 = vperm.slane %v4365, %v4372
        %v4374 = vrot.slane %v4345, 4
        %v4375 = vsel %vm311, %v4374, %v4333
        %v4376 = vrot.slane %v4333, 4
        %v4377 = vsel %vm311, %v4345, %v4376
        %v4379 = vunpack.c.l.s4 1934713408
        %v4380 = vunpack.c.0.s8 %v4379
        %v4381 = vperm.slane %v4375, %v4380
        %v4383 = vunpack.c.l.s4 1934713408
        %v4384 = vunpack.c.0.s8 %v4383
        %v4385 = vperm.slane %v4377, %v4384
        %v4386 = vrot.slane %v4349, 4
        %v4387 = vsel %vm311, %v4386, %v4337
        %v4388 = vrot.slane %v4337, 4
        %v4389 = vsel %vm311, %v4349, %v4388
        %v4391 = vunpack.c.l.s4 1934713408
        %v4392 = vunpack.c.0.s8 %v4391
        %v4393 = vperm.slane %v4387, %v4392
        %v4395 = vunpack.c.l.s4 1934713408
        %v4396 = vunpack.c.0.s8 %v4395
        %v4397 = vperm.slane %v4389, %v4396
        %v4398 = vrot.slane %v4381, 4
        %v4399 = vsel %vm311, %v4398, %v4357
        %v4400 = vrot.slane %v4357, 4
        %v4401 = vsel %vm311, %v4381, %v4400
        %v4402 = vrot.slane %v4385, 4
        %v4403 = vsel %vm311, %v4402, %v4361
        %v4404 = vrot.slane %v4361, 4
        %v4405 = vsel %vm311, %v4385, %v4404
        %v4406 = vrot.slane %v4393, 4
        %v4407 = vsel %vm311, %v4406, %v4369
        %v4408 = vrot.slane %v4369, 4
        %v4409 = vsel %vm311, %v4393, %v4408
        %v4410 = vrot.slane %v4397, 4
        %v4411 = vsel %vm311, %v4410, %v4373
        %v4412 = vrot.slane %v4373, 4
        %v4413 = vsel %vm311, %v4397, %v4412
        %v4414 = vrot.slane %v2062, 4
        %v4415 = vsel %vm311, %v4414, %v839
        %v4416 = vrot.slane %v839, 4
        %v4417 = vsel %vm311, %v2062, %v4416
        %v4419 = vunpack.c.l.s4 1983009808
        %v4420 = vunpack.c.0.s8 %v4419
        %v4421 = vperm.slane %v4415, %v4420
        %v4423 = vunpack.c.l.s4 1983009808
        %v4424 = vunpack.c.0.s8 %v4423
        %v4425 = vperm.slane %v4417, %v4424
        %v4426 = vrot.slane %v2064, 4
        %v4427 = vsel %vm311, %v4426, %v841
        %v4428 = vrot.slane %v841, 4
        %v4429 = vsel %vm311, %v2064, %v4428
        %v4431 = vunpack.c.l.s4 1983009808
        %v4432 = vunpack.c.0.s8 %v4431
        %v4433 = vperm.slane %v4427, %v4432
        %v4435 = vunpack.c.l.s4 1983009808
        %v4436 = vunpack.c.0.s8 %v4435
        %v4437 = vperm.slane %v4429, %v4436
        %v4438 = vrot.slane %v4242, 4
        %v4439 = vsel %vm311, %v4438, %v3194
        %v4440 = vrot.slane %v3194, 4
        %v4441 = vsel %vm311, %v4242, %v4440
        %v4443 = vunpack.c.l.s4 1983009808
        %v4444 = vunpack.c.0.s8 %v4443
        %v4445 = vperm.slane %v4439, %v4444
        %v4447 = vunpack.c.l.s4 1983009808
        %v4448 = vunpack.c.0.s8 %v4447
        %v4449 = vperm.slane %v4441, %v4448
        %v4450 = vrot.slane %v4244, 4
        %v4451 = vsel %vm311, %v4450, %v3196
        %v4452 = vrot.slane %v3196, 4
        %v4453 = vsel %vm311, %v4244, %v4452
        %v4455 = vunpack.c.l.s4 1983009808
        %v4456 = vunpack.c.0.s8 %v4455
        %v4457 = vperm.slane %v4451, %v4456
        %v4459 = vunpack.c.l.s4 1983009808
        %v4460 = vunpack.c.0.s8 %v4459
        %v4461 = vperm.slane %v4453, %v4460
        %v4462 = vrot.slane %v4433, 4
        %v4463 = vsel %vm311, %v4462, %v4421
        %v4464 = vrot.slane %v4421, 4
        %v4465 = vsel %vm311, %v4433, %v4464
        %v4467 = vunpack.c.l.s4 1934713408
        %v4468 = vunpack.c.0.s8 %v4467
        %v4469 = vperm.slane %v4463, %v4468
        %v4471 = vunpack.c.l.s4 1934713408
        %v4472 = vunpack.c.0.s8 %v4471
        %v4473 = vperm.slane %v4465, %v4472
        %v4474 = vrot.slane %v4437, 4
        %v4475 = vsel %vm311, %v4474, %v4425
        %v4476 = vrot.slane %v4425, 4
        %v4477 = vsel %vm311, %v4437, %v4476
        %v4479 = vunpack.c.l.s4 1934713408
        %v4480 = vunpack.c.0.s8 %v4479
        %v4481 = vperm.slane %v4475, %v4480
        %v4483 = vunpack.c.l.s4 1934713408
        %v4484 = vunpack.c.0.s8 %v4483
        %v4485 = vperm.slane %v4477, %v4484
        %v4486 = vrot.slane %v4457, 4
        %v4487 = vsel %vm311, %v4486, %v4445
        %v4488 = vrot.slane %v4445, 4
        %v4489 = vsel %vm311, %v4457, %v4488
        %v4491 = vunpack.c.l.s4 1934713408
        %v4492 = vunpack.c.0.s8 %v4491
        %v4493 = vperm.slane %v4487, %v4492
        %v4495 = vunpack.c.l.s4 1934713408
        %v4496 = vunpack.c.0.s8 %v4495
        %v4497 = vperm.slane %v4489, %v4496
        %v4498 = vrot.slane %v4461, 4
        %v4499 = vsel %vm311, %v4498, %v4449
        %v4500 = vrot.slane %v4449, 4
        %v4501 = vsel %vm311, %v4461, %v4500
        %v4503 = vunpack.c.l.s4 1934713408
        %v4504 = vunpack.c.0.s8 %v4503
        %v4505 = vperm.slane %v4499, %v4504
        %v4507 = vunpack.c.l.s4 1934713408
        %v4508 = vunpack.c.0.s8 %v4507
        %v4509 = vperm.slane %v4501, %v4508
        %v4510 = vrot.slane %v4493, 4
        %v4511 = vsel %vm311, %v4510, %v4469
        %v4512 = vrot.slane %v4469, 4
        %v4513 = vsel %vm311, %v4493, %v4512
        %v4514 = vrot.slane %v4497, 4
        %v4515 = vsel %vm311, %v4514, %v4473
        %v4516 = vrot.slane %v4473, 4
        %v4517 = vsel %vm311, %v4497, %v4516
        %v4518 = vrot.slane %v4505, 4
        %v4519 = vsel %vm311, %v4518, %v4481
        %v4520 = vrot.slane %v4481, 4
        %v4521 = vsel %vm311, %v4505, %v4520
        %v4522 = vrot.slane %v4509, 4
        %v4523 = vsel %vm311, %v4522, %v4485
        %v4524 = vrot.slane %v4485, 4
        %v4525 = vsel %vm311, %v4509, %v4524
        %4527 = vrot.lane.b32.xlu0 %v4401, 16
        %v4528 = vpop.permute.xlu0 %4527
        %4531 = vrot.lane.b32.xlu0 %v4403, 32
        %v4532 = vpop.permute.xlu0 %4531
        %4535 = vrot.lane.b32.xlu0 %v4405, 48
        %v4536 = vpop.permute.xlu0 %4535
        %4539 = vrot.lane.b32.xlu0 %v4407, 64
        %v4540 = vpop.permute.xlu0 %4539
        %4543 = vrot.lane.b32.xlu0 %v4409, 80
        %v4544 = vpop.permute.xlu0 %4543
        %4547 = vrot.lane.b32.xlu0 %v4411, 96
        %v4548 = vpop.permute.xlu0 %4547
        %4551 = vrot.lane.b32.xlu0 %v4413, 112
        %v4552 = vpop.permute.xlu0 %4551
        %4555 = vrot.lane.b32.xlu0 %v4513, 16
        %v4556 = vpop.permute.xlu0 %4555
        %4559 = vrot.lane.b32.xlu0 %v4515, 32
        %v4560 = vpop.permute.xlu0 %4559
        %4563 = vrot.lane.b32.xlu0 %v4517, 48
        %v4564 = vpop.permute.xlu0 %4563
        %4567 = vrot.lane.b32.xlu0 %v4519, 64
        %v4568 = vpop.permute.xlu0 %4567
        %4571 = vrot.lane.b32.xlu0 %v4521, 80
        %v4572 = vpop.permute.xlu0 %4571
        %4575 = vrot.lane.b32.xlu0 %v4523, 96
        %v4576 = vpop.permute.xlu0 %4575
        %4579 = vrot.lane.b32.xlu0 %v4525, 112
        %v4580 = vpop.permute.xlu0 %4579
        %v4582 = vsel %vm479, %v4399, %v4528
        %v4583 = vsel %vm481, %v4582, %v4532
        %v4584 = vsel %vm483, %v4583, %v4536
        %v4585 = vsel %vm485, %v4584, %v4540
        %v4586 = vsel %vm487, %v4585, %v4544
        %v4587 = vsel %vm489, %v4586, %v4548
        %v4588 = vsel %vm491, %v4587, %v4552
        %v4589 = vsel %vm479, %v4511, %v4556
        %v4590 = vsel %vm481, %v4589, %v4560
        %v4591 = vsel %vm483, %v4590, %v4564
        %v4592 = vsel %vm485, %v4591, %v4568
        %v4593 = vsel %vm487, %v4592, %v4572
        %v4594 = vsel %vm489, %v4593, %v4576
        %v4595 = vsel %vm491, %v4594, %v4580
        %v4596 = vrot.slane %v4280, 4
        %v4597 = vsel %vm311, %v4596, %v4272
        %v4598 = vrot.slane %v4272, 4
        %v4599 = vsel %vm311, %v4280, %v4598
        %v4601 = vunpack.c.l.s4 1983009808
        %v4602 = vunpack.c.0.s8 %v4601
        %v4603 = vperm.slane %v4597, %v4602
        %v4605 = vunpack.c.l.s4 1983009808
        %v4606 = vunpack.c.0.s8 %v4605
        %v4607 = vperm.slane %v4599, %v4606
        %v4608 = vrot.slane %v4284, 4
        %v4609 = vsel %vm311, %v4608, %v4276
        %v4610 = vrot.slane %v4276, 4
        %v4611 = vsel %vm311, %v4284, %v4610
        %v4613 = vunpack.c.l.s4 1983009808
        %v4614 = vunpack.c.0.s8 %v4613
        %v4615 = vperm.slane %v4609, %v4614
        %v4617 = vunpack.c.l.s4 1983009808
        %v4618 = vunpack.c.0.s8 %v4617
        %v4619 = vperm.slane %v4611, %v4618
        %v4620 = vrot.slane %v4296, 4
        %v4621 = vsel %vm311, %v4620, %v4288
        %v4622 = vrot.slane %v4288, 4
        %v4623 = vsel %vm311, %v4296, %v4622
        %v4625 = vunpack.c.l.s4 1983009808
        %v4626 = vunpack.c.0.s8 %v4625
        %v4627 = vperm.slane %v4621, %v4626
        %v4629 = vunpack.c.l.s4 1983009808
        %v4630 = vunpack.c.0.s8 %v4629
        %v4631 = vperm.slane %v4623, %v4630
        %v4632 = vrot.slane %v4300, 4
        %v4633 = vsel %vm311, %v4632, %v4292
        %v4634 = vrot.slane %v4292, 4
        %v4635 = vsel %vm311, %v4300, %v4634
        %v4637 = vunpack.c.l.s4 1983009808
        %v4638 = vunpack.c.0.s8 %v4637
        %v4639 = vperm.slane %v4633, %v4638
        %v4641 = vunpack.c.l.s4 1983009808
        %v4642 = vunpack.c.0.s8 %v4641
        %v4643 = vperm.slane %v4635, %v4642
        %v4644 = vrot.slane %v4615, 4
        %v4645 = vsel %vm311, %v4644, %v4603
        %v4646 = vrot.slane %v4603, 4
        %v4647 = vsel %vm311, %v4615, %v4646
        %v4649 = vunpack.c.l.s4 1934713408
        %v4650 = vunpack.c.0.s8 %v4649
        %v4651 = vperm.slane %v4645, %v4650
        %v4653 = vunpack.c.l.s4 1934713408
        %v4654 = vunpack.c.0.s8 %v4653
        %v4655 = vperm.slane %v4647, %v4654
        %v4656 = vrot.slane %v4619, 4
        %v4657 = vsel %vm311, %v4656, %v4607
        %v4658 = vrot.slane %v4607, 4
        %v4659 = vsel %vm311, %v4619, %v4658
        %v4661 = vunpack.c.l.s4 1934713408
        %v4662 = vunpack.c.0.s8 %v4661
        %v4663 = vperm.slane %v4657, %v4662
        %v4665 = vunpack.c.l.s4 1934713408
        %v4666 = vunpack.c.0.s8 %v4665
        %v4667 = vperm.slane %v4659, %v4666
        %v4668 = vrot.slane %v4639, 4
        %v4669 = vsel %vm311, %v4668, %v4627
        %v4670 = vrot.slane %v4627, 4
        %v4671 = vsel %vm311, %v4639, %v4670
        %v4673 = vunpack.c.l.s4 1934713408
        %v4674 = vunpack.c.0.s8 %v4673
        %v4675 = vperm.slane %v4669, %v4674
        %v4677 = vunpack.c.l.s4 1934713408
        %v4678 = vunpack.c.0.s8 %v4677
        %v4679 = vperm.slane %v4671, %v4678
        %v4680 = vrot.slane %v4643, 4
        %v4681 = vsel %vm311, %v4680, %v4631
        %v4682 = vrot.slane %v4631, 4
        %v4683 = vsel %vm311, %v4643, %v4682
        %v4685 = vunpack.c.l.s4 1934713408
        %v4686 = vunpack.c.0.s8 %v4685
        %v4687 = vperm.slane %v4681, %v4686
        %v4689 = vunpack.c.l.s4 1934713408
        %v4690 = vunpack.c.0.s8 %v4689
        %v4691 = vperm.slane %v4683, %v4690
        %v4692 = vrot.slane %v4675, 4
        %v4693 = vsel %vm311, %v4692, %v4651
        %v4694 = vrot.slane %v4651, 4
        %v4695 = vsel %vm311, %v4675, %v4694
        %v4696 = vrot.slane %v4679, 4
        %v4697 = vsel %vm311, %v4696, %v4655
        %v4698 = vrot.slane %v4655, 4
        %v4699 = vsel %vm311, %v4679, %v4698
        %v4700 = vrot.slane %v4687, 4
        %v4701 = vsel %vm311, %v4700, %v4663
        %v4702 = vrot.slane %v4663, 4
        %v4703 = vsel %vm311, %v4687, %v4702
        %v4704 = vrot.slane %v4691, 4
        %v4705 = vsel %vm311, %v4704, %v4667
        %v4706 = vrot.slane %v4667, 4
        %v4707 = vsel %vm311, %v4691, %v4706
        %4709 = vrot.lane.b32.xlu0 %v4695, 16
        %v4710 = vpop.permute.xlu0 %4709
        %4713 = vrot.lane.b32.xlu0 %v4697, 32
        %v4714 = vpop.permute.xlu0 %4713
        %4717 = vrot.lane.b32.xlu0 %v4699, 48
        %v4718 = vpop.permute.xlu0 %4717
        %4721 = vrot.lane.b32.xlu0 %v4701, 64
        %v4722 = vpop.permute.xlu0 %4721
        %4725 = vrot.lane.b32.xlu0 %v4703, 80
        %v4726 = vpop.permute.xlu0 %4725
        %4729 = vrot.lane.b32.xlu0 %v4705, 96
        %v4730 = vpop.permute.xlu0 %4729
        %4733 = vrot.lane.b32.xlu0 %v4707, 112
        %v4734 = vpop.permute.xlu0 %4733
        %v4736 = vsel %vm479, %v4693, %v4710
        %v4737 = vsel %vm481, %v4736, %v4714
        %v4738 = vsel %vm483, %v4737, %v4718
        %v4739 = vsel %vm485, %v4738, %v4722
        %v4740 = vsel %vm487, %v4739, %v4726
        %v4741 = vsel %vm489, %v4740, %v4730
        %v4742 = vsel %vm491, %v4741, %v4734
        %vm4743 = vcmask 64512
        %v4745 = vsel %vm4743, %v4245, 0
        %4747 = vmatpush.msra.mxu0 0.0
        %4748 = vmatpush.msra.mxu0 0.0
        %4749 = vmatpush.msra.mxu0 0.0
        %4750 = vmatpush.msra.mxu0 0.0
        %4751 = vmatpush.msra.mxu0 0.0
        %4752 = vmatpush.msra.mxu0 0.0
        %4753 = vmatpush.msra.mxu0 0.0
        %4754 = vmatpush.msra.mxu0 0.0
        %4755 = vmatpush.msra.mxu0 0.0
        %4756 = vmatpush.msra.mxu0 0.0
        %4757 = vmatpush.msra.mxu0 0.0
        %4758 = vmatpush.msra.mxu0 0.0
        %4759 = vmatpush.msra.mxu0 0.0
        %4760 = vmatpush.msra.mxu0 0.0
        %4761 = vmatpush.msra.mxu0 0.0
        %4762 = vmatpush.msra.mxu0 %v4588
        %4763 = vmatmul.f32.gmra.mxu0 %v4745
        %v4764 = vpop.f32.mrf.mxu0
        %v4765 = vadd.f32 %v4742, %v4764
        %4766 = vdwg.mxu0
        %4767 = vmatpush.msra.mxu0 0.0
        %4768 = vmatpush.msra.mxu0 0.0
        %4769 = vmatpush.msra.mxu0 0.0
        %4770 = vmatpush.msra.mxu0 0.0
        %4771 = vmatpush.msra.mxu0 0.0
        %4772 = vmatpush.msra.mxu0 0.0
        %4773 = vmatpush.msra.mxu0 0.0
        %4774 = vmatpush.msra.mxu0 0.0
        %4775 = vmatpush.msra.mxu0 0.0
        %4776 = vmatpush.msra.mxu0 0.0
        %4777 = vmatpush.msra.mxu0 0.0
        %4778 = vmatpush.msra.mxu0 0.0
        %4779 = vmatpush.msra.mxu0 0.0
        %4780 = vmatpush.msra.mxu0 0.0
        %4781 = vmatpush.msra.mxu0 0.0
        %4782 = vmatpush.msra.mxu0 %v4595
        %4783 = vmatmul.f32.gmra.mxu0 %v4745
        %v4784 = vpop.f32.mrf.mxu0
        %v4785 = vadd.f32 %v4742, %v4784
        %4786 = vdwg.mxu0
        %4788 = vrot.lane.b32.xlu0 %v4765, 112
        %v4789 = vpop.permute.xlu0 %4788
        %4791 = vrot.lane.b32.xlu0 %v4765, 96
        %v4792 = vpop.permute.xlu0 %4791
        %4794 = vrot.lane.b32.xlu0 %v4765, 80
        %v4795 = vpop.permute.xlu0 %4794
        %4797 = vrot.lane.b32.xlu0 %v4765, 64
        %v4798 = vpop.permute.xlu0 %4797
        %4800 = vrot.lane.b32.xlu0 %v4765, 48
        %v4801 = vpop.permute.xlu0 %4800
        %4803 = vrot.lane.b32.xlu0 %v4765, 32
        %v4804 = vpop.permute.xlu0 %4803
        %4806 = vrot.lane.b32.xlu0 %v4765, 16
        %v4807 = vpop.permute.xlu0 %4806
        %4810 = vrot.lane.b32.xlu0 %v4785, 112
        %v4811 = vpop.permute.xlu0 %4810
        %4813 = vrot.lane.b32.xlu0 %v4785, 96
        %v4814 = vpop.permute.xlu0 %4813
        %4816 = vrot.lane.b32.xlu0 %v4785, 80
        %v4817 = vpop.permute.xlu0 %4816
        %4819 = vrot.lane.b32.xlu0 %v4785, 64
        %v4820 = vpop.permute.xlu0 %4819
        %4822 = vrot.lane.b32.xlu0 %v4785, 48
        %v4823 = vpop.permute.xlu0 %4822
        %4825 = vrot.lane.b32.xlu0 %v4785, 32
        %v4826 = vpop.permute.xlu0 %4825
        %4828 = vrot.lane.b32.xlu0 %v4785, 16
        %v4829 = vpop.permute.xlu0 %4828
        %v4831 = vrot.slane %v4792, 4
        %v4832 = vsel %vm311, %v4831, %v4765
        %v4833 = vrot.slane %v4765, 4
        %v4834 = vsel %vm311, %v4792, %v4833
        %v4836 = vunpack.c.l.s4 1983009808
        %v4837 = vunpack.c.0.s8 %v4836
        %v4838 = vperm.slane %v4832, %v4837
        %v4840 = vunpack.c.l.s4 1983009808
        %v4841 = vunpack.c.0.s8 %v4840
        %v4842 = vperm.slane %v4834, %v4841
        %v4843 = vrot.slane %v4795, 4
        %v4844 = vsel %vm311, %v4843, %v4789
        %v4845 = vrot.slane %v4789, 4
        %v4846 = vsel %vm311, %v4795, %v4845
        %v4848 = vunpack.c.l.s4 1983009808
        %v4849 = vunpack.c.0.s8 %v4848
        %v4850 = vperm.slane %v4844, %v4849
        %v4852 = vunpack.c.l.s4 1983009808
        %v4853 = vunpack.c.0.s8 %v4852
        %v4854 = vperm.slane %v4846, %v4853
        %v4855 = vrot.slane %v4804, 4
        %v4856 = vsel %vm311, %v4855, %v4798
        %v4857 = vrot.slane %v4798, 4
        %v4858 = vsel %vm311, %v4804, %v4857
        %v4860 = vunpack.c.l.s4 1983009808
        %v4861 = vunpack.c.0.s8 %v4860
        %v4862 = vperm.slane %v4856, %v4861
        %v4864 = vunpack.c.l.s4 1983009808
        %v4865 = vunpack.c.0.s8 %v4864
        %v4866 = vperm.slane %v4858, %v4865
        %v4867 = vrot.slane %v4807, 4
        %v4868 = vsel %vm311, %v4867, %v4801
        %v4869 = vrot.slane %v4801, 4
        %v4870 = vsel %vm311, %v4807, %v4869
        %v4872 = vunpack.c.l.s4 1983009808
        %v4873 = vunpack.c.0.s8 %v4872
        %v4874 = vperm.slane %v4868, %v4873
        %v4876 = vunpack.c.l.s4 1983009808
        %v4877 = vunpack.c.0.s8 %v4876
        %v4878 = vperm.slane %v4870, %v4877
        %v4879 = vrot.slane %v4850, 4
        %v4880 = vsel %vm311, %v4879, %v4838
        %v4881 = vrot.slane %v4838, 4
        %v4882 = vsel %vm311, %v4850, %v4881
        %v4884 = vunpack.c.l.s4 1934713408
        %v4885 = vunpack.c.0.s8 %v4884
        %v4886 = vperm.slane %v4880, %v4885
        %v4888 = vunpack.c.l.s4 1934713408
        %v4889 = vunpack.c.0.s8 %v4888
        %v4890 = vperm.slane %v4882, %v4889
        %v4891 = vrot.slane %v4854, 4
        %v4892 = vsel %vm311, %v4891, %v4842
        %v4893 = vrot.slane %v4842, 4
        %v4894 = vsel %vm311, %v4854, %v4893
        %v4896 = vunpack.c.l.s4 1934713408
        %v4897 = vunpack.c.0.s8 %v4896
        %v4898 = vperm.slane %v4892, %v4897
        %v4900 = vunpack.c.l.s4 1934713408
        %v4901 = vunpack.c.0.s8 %v4900
        %v4902 = vperm.slane %v4894, %v4901
        %v4903 = vrot.slane %v4874, 4
        %v4904 = vsel %vm311, %v4903, %v4862
        %v4905 = vrot.slane %v4862, 4
        %v4906 = vsel %vm311, %v4874, %v4905
        %v4908 = vunpack.c.l.s4 1934713408
        %v4909 = vunpack.c.0.s8 %v4908
        %v4910 = vperm.slane %v4904, %v4909
        %v4912 = vunpack.c.l.s4 1934713408
        %v4913 = vunpack.c.0.s8 %v4912
        %v4914 = vperm.slane %v4906, %v4913
        %v4915 = vrot.slane %v4878, 4
        %v4916 = vsel %vm311, %v4915, %v4866
        %v4917 = vrot.slane %v4866, 4
        %v4918 = vsel %vm311, %v4878, %v4917
        %v4920 = vunpack.c.l.s4 1934713408
        %v4921 = vunpack.c.0.s8 %v4920
        %v4922 = vperm.slane %v4916, %v4921
        %v4924 = vunpack.c.l.s4 1934713408
        %v4925 = vunpack.c.0.s8 %v4924
        %v4926 = vperm.slane %v4918, %v4925
        %v4927 = vrot.slane %v4910, 4
        %v4928 = vsel %vm311, %v4927, %v4886
        %v4929 = vrot.slane %v4886, 4
        %v4930 = vsel %vm311, %v4910, %v4929
        %v4931 = vrot.slane %v4914, 4
        %v4932 = vsel %vm311, %v4931, %v4890
        %v4933 = vrot.slane %v4890, 4
        %v4934 = vsel %vm311, %v4914, %v4933
        %v4935 = vrot.slane %v4922, 4
        %v4936 = vsel %vm311, %v4935, %v4898
        %v4937 = vrot.slane %v4898, 4
        %v4938 = vsel %vm311, %v4922, %v4937
        %v4939 = vrot.slane %v4926, 4
        %v4940 = vsel %vm311, %v4939, %v4902
        %v4941 = vrot.slane %v4902, 4
        %v4942 = vsel %vm311, %v4926, %v4941
        %v4943 = vrot.slane %v4814, 4
        %v4944 = vsel %vm311, %v4943, %v4785
        %v4945 = vrot.slane %v4785, 4
        %v4946 = vsel %vm311, %v4814, %v4945
        %v4948 = vunpack.c.l.s4 1983009808
        %v4949 = vunpack.c.0.s8 %v4948
        %v4950 = vperm.slane %v4944, %v4949
        %v4952 = vunpack.c.l.s4 1983009808
        %v4953 = vunpack.c.0.s8 %v4952
        %v4954 = vperm.slane %v4946, %v4953
        %v4955 = vrot.slane %v4817, 4
        %v4956 = vsel %vm311, %v4955, %v4811
        %v4957 = vrot.slane %v4811, 4
        %v4958 = vsel %vm311, %v4817, %v4957
        %v4960 = vunpack.c.l.s4 1983009808
        %v4961 = vunpack.c.0.s8 %v4960
        %v4962 = vperm.slane %v4956, %v4961
        %v4964 = vunpack.c.l.s4 1983009808
        %v4965 = vunpack.c.0.s8 %v4964
        %v4966 = vperm.slane %v4958, %v4965
        %v4967 = vrot.slane %v4826, 4
        %v4968 = vsel %vm311, %v4967, %v4820
        %v4969 = vrot.slane %v4820, 4
        %v4970 = vsel %vm311, %v4826, %v4969
        %v4972 = vunpack.c.l.s4 1983009808
        %v4973 = vunpack.c.0.s8 %v4972
        %v4974 = vperm.slane %v4968, %v4973
        %v4976 = vunpack.c.l.s4 1983009808
        %v4977 = vunpack.c.0.s8 %v4976
        %v4978 = vperm.slane %v4970, %v4977
        %v4979 = vrot.slane %v4829, 4
        %v4980 = vsel %vm311, %v4979, %v4823
        %v4981 = vrot.slane %v4823, 4
        %v4982 = vsel %vm311, %v4829, %v4981
        %v4984 = vunpack.c.l.s4 1983009808
        %v4985 = vunpack.c.0.s8 %v4984
        %v4986 = vperm.slane %v4980, %v4985
        %v4988 = vunpack.c.l.s4 1983009808
        %v4989 = vunpack.c.0.s8 %v4988
        %v4990 = vperm.slane %v4982, %v4989
        %v4991 = vrot.slane %v4962, 4
        %v4992 = vsel %vm311, %v4991, %v4950
        %v4993 = vrot.slane %v4950, 4
        %v4994 = vsel %vm311, %v4962, %v4993
        %v4996 = vunpack.c.l.s4 1934713408
        %v4997 = vunpack.c.0.s8 %v4996
        %v4998 = vperm.slane %v4992, %v4997
        %v5000 = vunpack.c.l.s4 1934713408
        %v5001 = vunpack.c.0.s8 %v5000
        %v5002 = vperm.slane %v4994, %v5001
        %v5003 = vrot.slane %v4966, 4
        %v5004 = vsel %vm311, %v5003, %v4954
        %v5005 = vrot.slane %v4954, 4
        %v5006 = vsel %vm311, %v4966, %v5005
        %v5008 = vunpack.c.l.s4 1934713408
        %v5009 = vunpack.c.0.s8 %v5008
        %v5010 = vperm.slane %v5004, %v5009
        %v5012 = vunpack.c.l.s4 1934713408
        %v5013 = vunpack.c.0.s8 %v5012
        %v5014 = vperm.slane %v5006, %v5013
        %v5015 = vrot.slane %v4986, 4
        %v5016 = vsel %vm311, %v5015, %v4974
        %v5017 = vrot.slane %v4974, 4
        %v5018 = vsel %vm311, %v4986, %v5017
        %v5020 = vunpack.c.l.s4 1934713408
        %v5021 = vunpack.c.0.s8 %v5020
        %v5022 = vperm.slane %v5016, %v5021
        %v5024 = vunpack.c.l.s4 1934713408
        %v5025 = vunpack.c.0.s8 %v5024
        %v5026 = vperm.slane %v5018, %v5025
        %v5027 = vrot.slane %v4990, 4
        %v5028 = vsel %vm311, %v5027, %v4978
        %v5029 = vrot.slane %v4978, 4
        %v5030 = vsel %vm311, %v4990, %v5029
        %v5032 = vunpack.c.l.s4 1934713408
        %v5033 = vunpack.c.0.s8 %v5032
        %v5034 = vperm.slane %v5028, %v5033
        %v5036 = vunpack.c.l.s4 1934713408
        %v5037 = vunpack.c.0.s8 %v5036
        %v5038 = vperm.slane %v5030, %v5037
        %v5039 = vrot.slane %v5022, 4
        %v5040 = vsel %vm311, %v5039, %v4998
        %v5041 = vrot.slane %v4998, 4
        %v5042 = vsel %vm311, %v5022, %v5041
        %v5043 = vrot.slane %v5026, 4
        %v5044 = vsel %vm311, %v5043, %v5002
        %v5045 = vrot.slane %v5002, 4
        %v5046 = vsel %vm311, %v5026, %v5045
        %v5047 = vrot.slane %v5034, 4
        %v5048 = vsel %vm311, %v5047, %v5010
        %v5049 = vrot.slane %v5010, 4
        %v5050 = vsel %vm311, %v5034, %v5049
        %v5051 = vrot.slane %v5038, 4
        %v5052 = vsel %vm311, %v5051, %v5014
        %v5053 = vrot.slane %v5014, 4
        %v5054 = vsel %vm311, %v5038, %v5053
        %v5055 = vsub.f32 0.0, %v4928
        %v5056 = vsub.f32 0.0, %v5040
        %v5057 = vsub.f32 0.0, %v4930
        %v5058 = vsub.f32 0.0, %v5042
        %v5059 = vsub.f32 0.0, %v4932
        %v5060 = vsub.f32 0.0, %v5044
        %v5061 = vsub.f32 0.0, %v4934
        %v5062 = vsub.f32 0.0, %v5046
        %v5063 = vsub.f32 0.0, %v4936
        %v5064 = vsub.f32 0.0, %v5048
        %v5065 = vsub.f32 0.0, %v4938
        %v5066 = vsub.f32 0.0, %v5050
        %v5067 = vsub.f32 0.0, %v4940
        %v5068 = vsub.f32 0.0, %v5052
        %v5069 = vsub.f32 0.0, %v4942
        %v5070 = vsub.f32 0.0, %v5054
        %v5071 = vmul.f32 %v5055, 1.442695
        %v5072 = vpow.pop %v5071
        %v5073 = vmul.f32 %v5056, 1.442695
        %v5074 = vpow.pop %v5073
        %v5075 = vmul.f32 %v5057, 1.442695
        %v5076 = vpow.pop %v5075
        %v5077 = vmul.f32 %v5058, 1.442695
        %v5078 = vpow.pop %v5077
        %v5079 = vmul.f32 %v5059, 1.442695
        %v5080 = vpow.pop %v5079
        %v5081 = vmul.f32 %v5060, 1.442695
        %v5082 = vpow.pop %v5081
        %v5083 = vmul.f32 %v5061, 1.442695
        %v5084 = vpow.pop %v5083
        %v5085 = vmul.f32 %v5062, 1.442695
        %v5086 = vpow.pop %v5085
        %v5087 = vmul.f32 %v5063, 1.442695
        %v5088 = vpow.pop %v5087
        %v5089 = vmul.f32 %v5064, 1.442695
        %v5090 = vpow.pop %v5089
        %v5091 = vmul.f32 %v5065, 1.442695
        %v5092 = vpow.pop %v5091
        %v5093 = vmul.f32 %v5066, 1.442695
        %v5094 = vpow.pop %v5093
        %v5095 = vmul.f32 %v5067, 1.442695
        %v5096 = vpow.pop %v5095
        %v5097 = vmul.f32 %v5068, 1.442695
        %v5098 = vpow.pop %v5097
        %v5099 = vmul.f32 %v5069, 1.442695
        %v5100 = vpow.pop %v5099
        %v5101 = vmul.f32 %v5070, 1.442695
        %v5102 = vpow.pop %v5101
        %v5103 = vadd.f32 %v5072, 1.0
        %v5104 = vadd.f32 %v5074, 1.0
        %v5105 = vadd.f32 %v5076, 1.0
        %v5106 = vadd.f32 %v5078, 1.0
        %v5107 = vadd.f32 %v5080, 1.0
        %v5108 = vadd.f32 %v5082, 1.0
        %v5109 = vadd.f32 %v5084, 1.0
        %v5110 = vadd.f32 %v5086, 1.0
        %v5111 = vadd.f32 %v5088, 1.0
        %v5112 = vadd.f32 %v5090, 1.0
        %v5113 = vadd.f32 %v5092, 1.0
        %v5114 = vadd.f32 %v5094, 1.0
        %v5115 = vadd.f32 %v5096, 1.0
        %v5116 = vadd.f32 %v5098, 1.0
        %v5117 = vadd.f32 %v5100, 1.0
        %v5118 = vadd.f32 %v5102, 1.0
        %v5119 = vrcp.pop %v5103
        %v5120 = vmul.f32 %v5103, %v5119
        %v5121 = vsub.f32 1.0, %v5120
        %v5122 = vmul.f32 %v5119, %v5121
        %v5123 = vadd.f32 %v5119, %v5122
        %vm5124 = vweird.f32 %v5103
        %vm5125 = vweird.f32 %v5119
        %vm5126 = vmor %vm5124, %vm5125
        %v5127 = vsel %vm5126, %v5119, %v5123
        %v5128 = vand.u32 2147483647, %v5103
        %vm5129 = vcmp.eq.f32.partialorder %v5128, 8.507059e+37
        %v5130 = vand.u32 %v5103, 2147483648
        %v5131 = vor.u32 1.1754944e-38, %v5130
        %v5132 = vsel %vm5129, %v5131, %v5127
        %v5133 = vmul.f32 1.0, %v5132
        %v5134 = vrcp.pop %v5104
        %v5135 = vmul.f32 %v5104, %v5134
        %v5136 = vsub.f32 1.0, %v5135
        %v5137 = vmul.f32 %v5134, %v5136
        %v5138 = vadd.f32 %v5134, %v5137
        %vm5139 = vweird.f32 %v5104
        %vm5140 = vweird.f32 %v5134
        %vm5141 = vmor %vm5139, %vm5140
        %v5142 = vsel %vm5141, %v5134, %v5138
        %v5143 = vand.u32 2147483647, %v5104
        %vm5144 = vcmp.eq.f32.partialorder %v5143, 8.507059e+37
        %v5145 = vand.u32 %v5104, 2147483648
        %v5146 = vor.u32 1.1754944e-38, %v5145
        %v5147 = vsel %vm5144, %v5146, %v5142
        %v5148 = vmul.f32 1.0, %v5147
        %v5149 = vrcp.pop %v5105
        %v5150 = vmul.f32 %v5105, %v5149
        %v5151 = vsub.f32 1.0, %v5150
        %v5152 = vmul.f32 %v5149, %v5151
        %v5153 = vadd.f32 %v5149, %v5152
        %vm5154 = vweird.f32 %v5105
        %vm5155 = vweird.f32 %v5149
        %vm5156 = vmor %vm5154, %vm5155
        %v5157 = vsel %vm5156, %v5149, %v5153
        %v5158 = vand.u32 2147483647, %v5105
        %vm5159 = vcmp.eq.f32.partialorder %v5158, 8.507059e+37
        %v5160 = vand.u32 %v5105, 2147483648
        %v5161 = vor.u32 1.1754944e-38, %v5160
        %v5162 = vsel %vm5159, %v5161, %v5157
        %v5163 = vmul.f32 1.0, %v5162
        %v5164 = vrcp.pop %v5106
        %v5165 = vmul.f32 %v5106, %v5164
        %v5166 = vsub.f32 1.0, %v5165
        %v5167 = vmul.f32 %v5164, %v5166
        %v5168 = vadd.f32 %v5164, %v5167
        %vm5169 = vweird.f32 %v5106
        %vm5170 = vweird.f32 %v5164
        %vm5171 = vmor %vm5169, %vm5170
        %v5172 = vsel %vm5171, %v5164, %v5168
        %v5173 = vand.u32 2147483647, %v5106
        %vm5174 = vcmp.eq.f32.partialorder %v5173, 8.507059e+37
        %v5175 = vand.u32 %v5106, 2147483648
        %v5176 = vor.u32 1.1754944e-38, %v5175
        %v5177 = vsel %vm5174, %v5176, %v5172
        %v5178 = vmul.f32 1.0, %v5177
        %v5179 = vrcp.pop %v5107
        %v5180 = vmul.f32 %v5107, %v5179
        %v5181 = vsub.f32 1.0, %v5180
        %v5182 = vmul.f32 %v5179, %v5181
        %v5183 = vadd.f32 %v5179, %v5182
        %vm5184 = vweird.f32 %v5107
        %vm5185 = vweird.f32 %v5179
        %vm5186 = vmor %vm5184, %vm5185
        %v5187 = vsel %vm5186, %v5179, %v5183
        %v5188 = vand.u32 2147483647, %v5107
        %vm5189 = vcmp.eq.f32.partialorder %v5188, 8.507059e+37
        %v5190 = vand.u32 %v5107, 2147483648
        %v5191 = vor.u32 1.1754944e-38, %v5190
        %v5192 = vsel %vm5189, %v5191, %v5187
        %v5193 = vmul.f32 1.0, %v5192
        %v5194 = vrcp.pop %v5108
        %v5195 = vmul.f32 %v5108, %v5194
        %v5196 = vsub.f32 1.0, %v5195
        %v5197 = vmul.f32 %v5194, %v5196
        %v5198 = vadd.f32 %v5194, %v5197
        %vm5199 = vweird.f32 %v5108
        %vm5200 = vweird.f32 %v5194
        %vm5201 = vmor %vm5199, %vm5200
        %v5202 = vsel %vm5201, %v5194, %v5198
        %v5203 = vand.u32 2147483647, %v5108
        %vm5204 = vcmp.eq.f32.partialorder %v5203, 8.507059e+37
        %v5205 = vand.u32 %v5108, 2147483648
        %v5206 = vor.u32 1.1754944e-38, %v5205
        %v5207 = vsel %vm5204, %v5206, %v5202
        %v5208 = vmul.f32 1.0, %v5207
        %v5209 = vrcp.pop %v5109
        %v5210 = vmul.f32 %v5109, %v5209
        %v5211 = vsub.f32 1.0, %v5210
        %v5212 = vmul.f32 %v5209, %v5211
        %v5213 = vadd.f32 %v5209, %v5212
        %vm5214 = vweird.f32 %v5109
        %vm5215 = vweird.f32 %v5209
        %vm5216 = vmor %vm5214, %vm5215
        %v5217 = vsel %vm5216, %v5209, %v5213
        %v5218 = vand.u32 2147483647, %v5109
        %vm5219 = vcmp.eq.f32.partialorder %v5218, 8.507059e+37
        %v5220 = vand.u32 %v5109, 2147483648
        %v5221 = vor.u32 1.1754944e-38, %v5220
        %v5222 = vsel %vm5219, %v5221, %v5217
        %v5223 = vmul.f32 1.0, %v5222
        %v5224 = vrcp.pop %v5110
        %v5225 = vmul.f32 %v5110, %v5224
        %v5226 = vsub.f32 1.0, %v5225
        %v5227 = vmul.f32 %v5224, %v5226
        %v5228 = vadd.f32 %v5224, %v5227
        %vm5229 = vweird.f32 %v5110
        %vm5230 = vweird.f32 %v5224
        %vm5231 = vmor %vm5229, %vm5230
        %v5232 = vsel %vm5231, %v5224, %v5228
        %v5233 = vand.u32 2147483647, %v5110
        %vm5234 = vcmp.eq.f32.partialorder %v5233, 8.507059e+37
        %v5235 = vand.u32 %v5110, 2147483648
        %v5236 = vor.u32 1.1754944e-38, %v5235
        %v5237 = vsel %vm5234, %v5236, %v5232
        %v5238 = vmul.f32 1.0, %v5237
        %v5239 = vrcp.pop %v5111
        %v5240 = vmul.f32 %v5111, %v5239
        %v5241 = vsub.f32 1.0, %v5240
        %v5242 = vmul.f32 %v5239, %v5241
        %v5243 = vadd.f32 %v5239, %v5242
        %vm5244 = vweird.f32 %v5111
        %vm5245 = vweird.f32 %v5239
        %vm5246 = vmor %vm5244, %vm5245
        %v5247 = vsel %vm5246, %v5239, %v5243
        %v5248 = vand.u32 2147483647, %v5111
        %vm5249 = vcmp.eq.f32.partialorder %v5248, 8.507059e+37
        %v5250 = vand.u32 %v5111, 2147483648
        %v5251 = vor.u32 1.1754944e-38, %v5250
        %v5252 = vsel %vm5249, %v5251, %v5247
        %v5253 = vmul.f32 1.0, %v5252
        %v5254 = vrcp.pop %v5112
        %v5255 = vmul.f32 %v5112, %v5254
        %v5256 = vsub.f32 1.0, %v5255
        %v5257 = vmul.f32 %v5254, %v5256
        %v5258 = vadd.f32 %v5254, %v5257
        %vm5259 = vweird.f32 %v5112
        %vm5260 = vweird.f32 %v5254
        %vm5261 = vmor %vm5259, %vm5260
        %v5262 = vsel %vm5261, %v5254, %v5258
        %v5263 = vand.u32 2147483647, %v5112
        %vm5264 = vcmp.eq.f32.partialorder %v5263, 8.507059e+37
        %v5265 = vand.u32 %v5112, 2147483648
        %v5266 = vor.u32 1.1754944e-38, %v5265
        %v5267 = vsel %vm5264, %v5266, %v5262
        %v5268 = vmul.f32 1.0, %v5267
        %v5269 = vrcp.pop %v5113
        %v5270 = vmul.f32 %v5113, %v5269
        %v5271 = vsub.f32 1.0, %v5270
        %v5272 = vmul.f32 %v5269, %v5271
        %v5273 = vadd.f32 %v5269, %v5272
        %vm5274 = vweird.f32 %v5113
        %vm5275 = vweird.f32 %v5269
        %vm5276 = vmor %vm5274, %vm5275
        %v5277 = vsel %vm5276, %v5269, %v5273
        %v5278 = vand.u32 2147483647, %v5113
        %vm5279 = vcmp.eq.f32.partialorder %v5278, 8.507059e+37
        %v5280 = vand.u32 %v5113, 2147483648
        %v5281 = vor.u32 1.1754944e-38, %v5280
        %v5282 = vsel %vm5279, %v5281, %v5277
        %v5283 = vmul.f32 1.0, %v5282
        %v5284 = vrcp.pop %v5114
        %v5285 = vmul.f32 %v5114, %v5284
        %v5286 = vsub.f32 1.0, %v5285
        %v5287 = vmul.f32 %v5284, %v5286
        %v5288 = vadd.f32 %v5284, %v5287
        %vm5289 = vweird.f32 %v5114
        %vm5290 = vweird.f32 %v5284
        %vm5291 = vmor %vm5289, %vm5290
        %v5292 = vsel %vm5291, %v5284, %v5288
        %v5293 = vand.u32 2147483647, %v5114
        %vm5294 = vcmp.eq.f32.partialorder %v5293, 8.507059e+37
        %v5295 = vand.u32 %v5114, 2147483648
        %v5296 = vor.u32 1.1754944e-38, %v5295
        %v5297 = vsel %vm5294, %v5296, %v5292
        %v5298 = vmul.f32 1.0, %v5297
        %v5299 = vrcp.pop %v5115
        %v5300 = vmul.f32 %v5115, %v5299
        %v5301 = vsub.f32 1.0, %v5300
        %v5302 = vmul.f32 %v5299, %v5301
        %v5303 = vadd.f32 %v5299, %v5302
        %vm5304 = vweird.f32 %v5115
        %vm5305 = vweird.f32 %v5299
        %vm5306 = vmor %vm5304, %vm5305
        %v5307 = vsel %vm5306, %v5299, %v5303
        %v5308 = vand.u32 2147483647, %v5115
        %vm5309 = vcmp.eq.f32.partialorder %v5308, 8.507059e+37
        %v5310 = vand.u32 %v5115, 2147483648
        %v5311 = vor.u32 1.1754944e-38, %v5310
        %v5312 = vsel %vm5309, %v5311, %v5307
        %v5313 = vmul.f32 1.0, %v5312
        %v5314 = vrcp.pop %v5116
        %v5315 = vmul.f32 %v5116, %v5314
        %v5316 = vsub.f32 1.0, %v5315
        %v5317 = vmul.f32 %v5314, %v5316
        %v5318 = vadd.f32 %v5314, %v5317
        %vm5319 = vweird.f32 %v5116
        %vm5320 = vweird.f32 %v5314
        %vm5321 = vmor %vm5319, %vm5320
        %v5322 = vsel %vm5321, %v5314, %v5318
        %v5323 = vand.u32 2147483647, %v5116
        %vm5324 = vcmp.eq.f32.partialorder %v5323, 8.507059e+37
        %v5325 = vand.u32 %v5116, 2147483648
        %v5326 = vor.u32 1.1754944e-38, %v5325
        %v5327 = vsel %vm5324, %v5326, %v5322
        %v5328 = vmul.f32 1.0, %v5327
        %v5329 = vrcp.pop %v5117
        %v5330 = vmul.f32 %v5117, %v5329
        %v5331 = vsub.f32 1.0, %v5330
        %v5332 = vmul.f32 %v5329, %v5331
        %v5333 = vadd.f32 %v5329, %v5332
        %vm5334 = vweird.f32 %v5117
        %vm5335 = vweird.f32 %v5329
        %vm5336 = vmor %vm5334, %vm5335
        %v5337 = vsel %vm5336, %v5329, %v5333
        %v5338 = vand.u32 2147483647, %v5117
        %vm5339 = vcmp.eq.f32.partialorder %v5338, 8.507059e+37
        %v5340 = vand.u32 %v5117, 2147483648
        %v5341 = vor.u32 1.1754944e-38, %v5340
        %v5342 = vsel %vm5339, %v5341, %v5337
        %v5343 = vmul.f32 1.0, %v5342
        %v5344 = vrcp.pop %v5118
        %v5345 = vmul.f32 %v5118, %v5344
        %v5346 = vsub.f32 1.0, %v5345
        %v5347 = vmul.f32 %v5344, %v5346
        %v5348 = vadd.f32 %v5344, %v5347
        %vm5349 = vweird.f32 %v5118
        %vm5350 = vweird.f32 %v5344
        %vm5351 = vmor %vm5349, %vm5350
        %v5352 = vsel %vm5351, %v5344, %v5348
        %v5353 = vand.u32 2147483647, %v5118
        %vm5354 = vcmp.eq.f32.partialorder %v5353, 8.507059e+37
        %v5355 = vand.u32 %v5118, 2147483648
        %v5356 = vor.u32 1.1754944e-38, %v5355
        %v5357 = vsel %vm5354, %v5356, %v5352
        %v5358 = vmul.f32 1.0, %v5357
        %v5359 = vmul.f32 %v4928, %v5133
        %v5360 = vmul.f32 %v5040, %v5148
        %v5361 = vmul.f32 %v4930, %v5163
        %v5362 = vmul.f32 %v5042, %v5178
        %v5363 = vmul.f32 %v4932, %v5193
        %v5364 = vmul.f32 %v5044, %v5208
        %v5365 = vmul.f32 %v4934, %v5223
        %v5366 = vmul.f32 %v5046, %v5238
        %v5367 = vmul.f32 %v4936, %v5253
        %v5368 = vmul.f32 %v5048, %v5268
        %v5369 = vmul.f32 %v4938, %v5283
        %v5370 = vmul.f32 %v5050, %v5298
        %v5371 = vmul.f32 %v4940, %v5313
        %v5372 = vmul.f32 %v5052, %v5328
        %v5373 = vmul.f32 %v4942, %v5343
        %v5374 = vmul.f32 %v5054, %v5358
        %5375 = vst.msk [vmem:[%s286] sm:$0xff] %vm479, %v5359
        %5376 = vst.msk [vmem:[%s286 + $0x8] sm:$0xff] %vm479, %v5360
        %5377 = vst.msk [vmem:[%s286 + $0x10] sm:$0xff] %vm479, %v5361
        %5378 = vst.msk [vmem:[%s286 + $0x18] sm:$0xff] %vm479, %v5362
        %5379 = vst.msk [vmem:[%s286 + $0x20] sm:$0xff] %vm479, %v5363
        %5380 = vst.msk [vmem:[%s286 + $0x28] sm:$0xff] %vm479, %v5364
        %5381 = vst.msk [vmem:[%s286 + $0x30] sm:$0xff] %vm479, %v5365
        %5382 = vst.msk [vmem:[%s286 + $0x38] sm:$0xff] %vm479, %v5366
        %5383 = vst.msk [vmem:[%s286 + $0x40] sm:$0xff] %vm479, %v5367
        %5384 = vst.msk [vmem:[%s286 + $0x48] sm:$0xff] %vm479, %v5368
        %5385 = vst.msk [vmem:[%s286 + $0x50] sm:$0xff] %vm479, %v5369
        %5386 = vst.msk [vmem:[%s286 + $0x58] sm:$0xff] %vm479, %v5370
        %5387 = vst.msk [vmem:[%s286 + $0x60] sm:$0xff] %vm479, %v5371
        %5388 = vst.msk [vmem:[%s286 + $0x68] sm:$0xff] %vm479, %v5372
        %5389 = vst.msk [vmem:[%s286 + $0x70] sm:$0xff] %vm479, %v5373
        %5390 = vst.msk [vmem:[%s286 + $0x78] sm:$0xff] %vm479, %v5374
        %s5391 = sand.u32 %s163, 1
        %s5392 = scalar_lea.sflag [#allocation5], %s5391
        %s5393 = sand.u32 %s163, 1
        %s5394 = smul.addr %s5393, 128
        %s5395 = scalar_lea.vmem [#allocation8], %s5394
        // Predicated region
        $region53: #{tpu_custom_call.1} parent=43 // pred_check
          %p5396 = pneg %p173
        $region54: #{tpu_custom_call.1} parent=43 // pred_check_branch
          %5398 = sbr.rel (%p5396) target = $region56
        $region55: #{tpu_custom_call.1} parent=43 // pred_region
          %5400 = vsyncadd %s5392, 0
          %s5401 = smul.addr %s24, 16
          %s5402 = smul.addr %s5401, 8
          %s5403 = scalar_lea.hbm %s6, %s5402
          %s5404 = sshll.u32 %s5395, 4
          %s5405 = int_to_ptr.vmem [resolvable:$true] %s5404
          %s5406 = sshll.u32 %s5403, 4
          %s5407 = int_to_ptr.hbm [resolvable:$true] %s5406
          %5412 = dma.vmem_to_hbm [thread:$0]  %s5405, 2048, %s5407, %s5392, 128, 128, 8
        $region56: #{tpu_custom_call.1} parent=43 // pred_fallthru
          _
      $region44: #{tpu_custom_call.1} parent=5 // pred_fallthru
        _
      %p5413 = scmp.le.s32.totalorder 2, %s19
      // Predicated region
      $region57: #{tpu_custom_call.1} parent=5 // pred_check
        %p5414 = pneg %p5413
      $region58: #{tpu_custom_call.1} parent=5 // pred_check_branch
        %5416 = sbr.rel (%p5414) target = $region60
      $region59: #{tpu_custom_call.1} parent=5 // pred_region
        %s5417 = ssub.s32 %s19, 2
        // Predicated region
        $region61: #{tpu_custom_call.1} parent=59 // pred_check
          %p5418 = pneg %p179
        $region62: #{tpu_custom_call.1} parent=59 // pred_check_branch
          %5420 = sbr.rel (%p5418) target = $region64
        $region63: #{tpu_custom_call.1} parent=59 // pred_region
          %s5421 = sand.u32 %s164, 1
          %s5422 = scalar_lea.sflag [#allocation5], %s5421
          %s5423 = sand.u32 %s164, 1
          %s5424 = smul.addr %s5423, 128
          %s5425 = scalar_lea.vmem [#allocation8], %s5424
          %5427 = dma.done %s5422, 2048
        $region64: #{tpu_custom_call.1} parent=59 // pred_fallthru
          _
      $region60: #{tpu_custom_call.1} parent=5 // pred_fallthru
        _
    $region6: #{tpu_custom_call.1} parent=1 // loop_footer
      %s23 = sadd.s32 1, %s19
    $region7: #{tpu_custom_call.1} parent=1 // loop_footer_branch
      %18 = sbr.rel target = $region3
    $region8: #{tpu_custom_call.1} parent=1 // loop_exit
      _
    %5428 = vsyncpa [#allocation4], 1
    %s5429 = scalar_lea.sflag [#allocation4], 1
    %5430 = vsyncpa %s5429, 1
    %5431 = vsyncpa [#allocation7], 1
    %5432 = vsyncpa [#allocation5], 1
    %s5433 = scalar_lea.sflag [#allocation5], 1
    %5434 = vsyncpa %s5433, 1

</llo_original>
